<compile_context>
chip_gen: v7x
topology: tpu7x:2x2x1
jax: 0.10.0
libtpu: 0.0.40
codegen_flags: <defaults>
</compile_context>

<pallas_src>
import jax
import jax.numpy as jnp
from jax.experimental import pallas as pl
from jax.experimental.pallas import tpu as pltpu

HIDDEN = 768
EPS = 1e-12


def add_layernorm_kernel(a_ref, b_ref, gamma_ref, beta_ref, o_ref):
    # a_ref/b_ref: (tm, H) tiles; gamma/beta: (1, H) resident blocks.
    x = a_ref[...].astype(jnp.float32) + b_ref[...].astype(jnp.float32)

    mean = jnp.mean(x, axis=-1, keepdims=True)          # (tm, 1)
    xc = x - mean                                        # (tm, H)
    var = jnp.mean(xc * xc, axis=-1, keepdims=True)      # (tm, 1)
    inv = jax.lax.rsqrt(var + EPS)                       # (tm, 1)

    g = gamma_ref[...].astype(jnp.float32)               # (1, H)
    bta = beta_ref[...].astype(jnp.float32)              # (1, H)

    # (tm,1) and (1,H) broadcasts only -- no materialized (tm,H) scale/shift.
    o_ref[...] = ((xc * inv) * g + bta).astype(o_ref.dtype)


def _tensorcores_per_chip():
    """Best-effort detection of TensorCores per chip (v7x has 2)."""
    try:
        d = jax.devices()[0]
        n = getattr(d, "num_cores", None)
        if isinstance(n, int) and n > 0:
            return n
        kind = str(getattr(d, "device_kind", "")).lower()
        if "v7" in kind:
            return 2
    except Exception:
        pass
    return 1


def _pick_tile(M, cap=512, prefer_even_grid=False):
    """Largest divisor of M that is a multiple of 8 and <= cap.

    On 2-TC chips (v7x) prefer a tile giving an even number of grid steps so
    the "parallel" axis splits across cores; otherwise fewest steps wins
    (grid is a serial loop on 1-TC chips)."""
    candidates = [d for d in range(8, min(M, cap) + 1, 8) if M % d == 0]
    if not candidates:
        return M  # full-extent block (allowed even if not a multiple of 8)
    if prefer_even_grid:
        even = [d for d in candidates if (M // d) % 2 == 0]
        if even:
            return max(even)
    return max(candidates)


def add_layernorm(x362, x358, gamma, beta, *, tm=None):
    assert x362.shape == x358.shape
    orig_shape = x362.shape
    H = orig_shape[-1]
    assert H == HIDDEN
    a = x362.reshape(-1, H)
    b = x358.reshape(-1, H)
    M = a.shape[0]

    if tm is None or M % tm != 0:
        tm = _pick_tile(M, prefer_even_grid=(_tensorcores_per_chip() >= 2))

    gamma2 = gamma.reshape(1, H)
    beta2 = beta.reshape(1, H)

    out_dtype = x362.dtype
    grid = (pl.cdiv(M, tm),)

    # VMEM footprint: 2 inputs x 2 bufs + output x 2 bufs (double-buffered I/O)
    # plus ~3 full-tile f32 compute temporaries (x, xc, output pre-cast).
    in_bytes = jnp.dtype(x362.dtype).itemsize
    out_bytes = jnp.dtype(out_dtype).itemsize
    footprint = tm * H * (4 * in_bytes + 2 * out_bytes + 3 * 4)
    compiler_kwargs = dict(dimension_semantics=("parallel",))
    if footprint > (12 << 20):  # v5e scoped default is 16 MiB -- be explicit.
        compiler_kwargs["vmem_limit_bytes"] = min(int(footprint * 1.5), 96 << 20)

    out = pl.pallas_call(
        add_layernorm_kernel,
        out_shape=jax.ShapeDtypeStruct((M, H), out_dtype),
        grid_spec=pltpu.PrefetchScalarGridSpec(
            num_scalar_prefetch=0,
            grid=grid,
            in_specs=[
                pl.BlockSpec((tm, H), lambda i: (i, 0)),
                pl.BlockSpec((tm, H), lambda i: (i, 0)),
                pl.BlockSpec((1, H), lambda i: (0, 0)),
                pl.BlockSpec((1, H), lambda i: (0, 0)),
            ],
            out_specs=pl.BlockSpec((tm, H), lambda i: (i, 0)),
        ),
        compiler_params=pltpu.CompilerParams(**compiler_kwargs),
    )(a, b, gamma2, beta2)
    return out.reshape(orig_shape)


def reference(x362, x358, gamma, beta):
    x = (x362 + x358).astype(jnp.float32)
    mean = jnp.mean(x, axis=-1, keepdims=True)
    var = jnp.mean((x - mean) ** 2, axis=-1, keepdims=True)
    xhat = (x - mean) / jnp.sqrt(var + EPS)
    return xhat * gamma + beta


if __name__ == "__main__":
    key = jax.random.PRNGKey(0)
    k1, k2 = jax.random.split(key)
    # Shapes from the module: (1, 384, 768)
    x362 = jax.random.normal(k1, (1, 384, HIDDEN), dtype=jnp.float32)
    x358 = jax.random.normal(k2, (1, 384, HIDDEN), dtype=jnp.float32)
    # PyTorch LayerNorm default init: weight=1, bias=0
    gamma = jnp.ones((HIDDEN,), dtype=jnp.float32)
    beta = jnp.zeros((HIDDEN,), dtype=jnp.float32)

    out = add_layernorm(x362, x358, gamma, beta)
    out = jax.block_until_ready(out)

    ref = reference(x362, x358, gamma, beta)
    assert out.shape == (1, 384, HIDDEN)
    assert jnp.max(jnp.abs(out.astype(jnp.float32) - ref)) < 1e-4
    print("KERNEL_OK")
</pallas_src>

<mosaic_0001>
module attributes {stable_mosaic.version = 11 : i64} {
  func.func @add_layernorm_kernel(%arg0: i32, %arg1: memref<384x768xf32, #tpu.memory_space<vmem>>, %arg2: memref<384x768xf32, #tpu.memory_space<vmem>>, %arg3: memref<1x768xf32, #tpu.memory_space<vmem>>, %arg4: memref<1x768xf32, #tpu.memory_space<vmem>>, %arg5: memref<384x768xf32, #tpu.memory_space<vmem>>) attributes {dimension_semantics = [#tpu.dimension_semantics<parallel>], iteration_bounds = array<i64: 1>, scalar_prefetch = 0 : i64, scratch_operands = 0 : i64, tpu.core_type = #tpu.core_type<tc>, window_params = [{transform_indices = @transform_0, window_bounds = array<i64: 384, 768>}, {transform_indices = @transform_1, window_bounds = array<i64: 384, 768>}, {pipeline_mode = #tpu.pipeline_mode<synchronous>, transform_indices = @transform_2, window_bounds = array<i64: 1, 768>}, {pipeline_mode = #tpu.pipeline_mode<synchronous>, transform_indices = @transform_3, window_bounds = array<i64: 1, 768>}, {transform_indices = @transform_4, window_bounds = array<i64: 384, 768>}]} {
    %c0 = arith.constant 0 : index
    %c0_0 = arith.constant 0 : index
    %0 = vector.load %arg1[%c0, %c0_0] : memref<384x768xf32, #tpu.memory_space<vmem>>, vector<384x768xf32>
    %c0_1 = arith.constant 0 : index
    %c0_2 = arith.constant 0 : index
    %1 = vector.load %arg2[%c0_1, %c0_2] : memref<384x768xf32, #tpu.memory_space<vmem>>, vector<384x768xf32>
    %2 = arith.addf %0, %1 : vector<384x768xf32>
    %cst = arith.constant dense<0.000000e+00> : vector<384xf32>
    %3 = vector.multi_reduction <add>, %2, %cst [1] : vector<384x768xf32> to vector<384xf32>
    %4 = vector.shape_cast %3 : vector<384xf32> to vector<384x1xf32>
    %cst_3 = arith.constant 7.680000e+02 : f32
    %5 = vector.broadcast %cst_3 : f32 to vector<384x1xf32>
    %6 = arith.divf %4, %5 : vector<384x1xf32>
    %7 = vector.broadcast %6 : vector<384x1xf32> to vector<384x768xf32>
    %8 = arith.subf %2, %7 : vector<384x768xf32>
    %9 = arith.mulf %8, %8 : vector<384x768xf32>
    %cst_4 = arith.constant dense<0.000000e+00> : vector<384xf32>
    %10 = vector.multi_reduction <add>, %9, %cst_4 [1] : vector<384x768xf32> to vector<384xf32>
    %11 = vector.shape_cast %10 : vector<384xf32> to vector<384x1xf32>
    %cst_5 = arith.constant 7.680000e+02 : f32
    %12 = vector.broadcast %cst_5 : f32 to vector<384x1xf32>
    %13 = arith.divf %11, %12 : vector<384x1xf32>
    %cst_6 = arith.constant 9.99999996E-13 : f32
    %14 = vector.broadcast %cst_6 : f32 to vector<384x1xf32>
    %15 = arith.addf %13, %14 : vector<384x1xf32>
    %16 = math.rsqrt %15 : vector<384x1xf32>
    %c0_7 = arith.constant 0 : index
    %c0_8 = arith.constant 0 : index
    %17 = vector.load %arg3[%c0_7, %c0_8] : memref<1x768xf32, #tpu.memory_space<vmem>>, vector<1x768xf32>
    %c0_9 = arith.constant 0 : index
    %c0_10 = arith.constant 0 : index
    %18 = vector.load %arg4[%c0_9, %c0_10] : memref<1x768xf32, #tpu.memory_space<vmem>>, vector<1x768xf32>
    %19 = vector.broadcast %16 : vector<384x1xf32> to vector<384x768xf32>
    %20 = arith.mulf %8, %19 : vector<384x768xf32>
    %21 = vector.broadcast %17 : vector<1x768xf32> to vector<384x768xf32>
    %22 = arith.mulf %20, %21 : vector<384x768xf32>
    %23 = vector.broadcast %18 : vector<1x768xf32> to vector<384x768xf32>
    %24 = arith.addf %22, %23 : vector<384x768xf32>
    %c0_11 = arith.constant 0 : index
    %c0_12 = arith.constant 0 : index
    %25 = vector.load %arg5[%c0_11, %c0_12] : memref<384x768xf32, #tpu.memory_space<vmem>>, vector<384x768xf32>
    tpu.vector_store %arg5[%c0_11, %c0_12], %24 {strides = array<i32>} : memref<384x768xf32, #tpu.memory_space<vmem>>, vector<384x768xf32>,
    return
  }
  func.func @transform_0(%arg0: i32) -> (i32, i32) {
    %c0_i32 = arith.constant 0 : i32
    %c0_i32_0 = arith.constant 0 : i32
    return %arg0, %c0_i32 : i32, i32
  }
  func.func @transform_1(%arg0: i32) -> (i32, i32) {
    %c0_i32 = arith.constant 0 : i32
    %c0_i32_0 = arith.constant 0 : i32
    return %arg0, %c0_i32 : i32, i32
  }
  func.func @transform_2(%arg0: i32) -> (i32, i32) {
    %c0_i32 = arith.constant 0 : i32
    %c0_i32_0 = arith.constant 0 : i32
    %c0_i32_1 = arith.constant 0 : i32
    return %c0_i32, %c0_i32_0 : i32, i32
  }
  func.func @transform_3(%arg0: i32) -> (i32, i32) {
    %c0_i32 = arith.constant 0 : i32
    %c0_i32_0 = arith.constant 0 : i32
    %c0_i32_1 = arith.constant 0 : i32
    return %c0_i32, %c0_i32_0 : i32, i32
  }
  func.func @transform_4(%arg0: i32) -> (i32, i32) {
    %c0_i32 = arith.constant 0 : i32
    %c0_i32_0 = arith.constant 0 : i32
    return %arg0, %c0_i32 : i32, i32
  }
}

</mosaic_0001>

<llo_original>
// kernel: tpu_custom_call.1
$region0: #{tpu_custom_call.1}
  #allocation0 [shape = 'u32[]', space=smem, size = 0x4, offset = 0x4, fixed_abs, tag = 'smem constant byte address 0x4 - core index']
  #allocation1 [shape = 'u32[144,128]{1,0:T(1,128)}', space=vmem, size = 0x12000, scoped, tag = 'internal scratch']
  %s0 = inlined_call_operand.hbm [shape: f32[384,768], index: 0, kind: input, shape index: {}]
  %s1 = inlined_call_operand.hbm [shape: f32[384,768], index: 1, kind: input, shape index: {}]
  %s2 = inlined_call_operand.hbm [shape: f32[1,768], index: 2, kind: input, shape index: {}]
  %s3 = inlined_call_operand.hbm [shape: f32[1,768], index: 3, kind: input, shape index: {}]
  %s4 = inlined_call_operand.hbm [shape: f32[384,768], index: 4, kind: output, shape index: {}]
  %s5 = sld [smem:[#allocation0]]
  $region42: #{tpu_custom_call.1} parent=0
    _
  %s7 = ssub.s32 1, %s5
  %s8 = scalar_select 0, %s7, %s5
  $region1: #{tpu_custom_call.1} parent=0
    #allocation2 [shape = 'u8[1179648]{0}', space=vmem, size = 0x120000, scoped, tag = 'input window, operand 0, single buffered']
    #allocation3 [shape = 's32[1]{0}', space=sflag, size = 0x4, scoped, tag = 'scoped memory for tpu_custom_call.1']
    #allocation4 [shape = 's32[1]{0}', space=sflag, size = 0x4, scoped, tag = 'scoped memory for tpu_custom_call.1']
    #allocation5 [shape = 'u8[1179648]{0}', space=vmem, size = 0x120000, scoped, tag = 'input window, operand 1, single buffered']
    #allocation6 [shape = 's32[1]{0}', space=sflag, size = 0x4, scoped, tag = 'scoped memory for tpu_custom_call.1']
    #allocation7 [shape = 'u8[3072]{0}', space=vmem, size = 0xc00, scoped, tag = 'input window, operand 2, single buffered']
    #allocation8 [shape = 'u8[3072]{0}', space=vmem, size = 0xc00, scoped, tag = 'input window, operand 3, single buffered']
    #allocation9 [shape = 's32[1]{0}', space=sflag, size = 0x4, scoped, tag = 'scoped memory for tpu_custom_call.1']
    #allocation10 [shape = 'u8[1179648]{0}', space=vmem, size = 0x120000, scoped, tag = 'output window, operand 0, single buffered']
    %9 = vsyncpa [#allocation3], 0
    %10 = vsyncpa [#allocation6], 0
    %11 = vsyncpa [#allocation9], 0
    %12 = vsyncpa [#allocation4], 0
    // Predicated region
    $region2: #{tpu_custom_call.1} parent=1 // pred_check
      _
    $region3: #{tpu_custom_call.1} parent=1 // pred_check_branch
      %14 = sbr.rel (0) target = $region5
    $region4: #{tpu_custom_call.1} parent=1 // pred_region
      %s16 = ssub.s32 36864, 36864
      %17 = vsyncadd [#allocation3], %s16
      %s18 = sshll.u32 [#allocation2], 4
      %s19 = int_to_ptr.vmem [resolvable:$true] %s18
      %24 = dma.hbm_to_vmem [thread:$0]  %s0, 36864, %s19, [#allocation3], 768, 768, 48
    $region5: #{tpu_custom_call.1} parent=1 // pred_fallthru
      _
    // Predicated region
    $region6: #{tpu_custom_call.1} parent=1 // pred_check
      _
    $region7: #{tpu_custom_call.1} parent=1 // pred_check_branch
      %26 = sbr.rel (0) target = $region9
    $region8: #{tpu_custom_call.1} parent=1 // pred_region
      %s28 = ssub.s32 36864, 36864
      %29 = vsyncadd [#allocation6], %s28
      %s30 = sshll.u32 [#allocation5], 4
      %s31 = int_to_ptr.vmem [resolvable:$true] %s30
      %36 = dma.hbm_to_vmem [thread:$0]  %s1, 36864, %s31, [#allocation6], 768, 768, 48
    $region9: #{tpu_custom_call.1} parent=1 // pred_fallthru
      _
    // Predicated region
    $region10: #{tpu_custom_call.1} parent=1 // pred_check
      _
    $region11: #{tpu_custom_call.1} parent=1 // pred_check_branch
      %38 = sbr.rel (0) target = $region13
    $region12: #{tpu_custom_call.1} parent=1 // pred_region
      %s40 = ssub.s32 96, 96
      %41 = vsyncadd [#allocation6], %s40
      %s43 = sshll.u32 [#allocation7], 4
      %s44 = int_to_ptr.vmem [resolvable:$true] %s43
      %46 = dma.hbm_to_vmem [thread:$0]  %s2, 96, %s44, [#allocation6]
    $region13: #{tpu_custom_call.1} parent=1 // pred_fallthru
      _
    // Predicated region
    $region14: #{tpu_custom_call.1} parent=1 // pred_check
      _
    $region15: #{tpu_custom_call.1} parent=1 // pred_check_branch
      %48 = sbr.rel (0) target = $region17
    $region16: #{tpu_custom_call.1} parent=1 // pred_region
      %s50 = ssub.s32 96, 96
      %51 = vsyncadd [#allocation9], %s50
      %s53 = sshll.u32 [#allocation8], 4
      %s54 = int_to_ptr.vmem [resolvable:$true] %s53
      %56 = dma.hbm_to_vmem [thread:$0]  %s3, 96, %s54, [#allocation9]
    $region17: #{tpu_custom_call.1} parent=1 // pred_fallthru
      _
    // Predicated region
    $region18: #{tpu_custom_call.1} parent=1 // pred_check
      _
    $region19: #{tpu_custom_call.1} parent=1 // pred_check_branch
      %58 = sbr.rel (0) target = $region21
    $region20: #{tpu_custom_call.1} parent=1 // pred_region
      %59 = dma.done [#allocation3], 36864
    $region21: #{tpu_custom_call.1} parent=1 // pred_fallthru
      _
    // Predicated region
    $region22: #{tpu_custom_call.1} parent=1 // pred_check
      _
    $region23: #{tpu_custom_call.1} parent=1 // pred_check_branch
      %61 = sbr.rel (0) target = $region25
    $region24: #{tpu_custom_call.1} parent=1 // pred_region
      %62 = dma.done [#allocation6], 36864
    $region25: #{tpu_custom_call.1} parent=1 // pred_fallthru
      _
    // Predicated region
    $region26: #{tpu_custom_call.1} parent=1 // pred_check
      _
    $region27: #{tpu_custom_call.1} parent=1 // pred_check_branch
      %64 = sbr.rel (0) target = $region29
    $region28: #{tpu_custom_call.1} parent=1 // pred_region
      %65 = dma.done [#allocation6], 96
    $region29: #{tpu_custom_call.1} parent=1 // pred_fallthru
      _
    // Predicated region
    $region30: #{tpu_custom_call.1} parent=1 // pred_check
      _
    $region31: #{tpu_custom_call.1} parent=1 // pred_check_branch
      %67 = sbr.rel (0) target = $region33
    $region32: #{tpu_custom_call.1} parent=1 // pred_region
      %68 = dma.done [#allocation9], 96
    $region33: #{tpu_custom_call.1} parent=1 // pred_fallthru
      _
    %v69 = vld [vmem:[#allocation2] sm:$0xff]
    %v70 = vld [vmem:[#allocation2 + $0x8] sm:$0xff]
    %v71 = vld [vmem:[#allocation2 + $0x10] sm:$0xff]
    %v72 = vld [vmem:[#allocation2 + $0x18] sm:$0xff]
    %v73 = vld [vmem:[#allocation2 + $0x20] sm:$0xff]
    %v74 = vld [vmem:[#allocation2 + $0x28] sm:$0xff]
    %v75 = vld [vmem:[#allocation2 + $0x30] sm:$0xff]
    %v76 = vld [vmem:[#allocation2 + $0x38] sm:$0xff]
    %v77 = vld [vmem:[#allocation2 + $0x40] sm:$0xff]
    %v78 = vld [vmem:[#allocation2 + $0x48] sm:$0xff]
    %v79 = vld [vmem:[#allocation2 + $0x50] sm:$0xff]
    %v80 = vld [vmem:[#allocation2 + $0x58] sm:$0xff]
    %v81 = vld [vmem:[#allocation2 + $0x60] sm:$0xff]
    %v82 = vld [vmem:[#allocation2 + $0x68] sm:$0xff]
    %v83 = vld [vmem:[#allocation2 + $0x70] sm:$0xff]
    %v84 = vld [vmem:[#allocation2 + $0x78] sm:$0xff]
    %v85 = vld [vmem:[#allocation2 + $0x80] sm:$0xff]
    %v86 = vld [vmem:[#allocation2 + $0x88] sm:$0xff]
    %v87 = vld [vmem:[#allocation2 + $0x90] sm:$0xff]
    %v88 = vld [vmem:[#allocation2 + $0x98] sm:$0xff]
    %v89 = vld [vmem:[#allocation2 + $0xa0] sm:$0xff]
    %v90 = vld [vmem:[#allocation2 + $0xa8] sm:$0xff]
    %v91 = vld [vmem:[#allocation2 + $0xb0] sm:$0xff]
    %v92 = vld [vmem:[#allocation2 + $0xb8] sm:$0xff]
    %v93 = vld [vmem:[#allocation2 + $0xc0] sm:$0xff]
    %v94 = vld [vmem:[#allocation2 + $0xc8] sm:$0xff]
    %v95 = vld [vmem:[#allocation2 + $0xd0] sm:$0xff]
    %v96 = vld [vmem:[#allocation2 + $0xd8] sm:$0xff]
    %v97 = vld [vmem:[#allocation2 + $0xe0] sm:$0xff]
    %v98 = vld [vmem:[#allocation2 + $0xe8] sm:$0xff]
    %v99 = vld [vmem:[#allocation2 + $0xf0] sm:$0xff]
    %v100 = vld [vmem:[#allocation2 + $0xf8] sm:$0xff]
    %v101 = vld [vmem:[#allocation2 + $0x100] sm:$0xff]
    %v102 = vld [vmem:[#allocation2 + $0x108] sm:$0xff]
    %v103 = vld [vmem:[#allocation2 + $0x110] sm:$0xff]
    %v104 = vld [vmem:[#allocation2 + $0x118] sm:$0xff]
    %v105 = vld [vmem:[#allocation2 + $0x120] sm:$0xff]
    %v106 = vld [vmem:[#allocation2 + $0x128] sm:$0xff]
    %v107 = vld [vmem:[#allocation2 + $0x130] sm:$0xff]
    %v108 = vld [vmem:[#allocation2 + $0x138] sm:$0xff]
    %v109 = vld [vmem:[#allocation2 + $0x140] sm:$0xff]
    %v110 = vld [vmem:[#allocation2 + $0x148] sm:$0xff]
    %v111 = vld [vmem:[#allocation2 + $0x150] sm:$0xff]
    %v112 = vld [vmem:[#allocation2 + $0x158] sm:$0xff]
    %v113 = vld [vmem:[#allocation2 + $0x160] sm:$0xff]
    %v114 = vld [vmem:[#allocation2 + $0x168] sm:$0xff]
    %v115 = vld [vmem:[#allocation2 + $0x170] sm:$0xff]
    %v116 = vld [vmem:[#allocation2 + $0x178] sm:$0xff]
    %v117 = vld [vmem:[#allocation2 + $0x180] sm:$0xff]
    %v118 = vld [vmem:[#allocation2 + $0x188] sm:$0xff]
    %v119 = vld [vmem:[#allocation2 + $0x190] sm:$0xff]
    %v120 = vld [vmem:[#allocation2 + $0x198] sm:$0xff]
    %v121 = vld [vmem:[#allocation2 + $0x1a0] sm:$0xff]
    %v122 = vld [vmem:[#allocation2 + $0x1a8] sm:$0xff]
    %v123 = vld [vmem:[#allocation2 + $0x1b0] sm:$0xff]
    %v124 = vld [vmem:[#allocation2 + $0x1b8] sm:$0xff]
    %v125 = vld [vmem:[#allocation2 + $0x1c0] sm:$0xff]
    %v126 = vld [vmem:[#allocation2 + $0x1c8] sm:$0xff]
    %v127 = vld [vmem:[#allocation2 + $0x1d0] sm:$0xff]
    %v128 = vld [vmem:[#allocation2 + $0x1d8] sm:$0xff]
    %v129 = vld [vmem:[#allocation2 + $0x1e0] sm:$0xff]
    %v130 = vld [vmem:[#allocation2 + $0x1e8] sm:$0xff]
    %v131 = vld [vmem:[#allocation2 + $0x1f0] sm:$0xff]
    %v132 = vld [vmem:[#allocation2 + $0x1f8] sm:$0xff]
    %v133 = vld [vmem:[#allocation2 + $0x200] sm:$0xff]
    %v134 = vld [vmem:[#allocation2 + $0x208] sm:$0xff]
    %v135 = vld [vmem:[#allocation2 + $0x210] sm:$0xff]
    %v136 = vld [vmem:[#allocation2 + $0x218] sm:$0xff]
    %v137 = vld [vmem:[#allocation2 + $0x220] sm:$0xff]
    %v138 = vld [vmem:[#allocation2 + $0x228] sm:$0xff]
    %v139 = vld [vmem:[#allocation2 + $0x230] sm:$0xff]
    %v140 = vld [vmem:[#allocation2 + $0x238] sm:$0xff]
    %v141 = vld [vmem:[#allocation2 + $0x240] sm:$0xff]
    %v142 = vld [vmem:[#allocation2 + $0x248] sm:$0xff]
    %v143 = vld [vmem:[#allocation2 + $0x250] sm:$0xff]
    %v144 = vld [vmem:[#allocation2 + $0x258] sm:$0xff]
    %v145 = vld [vmem:[#allocation2 + $0x260] sm:$0xff]
    %v146 = vld [vmem:[#allocation2 + $0x268] sm:$0xff]
    %v147 = vld [vmem:[#allocation2 + $0x270] sm:$0xff]
    %v148 = vld [vmem:[#allocation2 + $0x278] sm:$0xff]
    %v149 = vld [vmem:[#allocation2 + $0x280] sm:$0xff]
    %v150 = vld [vmem:[#allocation2 + $0x288] sm:$0xff]
    %v151 = vld [vmem:[#allocation2 + $0x290] sm:$0xff]
    %v152 = vld [vmem:[#allocation2 + $0x298] sm:$0xff]
    %v153 = vld [vmem:[#allocation2 + $0x2a0] sm:$0xff]
    %v154 = vld [vmem:[#allocation2 + $0x2a8] sm:$0xff]
    %v155 = vld [vmem:[#allocation2 + $0x2b0] sm:$0xff]
    %v156 = vld [vmem:[#allocation2 + $0x2b8] sm:$0xff]
    %v157 = vld [vmem:[#allocation2 + $0x2c0] sm:$0xff]
    %v158 = vld [vmem:[#allocation2 + $0x2c8] sm:$0xff]
    %v159 = vld [vmem:[#allocation2 + $0x2d0] sm:$0xff]
    %v160 = vld [vmem:[#allocation2 + $0x2d8] sm:$0xff]
    %v161 = vld [vmem:[#allocation2 + $0x2e0] sm:$0xff]
    %v162 = vld [vmem:[#allocation2 + $0x2e8] sm:$0xff]
    %v163 = vld [vmem:[#allocation2 + $0x2f0] sm:$0xff]
    %v164 = vld [vmem:[#allocation2 + $0x2f8] sm:$0xff]
    %v165 = vld [vmem:[#allocation2 + $0x300] sm:$0xff]
    %v166 = vld [vmem:[#allocation2 + $0x308] sm:$0xff]
    %v167 = vld [vmem:[#allocation2 + $0x310] sm:$0xff]
    %v168 = vld [vmem:[#allocation2 + $0x318] sm:$0xff]
    %v169 = vld [vmem:[#allocation2 + $0x320] sm:$0xff]
    %v170 = vld [vmem:[#allocation2 + $0x328] sm:$0xff]
    %v171 = vld [vmem:[#allocation2 + $0x330] sm:$0xff]
    %v172 = vld [vmem:[#allocation2 + $0x338] sm:$0xff]
    %v173 = vld [vmem:[#allocation2 + $0x340] sm:$0xff]
    %v174 = vld [vmem:[#allocation2 + $0x348] sm:$0xff]
    %v175 = vld [vmem:[#allocation2 + $0x350] sm:$0xff]
    %v176 = vld [vmem:[#allocation2 + $0x358] sm:$0xff]
    %v177 = vld [vmem:[#allocation2 + $0x360] sm:$0xff]
    %v178 = vld [vmem:[#allocation2 + $0x368] sm:$0xff]
    %v179 = vld [vmem:[#allocation2 + $0x370] sm:$0xff]
    %v180 = vld [vmem:[#allocation2 + $0x378] sm:$0xff]
    %v181 = vld [vmem:[#allocation2 + $0x380] sm:$0xff]
    %v182 = vld [vmem:[#allocation2 + $0x388] sm:$0xff]
    %v183 = vld [vmem:[#allocation2 + $0x390] sm:$0xff]
    %v184 = vld [vmem:[#allocation2 + $0x398] sm:$0xff]
    %v185 = vld [vmem:[#allocation2 + $0x3a0] sm:$0xff]
    %v186 = vld [vmem:[#allocation2 + $0x3a8] sm:$0xff]
    %v187 = vld [vmem:[#allocation2 + $0x3b0] sm:$0xff]
    %v188 = vld [vmem:[#allocation2 + $0x3b8] sm:$0xff]
    %v189 = vld [vmem:[#allocation2 + $0x3c0] sm:$0xff]
    %v190 = vld [vmem:[#allocation2 + $0x3c8] sm:$0xff]
    %v191 = vld [vmem:[#allocation2 + $0x3d0] sm:$0xff]
    %v192 = vld [vmem:[#allocation2 + $0x3d8] sm:$0xff]
    %v193 = vld [vmem:[#allocation2 + $0x3e0] sm:$0xff]
    %v194 = vld [vmem:[#allocation2 + $0x3e8] sm:$0xff]
    %v195 = vld [vmem:[#allocation2 + $0x3f0] sm:$0xff]
    %v196 = vld [vmem:[#allocation2 + $0x3f8] sm:$0xff]
    %v197 = vld [vmem:[#allocation2 + $0x400] sm:$0xff]
    %v198 = vld [vmem:[#allocation2 + $0x408] sm:$0xff]
    %v199 = vld [vmem:[#allocation2 + $0x410] sm:$0xff]
    %v200 = vld [vmem:[#allocation2 + $0x418] sm:$0xff]
    %v201 = vld [vmem:[#allocation2 + $0x420] sm:$0xff]
    %v202 = vld [vmem:[#allocation2 + $0x428] sm:$0xff]
    %v203 = vld [vmem:[#allocation2 + $0x430] sm:$0xff]
    %v204 = vld [vmem:[#allocation2 + $0x438] sm:$0xff]
    %v205 = vld [vmem:[#allocation2 + $0x440] sm:$0xff]
    %v206 = vld [vmem:[#allocation2 + $0x448] sm:$0xff]
    %v207 = vld [vmem:[#allocation2 + $0x450] sm:$0xff]
    %v208 = vld [vmem:[#allocation2 + $0x458] sm:$0xff]
    %v209 = vld [vmem:[#allocation2 + $0x460] sm:$0xff]
    %v210 = vld [vmem:[#allocation2 + $0x468] sm:$0xff]
    %v211 = vld [vmem:[#allocation2 + $0x470] sm:$0xff]
    %v212 = vld [vmem:[#allocation2 + $0x478] sm:$0xff]
    %v213 = vld [vmem:[#allocation2 + $0x480] sm:$0xff]
    %v214 = vld [vmem:[#allocation2 + $0x488] sm:$0xff]
    %v215 = vld [vmem:[#allocation2 + $0x490] sm:$0xff]
    %v216 = vld [vmem:[#allocation2 + $0x498] sm:$0xff]
    %v217 = vld [vmem:[#allocation2 + $0x4a0] sm:$0xff]
    %v218 = vld [vmem:[#allocation2 + $0x4a8] sm:$0xff]
    %v219 = vld [vmem:[#allocation2 + $0x4b0] sm:$0xff]
    %v220 = vld [vmem:[#allocation2 + $0x4b8] sm:$0xff]
    %v221 = vld [vmem:[#allocation2 + $0x4c0] sm:$0xff]
    %v222 = vld [vmem:[#allocation2 + $0x4c8] sm:$0xff]
    %v223 = vld [vmem:[#allocation2 + $0x4d0] sm:$0xff]
    %v224 = vld [vmem:[#allocation2 + $0x4d8] sm:$0xff]
    %v225 = vld [vmem:[#allocation2 + $0x4e0] sm:$0xff]
    %v226 = vld [vmem:[#allocation2 + $0x4e8] sm:$0xff]
    %v227 = vld [vmem:[#allocation2 + $0x4f0] sm:$0xff]
    %v228 = vld [vmem:[#allocation2 + $0x4f8] sm:$0xff]
    %v229 = vld [vmem:[#allocation2 + $0x500] sm:$0xff]
    %v230 = vld [vmem:[#allocation2 + $0x508] sm:$0xff]
    %v231 = vld [vmem:[#allocation2 + $0x510] sm:$0xff]
    %v232 = vld [vmem:[#allocation2 + $0x518] sm:$0xff]
    %v233 = vld [vmem:[#allocation2 + $0x520] sm:$0xff]
    %v234 = vld [vmem:[#allocation2 + $0x528] sm:$0xff]
    %v235 = vld [vmem:[#allocation2 + $0x530] sm:$0xff]
    %v236 = vld [vmem:[#allocation2 + $0x538] sm:$0xff]
    %v237 = vld [vmem:[#allocation2 + $0x540] sm:$0xff]
    %v238 = vld [vmem:[#allocation2 + $0x548] sm:$0xff]
    %v239 = vld [vmem:[#allocation2 + $0x550] sm:$0xff]
    %v240 = vld [vmem:[#allocation2 + $0x558] sm:$0xff]
    %v241 = vld [vmem:[#allocation2 + $0x560] sm:$0xff]
    %v242 = vld [vmem:[#allocation2 + $0x568] sm:$0xff]
    %v243 = vld [vmem:[#allocation2 + $0x570] sm:$0xff]
    %v244 = vld [vmem:[#allocation2 + $0x578] sm:$0xff]
    %v245 = vld [vmem:[#allocation2 + $0x580] sm:$0xff]
    %v246 = vld [vmem:[#allocation2 + $0x588] sm:$0xff]
    %v247 = vld [vmem:[#allocation2 + $0x590] sm:$0xff]
    %v248 = vld [vmem:[#allocation2 + $0x598] sm:$0xff]
    %v249 = vld [vmem:[#allocation2 + $0x5a0] sm:$0xff]
    %v250 = vld [vmem:[#allocation2 + $0x5a8] sm:$0xff]
    %v251 = vld [vmem:[#allocation2 + $0x5b0] sm:$0xff]
    %v252 = vld [vmem:[#allocation2 + $0x5b8] sm:$0xff]
    %v253 = vld [vmem:[#allocation2 + $0x5c0] sm:$0xff]
    %v254 = vld [vmem:[#allocation2 + $0x5c8] sm:$0xff]
    %v255 = vld [vmem:[#allocation2 + $0x5d0] sm:$0xff]
    %v256 = vld [vmem:[#allocation2 + $0x5d8] sm:$0xff]
    %v257 = vld [vmem:[#allocation2 + $0x5e0] sm:$0xff]
    %v258 = vld [vmem:[#allocation2 + $0x5e8] sm:$0xff]
    %v259 = vld [vmem:[#allocation2 + $0x5f0] sm:$0xff]
    %v260 = vld [vmem:[#allocation2 + $0x5f8] sm:$0xff]
    %v261 = vld [vmem:[#allocation2 + $0x600] sm:$0xff]
    %v262 = vld [vmem:[#allocation2 + $0x608] sm:$0xff]
    %v263 = vld [vmem:[#allocation2 + $0x610] sm:$0xff]
    %v264 = vld [vmem:[#allocation2 + $0x618] sm:$0xff]
    %v265 = vld [vmem:[#allocation2 + $0x620] sm:$0xff]
    %v266 = vld [vmem:[#allocation2 + $0x628] sm:$0xff]
    %v267 = vld [vmem:[#allocation2 + $0x630] sm:$0xff]
    %v268 = vld [vmem:[#allocation2 + $0x638] sm:$0xff]
    %v269 = vld [vmem:[#allocation2 + $0x640] sm:$0xff]
    %v270 = vld [vmem:[#allocation2 + $0x648] sm:$0xff]
    %v271 = vld [vmem:[#allocation2 + $0x650] sm:$0xff]
    %v272 = vld [vmem:[#allocation2 + $0x658] sm:$0xff]
    %v273 = vld [vmem:[#allocation2 + $0x660] sm:$0xff]
    %v274 = vld [vmem:[#allocation2 + $0x668] sm:$0xff]
    %v275 = vld [vmem:[#allocation2 + $0x670] sm:$0xff]
    %v276 = vld [vmem:[#allocation2 + $0x678] sm:$0xff]
    %v277 = vld [vmem:[#allocation2 + $0x680] sm:$0xff]
    %v278 = vld [vmem:[#allocation2 + $0x688] sm:$0xff]
    %v279 = vld [vmem:[#allocation2 + $0x690] sm:$0xff]
    %v280 = vld [vmem:[#allocation2 + $0x698] sm:$0xff]
    %v281 = vld [vmem:[#allocation2 + $0x6a0] sm:$0xff]
    %v282 = vld [vmem:[#allocation2 + $0x6a8] sm:$0xff]
    %v283 = vld [vmem:[#allocation2 + $0x6b0] sm:$0xff]
    %v284 = vld [vmem:[#allocation2 + $0x6b8] sm:$0xff]
    %v285 = vld [vmem:[#allocation2 + $0x6c0] sm:$0xff]
    %v286 = vld [vmem:[#allocation2 + $0x6c8] sm:$0xff]
    %v287 = vld [vmem:[#allocation2 + $0x6d0] sm:$0xff]
    %v288 = vld [vmem:[#allocation2 + $0x6d8] sm:$0xff]
    %v289 = vld [vmem:[#allocation2 + $0x6e0] sm:$0xff]
    %v290 = vld [vmem:[#allocation2 + $0x6e8] sm:$0xff]
    %v291 = vld [vmem:[#allocation2 + $0x6f0] sm:$0xff]
    %v292 = vld [vmem:[#allocation2 + $0x6f8] sm:$0xff]
    %v293 = vld [vmem:[#allocation2 + $0x700] sm:$0xff]
    %v294 = vld [vmem:[#allocation2 + $0x708] sm:$0xff]
    %v295 = vld [vmem:[#allocation2 + $0x710] sm:$0xff]
    %v296 = vld [vmem:[#allocation2 + $0x718] sm:$0xff]
    %v297 = vld [vmem:[#allocation2 + $0x720] sm:$0xff]
    %v298 = vld [vmem:[#allocation2 + $0x728] sm:$0xff]
    %v299 = vld [vmem:[#allocation2 + $0x730] sm:$0xff]
    %v300 = vld [vmem:[#allocation2 + $0x738] sm:$0xff]
    %v301 = vld [vmem:[#allocation2 + $0x740] sm:$0xff]
    %v302 = vld [vmem:[#allocation2 + $0x748] sm:$0xff]
    %v303 = vld [vmem:[#allocation2 + $0x750] sm:$0xff]
    %v304 = vld [vmem:[#allocation2 + $0x758] sm:$0xff]
    %v305 = vld [vmem:[#allocation2 + $0x760] sm:$0xff]
    %v306 = vld [vmem:[#allocation2 + $0x768] sm:$0xff]
    %v307 = vld [vmem:[#allocation2 + $0x770] sm:$0xff]
    %v308 = vld [vmem:[#allocation2 + $0x778] sm:$0xff]
    %v309 = vld [vmem:[#allocation2 + $0x780] sm:$0xff]
    %v310 = vld [vmem:[#allocation2 + $0x788] sm:$0xff]
    %v311 = vld [vmem:[#allocation2 + $0x790] sm:$0xff]
    %v312 = vld [vmem:[#allocation2 + $0x798] sm:$0xff]
    %v313 = vld [vmem:[#allocation2 + $0x7a0] sm:$0xff]
    %v314 = vld [vmem:[#allocation2 + $0x7a8] sm:$0xff]
    %v315 = vld [vmem:[#allocation2 + $0x7b0] sm:$0xff]
    %v316 = vld [vmem:[#allocation2 + $0x7b8] sm:$0xff]
    %v317 = vld [vmem:[#allocation2 + $0x7c0] sm:$0xff]
    %v318 = vld [vmem:[#allocation2 + $0x7c8] sm:$0xff]
    %v319 = vld [vmem:[#allocation2 + $0x7d0] sm:$0xff]
    %v320 = vld [vmem:[#allocation2 + $0x7d8] sm:$0xff]
    %v321 = vld [vmem:[#allocation2 + $0x7e0] sm:$0xff]
    %v322 = vld [vmem:[#allocation2 + $0x7e8] sm:$0xff]
    %v323 = vld [vmem:[#allocation2 + $0x7f0] sm:$0xff]
    %v324 = vld [vmem:[#allocation2 + $0x7f8] sm:$0xff]
    %v325 = vld [vmem:[#allocation2 + $0x800] sm:$0xff]
    %v326 = vld [vmem:[#allocation2 + $0x808] sm:$0xff]
    %v327 = vld [vmem:[#allocation2 + $0x810] sm:$0xff]
    %v328 = vld [vmem:[#allocation2 + $0x818] sm:$0xff]
    %v329 = vld [vmem:[#allocation2 + $0x820] sm:$0xff]
    %v330 = vld [vmem:[#allocation2 + $0x828] sm:$0xff]
    %v331 = vld [vmem:[#allocation2 + $0x830] sm:$0xff]
    %v332 = vld [vmem:[#allocation2 + $0x838] sm:$0xff]
    %v333 = vld [vmem:[#allocation2 + $0x840] sm:$0xff]
    %v334 = vld [vmem:[#allocation2 + $0x848] sm:$0xff]
    %v335 = vld [vmem:[#allocation2 + $0x850] sm:$0xff]
    %v336 = vld [vmem:[#allocation2 + $0x858] sm:$0xff]
    %v337 = vld [vmem:[#allocation2 + $0x860] sm:$0xff]
    %v338 = vld [vmem:[#allocation2 + $0x868] sm:$0xff]
    %v339 = vld [vmem:[#allocation2 + $0x870] sm:$0xff]
    %v340 = vld [vmem:[#allocation2 + $0x878] sm:$0xff]
    %v341 = vld [vmem:[#allocation2 + $0x880] sm:$0xff]
    %v342 = vld [vmem:[#allocation2 + $0x888] sm:$0xff]
    %v343 = vld [vmem:[#allocation2 + $0x890] sm:$0xff]
    %v344 = vld [vmem:[#allocation2 + $0x898] sm:$0xff]
    %v345 = vld [vmem:[#allocation2 + $0x8a0] sm:$0xff]
    %v346 = vld [vmem:[#allocation2 + $0x8a8] sm:$0xff]
    %v347 = vld [vmem:[#allocation2 + $0x8b0] sm:$0xff]
    %v348 = vld [vmem:[#allocation2 + $0x8b8] sm:$0xff]
    %v349 = vld [vmem:[#allocation2 + $0x8c0] sm:$0xff]
    %v350 = vld [vmem:[#allocation2 + $0x8c8] sm:$0xff]
    %v351 = vld [vmem:[#allocation2 + $0x8d0] sm:$0xff]
    %v352 = vld [vmem:[#allocation2 + $0x8d8] sm:$0xff]
    %v353 = vld [vmem:[#allocation2 + $0x8e0] sm:$0xff]
    %v354 = vld [vmem:[#allocation2 + $0x8e8] sm:$0xff]
    %v355 = vld [vmem:[#allocation2 + $0x8f0] sm:$0xff]
    %v356 = vld [vmem:[#allocation2 + $0x8f8] sm:$0xff]
    %v357 = vld [vmem:[#allocation5] sm:$0xff]
    %v358 = vld [vmem:[#allocation5 + $0x8] sm:$0xff]
    %v359 = vld [vmem:[#allocation5 + $0x10] sm:$0xff]
    %v360 = vld [vmem:[#allocation5 + $0x18] sm:$0xff]
    %v361 = vld [vmem:[#allocation5 + $0x20] sm:$0xff]
    %v362 = vld [vmem:[#allocation5 + $0x28] sm:$0xff]
    %v363 = vld [vmem:[#allocation5 + $0x30] sm:$0xff]
    %v364 = vld [vmem:[#allocation5 + $0x38] sm:$0xff]
    %v365 = vld [vmem:[#allocation5 + $0x40] sm:$0xff]
    %v366 = vld [vmem:[#allocation5 + $0x48] sm:$0xff]
    %v367 = vld [vmem:[#allocation5 + $0x50] sm:$0xff]
    %v368 = vld [vmem:[#allocation5 + $0x58] sm:$0xff]
    %v369 = vld [vmem:[#allocation5 + $0x60] sm:$0xff]
    %v370 = vld [vmem:[#allocation5 + $0x68] sm:$0xff]
    %v371 = vld [vmem:[#allocation5 + $0x70] sm:$0xff]
    %v372 = vld [vmem:[#allocation5 + $0x78] sm:$0xff]
    %v373 = vld [vmem:[#allocation5 + $0x80] sm:$0xff]
    %v374 = vld [vmem:[#allocation5 + $0x88] sm:$0xff]
    %v375 = vld [vmem:[#allocation5 + $0x90] sm:$0xff]
    %v376 = vld [vmem:[#allocation5 + $0x98] sm:$0xff]
    %v377 = vld [vmem:[#allocation5 + $0xa0] sm:$0xff]
    %v378 = vld [vmem:[#allocation5 + $0xa8] sm:$0xff]
    %v379 = vld [vmem:[#allocation5 + $0xb0] sm:$0xff]
    %v380 = vld [vmem:[#allocation5 + $0xb8] sm:$0xff]
    %v381 = vld [vmem:[#allocation5 + $0xc0] sm:$0xff]
    %v382 = vld [vmem:[#allocation5 + $0xc8] sm:$0xff]
    %v383 = vld [vmem:[#allocation5 + $0xd0] sm:$0xff]
    %v384 = vld [vmem:[#allocation5 + $0xd8] sm:$0xff]
    %v385 = vld [vmem:[#allocation5 + $0xe0] sm:$0xff]
    %v386 = vld [vmem:[#allocation5 + $0xe8] sm:$0xff]
    %v387 = vld [vmem:[#allocation5 + $0xf0] sm:$0xff]
    %v388 = vld [vmem:[#allocation5 + $0xf8] sm:$0xff]
    %v389 = vld [vmem:[#allocation5 + $0x100] sm:$0xff]
    %v390 = vld [vmem:[#allocation5 + $0x108] sm:$0xff]
    %v391 = vld [vmem:[#allocation5 + $0x110] sm:$0xff]
    %v392 = vld [vmem:[#allocation5 + $0x118] sm:$0xff]
    %v393 = vld [vmem:[#allocation5 + $0x120] sm:$0xff]
    %v394 = vld [vmem:[#allocation5 + $0x128] sm:$0xff]
    %v395 = vld [vmem:[#allocation5 + $0x130] sm:$0xff]
    %v396 = vld [vmem:[#allocation5 + $0x138] sm:$0xff]
    %v397 = vld [vmem:[#allocation5 + $0x140] sm:$0xff]
    %v398 = vld [vmem:[#allocation5 + $0x148] sm:$0xff]
    %v399 = vld [vmem:[#allocation5 + $0x150] sm:$0xff]
    %v400 = vld [vmem:[#allocation5 + $0x158] sm:$0xff]
    %v401 = vld [vmem:[#allocation5 + $0x160] sm:$0xff]
    %v402 = vld [vmem:[#allocation5 + $0x168] sm:$0xff]
    %v403 = vld [vmem:[#allocation5 + $0x170] sm:$0xff]
    %v404 = vld [vmem:[#allocation5 + $0x178] sm:$0xff]
    %v405 = vld [vmem:[#allocation5 + $0x180] sm:$0xff]
    %v406 = vld [vmem:[#allocation5 + $0x188] sm:$0xff]
    %v407 = vld [vmem:[#allocation5 + $0x190] sm:$0xff]
    %v408 = vld [vmem:[#allocation5 + $0x198] sm:$0xff]
    %v409 = vld [vmem:[#allocation5 + $0x1a0] sm:$0xff]
    %v410 = vld [vmem:[#allocation5 + $0x1a8] sm:$0xff]
    %v411 = vld [vmem:[#allocation5 + $0x1b0] sm:$0xff]
    %v412 = vld [vmem:[#allocation5 + $0x1b8] sm:$0xff]
    %v413 = vld [vmem:[#allocation5 + $0x1c0] sm:$0xff]
    %v414 = vld [vmem:[#allocation5 + $0x1c8] sm:$0xff]
    %v415 = vld [vmem:[#allocation5 + $0x1d0] sm:$0xff]
    %v416 = vld [vmem:[#allocation5 + $0x1d8] sm:$0xff]
    %v417 = vld [vmem:[#allocation5 + $0x1e0] sm:$0xff]
    %v418 = vld [vmem:[#allocation5 + $0x1e8] sm:$0xff]
    %v419 = vld [vmem:[#allocation5 + $0x1f0] sm:$0xff]
    %v420 = vld [vmem:[#allocation5 + $0x1f8] sm:$0xff]
    %v421 = vld [vmem:[#allocation5 + $0x200] sm:$0xff]
    %v422 = vld [vmem:[#allocation5 + $0x208] sm:$0xff]
    %v423 = vld [vmem:[#allocation5 + $0x210] sm:$0xff]
    %v424 = vld [vmem:[#allocation5 + $0x218] sm:$0xff]
    %v425 = vld [vmem:[#allocation5 + $0x220] sm:$0xff]
    %v426 = vld [vmem:[#allocation5 + $0x228] sm:$0xff]
    %v427 = vld [vmem:[#allocation5 + $0x230] sm:$0xff]
    %v428 = vld [vmem:[#allocation5 + $0x238] sm:$0xff]
    %v429 = vld [vmem:[#allocation5 + $0x240] sm:$0xff]
    %v430 = vld [vmem:[#allocation5 + $0x248] sm:$0xff]
    %v431 = vld [vmem:[#allocation5 + $0x250] sm:$0xff]
    %v432 = vld [vmem:[#allocation5 + $0x258] sm:$0xff]
    %v433 = vld [vmem:[#allocation5 + $0x260] sm:$0xff]
    %v434 = vld [vmem:[#allocation5 + $0x268] sm:$0xff]
    %v435 = vld [vmem:[#allocation5 + $0x270] sm:$0xff]
    %v436 = vld [vmem:[#allocation5 + $0x278] sm:$0xff]
    %v437 = vld [vmem:[#allocation5 + $0x280] sm:$0xff]
    %v438 = vld [vmem:[#allocation5 + $0x288] sm:$0xff]
    %v439 = vld [vmem:[#allocation5 + $0x290] sm:$0xff]
    %v440 = vld [vmem:[#allocation5 + $0x298] sm:$0xff]
    %v441 = vld [vmem:[#allocation5 + $0x2a0] sm:$0xff]
    %v442 = vld [vmem:[#allocation5 + $0x2a8] sm:$0xff]
    %v443 = vld [vmem:[#allocation5 + $0x2b0] sm:$0xff]
    %v444 = vld [vmem:[#allocation5 + $0x2b8] sm:$0xff]
    %v445 = vld [vmem:[#allocation5 + $0x2c0] sm:$0xff]
    %v446 = vld [vmem:[#allocation5 + $0x2c8] sm:$0xff]
    %v447 = vld [vmem:[#allocation5 + $0x2d0] sm:$0xff]
    %v448 = vld [vmem:[#allocation5 + $0x2d8] sm:$0xff]
    %v449 = vld [vmem:[#allocation5 + $0x2e0] sm:$0xff]
    %v450 = vld [vmem:[#allocation5 + $0x2e8] sm:$0xff]
    %v451 = vld [vmem:[#allocation5 + $0x2f0] sm:$0xff]
    %v452 = vld [vmem:[#allocation5 + $0x2f8] sm:$0xff]
    %v453 = vld [vmem:[#allocation5 + $0x300] sm:$0xff]
    %v454 = vld [vmem:[#allocation5 + $0x308] sm:$0xff]
    %v455 = vld [vmem:[#allocation5 + $0x310] sm:$0xff]
    %v456 = vld [vmem:[#allocation5 + $0x318] sm:$0xff]
    %v457 = vld [vmem:[#allocation5 + $0x320] sm:$0xff]
    %v458 = vld [vmem:[#allocation5 + $0x328] sm:$0xff]
    %v459 = vld [vmem:[#allocation5 + $0x330] sm:$0xff]
    %v460 = vld [vmem:[#allocation5 + $0x338] sm:$0xff]
    %v461 = vld [vmem:[#allocation5 + $0x340] sm:$0xff]
    %v462 = vld [vmem:[#allocation5 + $0x348] sm:$0xff]
    %v463 = vld [vmem:[#allocation5 + $0x350] sm:$0xff]
    %v464 = vld [vmem:[#allocation5 + $0x358] sm:$0xff]
    %v465 = vld [vmem:[#allocation5 + $0x360] sm:$0xff]
    %v466 = vld [vmem:[#allocation5 + $0x368] sm:$0xff]
    %v467 = vld [vmem:[#allocation5 + $0x370] sm:$0xff]
    %v468 = vld [vmem:[#allocation5 + $0x378] sm:$0xff]
    %v469 = vld [vmem:[#allocation5 + $0x380] sm:$0xff]
    %v470 = vld [vmem:[#allocation5 + $0x388] sm:$0xff]
    %v471 = vld [vmem:[#allocation5 + $0x390] sm:$0xff]
    %v472 = vld [vmem:[#allocation5 + $0x398] sm:$0xff]
    %v473 = vld [vmem:[#allocation5 + $0x3a0] sm:$0xff]
    %v474 = vld [vmem:[#allocation5 + $0x3a8] sm:$0xff]
    %v475 = vld [vmem:[#allocation5 + $0x3b0] sm:$0xff]
    %v476 = vld [vmem:[#allocation5 + $0x3b8] sm:$0xff]
    %v477 = vld [vmem:[#allocation5 + $0x3c0] sm:$0xff]
    %v478 = vld [vmem:[#allocation5 + $0x3c8] sm:$0xff]
    %v479 = vld [vmem:[#allocation5 + $0x3d0] sm:$0xff]
    %v480 = vld [vmem:[#allocation5 + $0x3d8] sm:$0xff]
    %v481 = vld [vmem:[#allocation5 + $0x3e0] sm:$0xff]
    %v482 = vld [vmem:[#allocation5 + $0x3e8] sm:$0xff]
    %v483 = vld [vmem:[#allocation5 + $0x3f0] sm:$0xff]
    %v484 = vld [vmem:[#allocation5 + $0x3f8] sm:$0xff]
    %v485 = vld [vmem:[#allocation5 + $0x400] sm:$0xff]
    %v486 = vld [vmem:[#allocation5 + $0x408] sm:$0xff]
    %v487 = vld [vmem:[#allocation5 + $0x410] sm:$0xff]
    %v488 = vld [vmem:[#allocation5 + $0x418] sm:$0xff]
    %v489 = vld [vmem:[#allocation5 + $0x420] sm:$0xff]
    %v490 = vld [vmem:[#allocation5 + $0x428] sm:$0xff]
    %v491 = vld [vmem:[#allocation5 + $0x430] sm:$0xff]
    %v492 = vld [vmem:[#allocation5 + $0x438] sm:$0xff]
    %v493 = vld [vmem:[#allocation5 + $0x440] sm:$0xff]
    %v494 = vld [vmem:[#allocation5 + $0x448] sm:$0xff]
    %v495 = vld [vmem:[#allocation5 + $0x450] sm:$0xff]
    %v496 = vld [vmem:[#allocation5 + $0x458] sm:$0xff]
    %v497 = vld [vmem:[#allocation5 + $0x460] sm:$0xff]
    %v498 = vld [vmem:[#allocation5 + $0x468] sm:$0xff]
    %v499 = vld [vmem:[#allocation5 + $0x470] sm:$0xff]
    %v500 = vld [vmem:[#allocation5 + $0x478] sm:$0xff]
    %v501 = vld [vmem:[#allocation5 + $0x480] sm:$0xff]
    %v502 = vld [vmem:[#allocation5 + $0x488] sm:$0xff]
    %v503 = vld [vmem:[#allocation5 + $0x490] sm:$0xff]
    %v504 = vld [vmem:[#allocation5 + $0x498] sm:$0xff]
    %v505 = vld [vmem:[#allocation5 + $0x4a0] sm:$0xff]
    %v506 = vld [vmem:[#allocation5 + $0x4a8] sm:$0xff]
    %v507 = vld [vmem:[#allocation5 + $0x4b0] sm:$0xff]
    %v508 = vld [vmem:[#allocation5 + $0x4b8] sm:$0xff]
    %v509 = vld [vmem:[#allocation5 + $0x4c0] sm:$0xff]
    %v510 = vld [vmem:[#allocation5 + $0x4c8] sm:$0xff]
    %v511 = vld [vmem:[#allocation5 + $0x4d0] sm:$0xff]
    %v512 = vld [vmem:[#allocation5 + $0x4d8] sm:$0xff]
    %v513 = vld [vmem:[#allocation5 + $0x4e0] sm:$0xff]
    %v514 = vld [vmem:[#allocation5 + $0x4e8] sm:$0xff]
    %v515 = vld [vmem:[#allocation5 + $0x4f0] sm:$0xff]
    %v516 = vld [vmem:[#allocation5 + $0x4f8] sm:$0xff]
    %v517 = vld [vmem:[#allocation5 + $0x500] sm:$0xff]
    %v518 = vld [vmem:[#allocation5 + $0x508] sm:$0xff]
    %v519 = vld [vmem:[#allocation5 + $0x510] sm:$0xff]
    %v520 = vld [vmem:[#allocation5 + $0x518] sm:$0xff]
    %v521 = vld [vmem:[#allocation5 + $0x520] sm:$0xff]
    %v522 = vld [vmem:[#allocation5 + $0x528] sm:$0xff]
    %v523 = vld [vmem:[#allocation5 + $0x530] sm:$0xff]
    %v524 = vld [vmem:[#allocation5 + $0x538] sm:$0xff]
    %v525 = vld [vmem:[#allocation5 + $0x540] sm:$0xff]
    %v526 = vld [vmem:[#allocation5 + $0x548] sm:$0xff]
    %v527 = vld [vmem:[#allocation5 + $0x550] sm:$0xff]
    %v528 = vld [vmem:[#allocation5 + $0x558] sm:$0xff]
    %v529 = vld [vmem:[#allocation5 + $0x560] sm:$0xff]
    %v530 = vld [vmem:[#allocation5 + $0x568] sm:$0xff]
    %v531 = vld [vmem:[#allocation5 + $0x570] sm:$0xff]
    %v532 = vld [vmem:[#allocation5 + $0x578] sm:$0xff]
    %v533 = vld [vmem:[#allocation5 + $0x580] sm:$0xff]
    %v534 = vld [vmem:[#allocation5 + $0x588] sm:$0xff]
    %v535 = vld [vmem:[#allocation5 + $0x590] sm:$0xff]
    %v536 = vld [vmem:[#allocation5 + $0x598] sm:$0xff]
    %v537 = vld [vmem:[#allocation5 + $0x5a0] sm:$0xff]
    %v538 = vld [vmem:[#allocation5 + $0x5a8] sm:$0xff]
    %v539 = vld [vmem:[#allocation5 + $0x5b0] sm:$0xff]
    %v540 = vld [vmem:[#allocation5 + $0x5b8] sm:$0xff]
    %v541 = vld [vmem:[#allocation5 + $0x5c0] sm:$0xff]
    %v542 = vld [vmem:[#allocation5 + $0x5c8] sm:$0xff]
    %v543 = vld [vmem:[#allocation5 + $0x5d0] sm:$0xff]
    %v544 = vld [vmem:[#allocation5 + $0x5d8] sm:$0xff]
    %v545 = vld [vmem:[#allocation5 + $0x5e0] sm:$0xff]
    %v546 = vld [vmem:[#allocation5 + $0x5e8] sm:$0xff]
    %v547 = vld [vmem:[#allocation5 + $0x5f0] sm:$0xff]
    %v548 = vld [vmem:[#allocation5 + $0x5f8] sm:$0xff]
    %v549 = vld [vmem:[#allocation5 + $0x600] sm:$0xff]
    %v550 = vld [vmem:[#allocation5 + $0x608] sm:$0xff]
    %v551 = vld [vmem:[#allocation5 + $0x610] sm:$0xff]
    %v552 = vld [vmem:[#allocation5 + $0x618] sm:$0xff]
    %v553 = vld [vmem:[#allocation5 + $0x620] sm:$0xff]
    %v554 = vld [vmem:[#allocation5 + $0x628] sm:$0xff]
    %v555 = vld [vmem:[#allocation5 + $0x630] sm:$0xff]
    %v556 = vld [vmem:[#allocation5 + $0x638] sm:$0xff]
    %v557 = vld [vmem:[#allocation5 + $0x640] sm:$0xff]
    %v558 = vld [vmem:[#allocation5 + $0x648] sm:$0xff]
    %v559 = vld [vmem:[#allocation5 + $0x650] sm:$0xff]
    %v560 = vld [vmem:[#allocation5 + $0x658] sm:$0xff]
    %v561 = vld [vmem:[#allocation5 + $0x660] sm:$0xff]
    %v562 = vld [vmem:[#allocation5 + $0x668] sm:$0xff]
    %v563 = vld [vmem:[#allocation5 + $0x670] sm:$0xff]
    %v564 = vld [vmem:[#allocation5 + $0x678] sm:$0xff]
    %v565 = vld [vmem:[#allocation5 + $0x680] sm:$0xff]
    %v566 = vld [vmem:[#allocation5 + $0x688] sm:$0xff]
    %v567 = vld [vmem:[#allocation5 + $0x690] sm:$0xff]
    %v568 = vld [vmem:[#allocation5 + $0x698] sm:$0xff]
    %v569 = vld [vmem:[#allocation5 + $0x6a0] sm:$0xff]
    %v570 = vld [vmem:[#allocation5 + $0x6a8] sm:$0xff]
    %v571 = vld [vmem:[#allocation5 + $0x6b0] sm:$0xff]
    %v572 = vld [vmem:[#allocation5 + $0x6b8] sm:$0xff]
    %v573 = vld [vmem:[#allocation5 + $0x6c0] sm:$0xff]
    %v574 = vld [vmem:[#allocation5 + $0x6c8] sm:$0xff]
    %v575 = vld [vmem:[#allocation5 + $0x6d0] sm:$0xff]
    %v576 = vld [vmem:[#allocation5 + $0x6d8] sm:$0xff]
    %v577 = vld [vmem:[#allocation5 + $0x6e0] sm:$0xff]
    %v578 = vld [vmem:[#allocation5 + $0x6e8] sm:$0xff]
    %v579 = vld [vmem:[#allocation5 + $0x6f0] sm:$0xff]
    %v580 = vld [vmem:[#allocation5 + $0x6f8] sm:$0xff]
    %v581 = vld [vmem:[#allocation5 + $0x700] sm:$0xff]
    %v582 = vld [vmem:[#allocation5 + $0x708] sm:$0xff]
    %v583 = vld [vmem:[#allocation5 + $0x710] sm:$0xff]
    %v584 = vld [vmem:[#allocation5 + $0x718] sm:$0xff]
    %v585 = vld [vmem:[#allocation5 + $0x720] sm:$0xff]
    %v586 = vld [vmem:[#allocation5 + $0x728] sm:$0xff]
    %v587 = vld [vmem:[#allocation5 + $0x730] sm:$0xff]
    %v588 = vld [vmem:[#allocation5 + $0x738] sm:$0xff]
    %v589 = vld [vmem:[#allocation5 + $0x740] sm:$0xff]
    %v590 = vld [vmem:[#allocation5 + $0x748] sm:$0xff]
    %v591 = vld [vmem:[#allocation5 + $0x750] sm:$0xff]
    %v592 = vld [vmem:[#allocation5 + $0x758] sm:$0xff]
    %v593 = vld [vmem:[#allocation5 + $0x760] sm:$0xff]
    %v594 = vld [vmem:[#allocation5 + $0x768] sm:$0xff]
    %v595 = vld [vmem:[#allocation5 + $0x770] sm:$0xff]
    %v596 = vld [vmem:[#allocation5 + $0x778] sm:$0xff]
    %v597 = vld [vmem:[#allocation5 + $0x780] sm:$0xff]
    %v598 = vld [vmem:[#allocation5 + $0x788] sm:$0xff]
    %v599 = vld [vmem:[#allocation5 + $0x790] sm:$0xff]
    %v600 = vld [vmem:[#allocation5 + $0x798] sm:$0xff]
    %v601 = vld [vmem:[#allocation5 + $0x7a0] sm:$0xff]
    %v602 = vld [vmem:[#allocation5 + $0x7a8] sm:$0xff]
    %v603 = vld [vmem:[#allocation5 + $0x7b0] sm:$0xff]
    %v604 = vld [vmem:[#allocation5 + $0x7b8] sm:$0xff]
    %v605 = vld [vmem:[#allocation5 + $0x7c0] sm:$0xff]
    %v606 = vld [vmem:[#allocation5 + $0x7c8] sm:$0xff]
    %v607 = vld [vmem:[#allocation5 + $0x7d0] sm:$0xff]
    %v608 = vld [vmem:[#allocation5 + $0x7d8] sm:$0xff]
    %v609 = vld [vmem:[#allocation5 + $0x7e0] sm:$0xff]
    %v610 = vld [vmem:[#allocation5 + $0x7e8] sm:$0xff]
    %v611 = vld [vmem:[#allocation5 + $0x7f0] sm:$0xff]
    %v612 = vld [vmem:[#allocation5 + $0x7f8] sm:$0xff]
    %v613 = vld [vmem:[#allocation5 + $0x800] sm:$0xff]
    %v614 = vld [vmem:[#allocation5 + $0x808] sm:$0xff]
    %v615 = vld [vmem:[#allocation5 + $0x810] sm:$0xff]
    %v616 = vld [vmem:[#allocation5 + $0x818] sm:$0xff]
    %v617 = vld [vmem:[#allocation5 + $0x820] sm:$0xff]
    %v618 = vld [vmem:[#allocation5 + $0x828] sm:$0xff]
    %v619 = vld [vmem:[#allocation5 + $0x830] sm:$0xff]
    %v620 = vld [vmem:[#allocation5 + $0x838] sm:$0xff]
    %v621 = vld [vmem:[#allocation5 + $0x840] sm:$0xff]
    %v622 = vld [vmem:[#allocation5 + $0x848] sm:$0xff]
    %v623 = vld [vmem:[#allocation5 + $0x850] sm:$0xff]
    %v624 = vld [vmem:[#allocation5 + $0x858] sm:$0xff]
    %v625 = vld [vmem:[#allocation5 + $0x860] sm:$0xff]
    %v626 = vld [vmem:[#allocation5 + $0x868] sm:$0xff]
    %v627 = vld [vmem:[#allocation5 + $0x870] sm:$0xff]
    %v628 = vld [vmem:[#allocation5 + $0x878] sm:$0xff]
    %v629 = vld [vmem:[#allocation5 + $0x880] sm:$0xff]
    %v630 = vld [vmem:[#allocation5 + $0x888] sm:$0xff]
    %v631 = vld [vmem:[#allocation5 + $0x890] sm:$0xff]
    %v632 = vld [vmem:[#allocation5 + $0x898] sm:$0xff]
    %v633 = vld [vmem:[#allocation5 + $0x8a0] sm:$0xff]
    %v634 = vld [vmem:[#allocation5 + $0x8a8] sm:$0xff]
    %v635 = vld [vmem:[#allocation5 + $0x8b0] sm:$0xff]
    %v636 = vld [vmem:[#allocation5 + $0x8b8] sm:$0xff]
    %v637 = vld [vmem:[#allocation5 + $0x8c0] sm:$0xff]
    %v638 = vld [vmem:[#allocation5 + $0x8c8] sm:$0xff]
    %v639 = vld [vmem:[#allocation5 + $0x8d0] sm:$0xff]
    %v640 = vld [vmem:[#allocation5 + $0x8d8] sm:$0xff]
    %v641 = vld [vmem:[#allocation5 + $0x8e0] sm:$0xff]
    %v642 = vld [vmem:[#allocation5 + $0x8e8] sm:$0xff]
    %v643 = vld [vmem:[#allocation5 + $0x8f0] sm:$0xff]
    %v644 = vld [vmem:[#allocation5 + $0x8f8] sm:$0xff]
    %v645 = vadd.f32 %v69, %v357
    %v646 = vadd.f32 %v70, %v358
    %v647 = vadd.f32 %v71, %v359
    %v648 = vadd.f32 %v72, %v360
    %v649 = vadd.f32 %v73, %v361
    %v650 = vadd.f32 %v74, %v362
    %v651 = vadd.f32 %v75, %v363
    %v652 = vadd.f32 %v76, %v364
    %v653 = vadd.f32 %v77, %v365
    %v654 = vadd.f32 %v78, %v366
    %v655 = vadd.f32 %v79, %v367
    %v656 = vadd.f32 %v80, %v368
    %v657 = vadd.f32 %v81, %v369
    %v658 = vadd.f32 %v82, %v370
    %v659 = vadd.f32 %v83, %v371
    %v660 = vadd.f32 %v84, %v372
    %v661 = vadd.f32 %v85, %v373
    %v662 = vadd.f32 %v86, %v374
    %v663 = vadd.f32 %v87, %v375
    %v664 = vadd.f32 %v88, %v376
    %v665 = vadd.f32 %v89, %v377
    %v666 = vadd.f32 %v90, %v378
    %v667 = vadd.f32 %v91, %v379
    %v668 = vadd.f32 %v92, %v380
    %v669 = vadd.f32 %v93, %v381
    %v670 = vadd.f32 %v94, %v382
    %v671 = vadd.f32 %v95, %v383
    %v672 = vadd.f32 %v96, %v384
    %v673 = vadd.f32 %v97, %v385
    %v674 = vadd.f32 %v98, %v386
    %v675 = vadd.f32 %v99, %v387
    %v676 = vadd.f32 %v100, %v388
    %v677 = vadd.f32 %v101, %v389
    %v678 = vadd.f32 %v102, %v390
    %v679 = vadd.f32 %v103, %v391
    %v680 = vadd.f32 %v104, %v392
    %v681 = vadd.f32 %v105, %v393
    %v682 = vadd.f32 %v106, %v394
    %v683 = vadd.f32 %v107, %v395
    %v684 = vadd.f32 %v108, %v396
    %v685 = vadd.f32 %v109, %v397
    %v686 = vadd.f32 %v110, %v398
    %v687 = vadd.f32 %v111, %v399
    %v688 = vadd.f32 %v112, %v400
    %v689 = vadd.f32 %v113, %v401
    %v690 = vadd.f32 %v114, %v402
    %v691 = vadd.f32 %v115, %v403
    %v692 = vadd.f32 %v116, %v404
    %v693 = vadd.f32 %v117, %v405
    %v694 = vadd.f32 %v118, %v406
    %v695 = vadd.f32 %v119, %v407
    %v696 = vadd.f32 %v120, %v408
    %v697 = vadd.f32 %v121, %v409
    %v698 = vadd.f32 %v122, %v410
    %v699 = vadd.f32 %v123, %v411
    %v700 = vadd.f32 %v124, %v412
    %v701 = vadd.f32 %v125, %v413
    %v702 = vadd.f32 %v126, %v414
    %v703 = vadd.f32 %v127, %v415
    %v704 = vadd.f32 %v128, %v416
    %v705 = vadd.f32 %v129, %v417
    %v706 = vadd.f32 %v130, %v418
    %v707 = vadd.f32 %v131, %v419
    %v708 = vadd.f32 %v132, %v420
    %v709 = vadd.f32 %v133, %v421
    %v710 = vadd.f32 %v134, %v422
    %v711 = vadd.f32 %v135, %v423
    %v712 = vadd.f32 %v136, %v424
    %v713 = vadd.f32 %v137, %v425
    %v714 = vadd.f32 %v138, %v426
    %v715 = vadd.f32 %v139, %v427
    %v716 = vadd.f32 %v140, %v428
    %v717 = vadd.f32 %v141, %v429
    %v718 = vadd.f32 %v142, %v430
    %v719 = vadd.f32 %v143, %v431
    %v720 = vadd.f32 %v144, %v432
    %v721 = vadd.f32 %v145, %v433
    %v722 = vadd.f32 %v146, %v434
    %v723 = vadd.f32 %v147, %v435
    %v724 = vadd.f32 %v148, %v436
    %v725 = vadd.f32 %v149, %v437
    %v726 = vadd.f32 %v150, %v438
    %v727 = vadd.f32 %v151, %v439
    %v728 = vadd.f32 %v152, %v440
    %v729 = vadd.f32 %v153, %v441
    %v730 = vadd.f32 %v154, %v442
    %v731 = vadd.f32 %v155, %v443
    %v732 = vadd.f32 %v156, %v444
    %v733 = vadd.f32 %v157, %v445
    %v734 = vadd.f32 %v158, %v446
    %v735 = vadd.f32 %v159, %v447
    %v736 = vadd.f32 %v160, %v448
    %v737 = vadd.f32 %v161, %v449
    %v738 = vadd.f32 %v162, %v450
    %v739 = vadd.f32 %v163, %v451
    %v740 = vadd.f32 %v164, %v452
    %v741 = vadd.f32 %v165, %v453
    %v742 = vadd.f32 %v166, %v454
    %v743 = vadd.f32 %v167, %v455
    %v744 = vadd.f32 %v168, %v456
    %v745 = vadd.f32 %v169, %v457
    %v746 = vadd.f32 %v170, %v458
    %v747 = vadd.f32 %v171, %v459
    %v748 = vadd.f32 %v172, %v460
    %v749 = vadd.f32 %v173, %v461
    %v750 = vadd.f32 %v174, %v462
    %v751 = vadd.f32 %v175, %v463
    %v752 = vadd.f32 %v176, %v464
    %v753 = vadd.f32 %v177, %v465
    %v754 = vadd.f32 %v178, %v466
    %v755 = vadd.f32 %v179, %v467
    %v756 = vadd.f32 %v180, %v468
    %v757 = vadd.f32 %v181, %v469
    %v758 = vadd.f32 %v182, %v470
    %v759 = vadd.f32 %v183, %v471
    %v760 = vadd.f32 %v184, %v472
    %v761 = vadd.f32 %v185, %v473
    %v762 = vadd.f32 %v186, %v474
    %v763 = vadd.f32 %v187, %v475
    %v764 = vadd.f32 %v188, %v476
    %v765 = vadd.f32 %v189, %v477
    %v766 = vadd.f32 %v190, %v478
    %v767 = vadd.f32 %v191, %v479
    %v768 = vadd.f32 %v192, %v480
    %v769 = vadd.f32 %v193, %v481
    %v770 = vadd.f32 %v194, %v482
    %v771 = vadd.f32 %v195, %v483
    %v772 = vadd.f32 %v196, %v484
    %v773 = vadd.f32 %v197, %v485
    %v774 = vadd.f32 %v198, %v486
    %v775 = vadd.f32 %v199, %v487
    %v776 = vadd.f32 %v200, %v488
    %v777 = vadd.f32 %v201, %v489
    %v778 = vadd.f32 %v202, %v490
    %v779 = vadd.f32 %v203, %v491
    %v780 = vadd.f32 %v204, %v492
    %v781 = vadd.f32 %v205, %v493
    %v782 = vadd.f32 %v206, %v494
    %v783 = vadd.f32 %v207, %v495
    %v784 = vadd.f32 %v208, %v496
    %v785 = vadd.f32 %v209, %v497
    %v786 = vadd.f32 %v210, %v498
    %v787 = vadd.f32 %v211, %v499
    %v788 = vadd.f32 %v212, %v500
    %v789 = vadd.f32 %v213, %v501
    %v790 = vadd.f32 %v214, %v502
    %v791 = vadd.f32 %v215, %v503
    %v792 = vadd.f32 %v216, %v504
    %v793 = vadd.f32 %v217, %v505
    %v794 = vadd.f32 %v218, %v506
    %v795 = vadd.f32 %v219, %v507
    %v796 = vadd.f32 %v220, %v508
    %v797 = vadd.f32 %v221, %v509
    %v798 = vadd.f32 %v222, %v510
    %v799 = vadd.f32 %v223, %v511
    %v800 = vadd.f32 %v224, %v512
    %v801 = vadd.f32 %v225, %v513
    %v802 = vadd.f32 %v226, %v514
    %v803 = vadd.f32 %v227, %v515
    %v804 = vadd.f32 %v228, %v516
    %v805 = vadd.f32 %v229, %v517
    %v806 = vadd.f32 %v230, %v518
    %v807 = vadd.f32 %v231, %v519
    %v808 = vadd.f32 %v232, %v520
    %v809 = vadd.f32 %v233, %v521
    %v810 = vadd.f32 %v234, %v522
    %v811 = vadd.f32 %v235, %v523
    %v812 = vadd.f32 %v236, %v524
    %v813 = vadd.f32 %v237, %v525
    %v814 = vadd.f32 %v238, %v526
    %v815 = vadd.f32 %v239, %v527
    %v816 = vadd.f32 %v240, %v528
    %v817 = vadd.f32 %v241, %v529
    %v818 = vadd.f32 %v242, %v530
    %v819 = vadd.f32 %v243, %v531
    %v820 = vadd.f32 %v244, %v532
    %v821 = vadd.f32 %v245, %v533
    %v822 = vadd.f32 %v246, %v534
    %v823 = vadd.f32 %v247, %v535
    %v824 = vadd.f32 %v248, %v536
    %v825 = vadd.f32 %v249, %v537
    %v826 = vadd.f32 %v250, %v538
    %v827 = vadd.f32 %v251, %v539
    %v828 = vadd.f32 %v252, %v540
    %v829 = vadd.f32 %v253, %v541
    %v830 = vadd.f32 %v254, %v542
    %v831 = vadd.f32 %v255, %v543
    %v832 = vadd.f32 %v256, %v544
    %v833 = vadd.f32 %v257, %v545
    %v834 = vadd.f32 %v258, %v546
    %v835 = vadd.f32 %v259, %v547
    %v836 = vadd.f32 %v260, %v548
    %v837 = vadd.f32 %v261, %v549
    %v838 = vadd.f32 %v262, %v550
    %v839 = vadd.f32 %v263, %v551
    %v840 = vadd.f32 %v264, %v552
    %v841 = vadd.f32 %v265, %v553
    %v842 = vadd.f32 %v266, %v554
    %v843 = vadd.f32 %v267, %v555
    %v844 = vadd.f32 %v268, %v556
    %v845 = vadd.f32 %v269, %v557
    %v846 = vadd.f32 %v270, %v558
    %v847 = vadd.f32 %v271, %v559
    %v848 = vadd.f32 %v272, %v560
    %v849 = vadd.f32 %v273, %v561
    %v850 = vadd.f32 %v274, %v562
    %v851 = vadd.f32 %v275, %v563
    %v852 = vadd.f32 %v276, %v564
    %v853 = vadd.f32 %v277, %v565
    %v854 = vadd.f32 %v278, %v566
    %v855 = vadd.f32 %v279, %v567
    %v856 = vadd.f32 %v280, %v568
    %v857 = vadd.f32 %v281, %v569
    %v858 = vadd.f32 %v282, %v570
    %v859 = vadd.f32 %v283, %v571
    %v860 = vadd.f32 %v284, %v572
    %v861 = vadd.f32 %v285, %v573
    %v862 = vadd.f32 %v286, %v574
    %v863 = vadd.f32 %v287, %v575
    %v864 = vadd.f32 %v288, %v576
    %v865 = vadd.f32 %v289, %v577
    %v866 = vadd.f32 %v290, %v578
    %v867 = vadd.f32 %v291, %v579
    %v868 = vadd.f32 %v292, %v580
    %v869 = vadd.f32 %v293, %v581
    %v870 = vadd.f32 %v294, %v582
    %v871 = vadd.f32 %v295, %v583
    %v872 = vadd.f32 %v296, %v584
    %v873 = vadd.f32 %v297, %v585
    %v874 = vadd.f32 %v298, %v586
    %v875 = vadd.f32 %v299, %v587
    %v876 = vadd.f32 %v300, %v588
    %v877 = vadd.f32 %v301, %v589
    %v878 = vadd.f32 %v302, %v590
    %v879 = vadd.f32 %v303, %v591
    %v880 = vadd.f32 %v304, %v592
    %v881 = vadd.f32 %v305, %v593
    %v882 = vadd.f32 %v306, %v594
    %v883 = vadd.f32 %v307, %v595
    %v884 = vadd.f32 %v308, %v596
    %v885 = vadd.f32 %v309, %v597
    %v886 = vadd.f32 %v310, %v598
    %v887 = vadd.f32 %v311, %v599
    %v888 = vadd.f32 %v312, %v600
    %v889 = vadd.f32 %v313, %v601
    %v890 = vadd.f32 %v314, %v602
    %v891 = vadd.f32 %v315, %v603
    %v892 = vadd.f32 %v316, %v604
    %v893 = vadd.f32 %v317, %v605
    %v894 = vadd.f32 %v318, %v606
    %v895 = vadd.f32 %v319, %v607
    %v896 = vadd.f32 %v320, %v608
    %v897 = vadd.f32 %v321, %v609
    %v898 = vadd.f32 %v322, %v610
    %v899 = vadd.f32 %v323, %v611
    %v900 = vadd.f32 %v324, %v612
    %v901 = vadd.f32 %v325, %v613
    %v902 = vadd.f32 %v326, %v614
    %v903 = vadd.f32 %v327, %v615
    %v904 = vadd.f32 %v328, %v616
    %v905 = vadd.f32 %v329, %v617
    %v906 = vadd.f32 %v330, %v618
    %v907 = vadd.f32 %v331, %v619
    %v908 = vadd.f32 %v332, %v620
    %v909 = vadd.f32 %v333, %v621
    %v910 = vadd.f32 %v334, %v622
    %v911 = vadd.f32 %v335, %v623
    %v912 = vadd.f32 %v336, %v624
    %v913 = vadd.f32 %v337, %v625
    %v914 = vadd.f32 %v338, %v626
    %v915 = vadd.f32 %v339, %v627
    %v916 = vadd.f32 %v340, %v628
    %v917 = vadd.f32 %v341, %v629
    %v918 = vadd.f32 %v342, %v630
    %v919 = vadd.f32 %v343, %v631
    %v920 = vadd.f32 %v344, %v632
    %v921 = vadd.f32 %v345, %v633
    %v922 = vadd.f32 %v346, %v634
    %v923 = vadd.f32 %v347, %v635
    %v924 = vadd.f32 %v348, %v636
    %v925 = vadd.f32 %v349, %v637
    %v926 = vadd.f32 %v350, %v638
    %v927 = vadd.f32 %v351, %v639
    %v928 = vadd.f32 %v352, %v640
    %v929 = vadd.f32 %v353, %v641
    %v930 = vadd.f32 %v354, %v642
    %v931 = vadd.f32 %v355, %v643
    %v932 = vadd.f32 %v356, %v644
    %v933 = vadd.f32 %v645, %v646
    %v934 = vadd.f32 %v933, %v647
    %v935 = vadd.f32 %v934, %v648
    %v936 = vadd.f32 %v935, %v649
    %v937 = vadd.f32 %v936, %v650
    %938 = vadd.xlane.f32.xlu0 %v937
    %v939 = vpop.xlane.xlu0 %938
    %v940 = vadd.f32 %v651, %v652
    %v941 = vadd.f32 %v940, %v653
    %v942 = vadd.f32 %v941, %v654
    %v943 = vadd.f32 %v942, %v655
    %v944 = vadd.f32 %v943, %v656
    %945 = vadd.xlane.f32.xlu0 %v944
    %v946 = vpop.xlane.xlu0 %945
    %v947 = vadd.f32 %v657, %v658
    %v948 = vadd.f32 %v947, %v659
    %v949 = vadd.f32 %v948, %v660
    %v950 = vadd.f32 %v949, %v661
    %v951 = vadd.f32 %v950, %v662
    %952 = vadd.xlane.f32.xlu0 %v951
    %v953 = vpop.xlane.xlu0 %952
    %v954 = vadd.f32 %v663, %v664
    %v955 = vadd.f32 %v954, %v665
    %v956 = vadd.f32 %v955, %v666
    %v957 = vadd.f32 %v956, %v667
    %v958 = vadd.f32 %v957, %v668
    %959 = vadd.xlane.f32.xlu0 %v958
    %v960 = vpop.xlane.xlu0 %959
    %v961 = vadd.f32 %v669, %v670
    %v962 = vadd.f32 %v961, %v671
    %v963 = vadd.f32 %v962, %v672
    %v964 = vadd.f32 %v963, %v673
    %v965 = vadd.f32 %v964, %v674
    %966 = vadd.xlane.f32.xlu0 %v965
    %v967 = vpop.xlane.xlu0 %966
    %v968 = vadd.f32 %v675, %v676
    %v969 = vadd.f32 %v968, %v677
    %v970 = vadd.f32 %v969, %v678
    %v971 = vadd.f32 %v970, %v679
    %v972 = vadd.f32 %v971, %v680
    %973 = vadd.xlane.f32.xlu0 %v972
    %v974 = vpop.xlane.xlu0 %973
    %v975 = vadd.f32 %v681, %v682
    %v976 = vadd.f32 %v975, %v683
    %v977 = vadd.f32 %v976, %v684
    %v978 = vadd.f32 %v977, %v685
    %v979 = vadd.f32 %v978, %v686
    %980 = vadd.xlane.f32.xlu0 %v979
    %v981 = vpop.xlane.xlu0 %980
    %v982 = vadd.f32 %v687, %v688
    %v983 = vadd.f32 %v982, %v689
    %v984 = vadd.f32 %v983, %v690
    %v985 = vadd.f32 %v984, %v691
    %v986 = vadd.f32 %v985, %v692
    %987 = vadd.xlane.f32.xlu0 %v986
    %v988 = vpop.xlane.xlu0 %987
    %v989 = vadd.f32 %v693, %v694
    %v990 = vadd.f32 %v989, %v695
    %v991 = vadd.f32 %v990, %v696
    %v992 = vadd.f32 %v991, %v697
    %v993 = vadd.f32 %v992, %v698
    %994 = vadd.xlane.f32.xlu0 %v993
    %v995 = vpop.xlane.xlu0 %994
    %v996 = vadd.f32 %v699, %v700
    %v997 = vadd.f32 %v996, %v701
    %v998 = vadd.f32 %v997, %v702
    %v999 = vadd.f32 %v998, %v703
    %v1000 = vadd.f32 %v999, %v704
    %1001 = vadd.xlane.f32.xlu0 %v1000
    %v1002 = vpop.xlane.xlu0 %1001
    %v1003 = vadd.f32 %v705, %v706
    %v1004 = vadd.f32 %v1003, %v707
    %v1005 = vadd.f32 %v1004, %v708
    %v1006 = vadd.f32 %v1005, %v709
    %v1007 = vadd.f32 %v1006, %v710
    %1008 = vadd.xlane.f32.xlu0 %v1007
    %v1009 = vpop.xlane.xlu0 %1008
    %v1010 = vadd.f32 %v711, %v712
    %v1011 = vadd.f32 %v1010, %v713
    %v1012 = vadd.f32 %v1011, %v714
    %v1013 = vadd.f32 %v1012, %v715
    %v1014 = vadd.f32 %v1013, %v716
    %1015 = vadd.xlane.f32.xlu0 %v1014
    %v1016 = vpop.xlane.xlu0 %1015
    %v1017 = vadd.f32 %v717, %v718
    %v1018 = vadd.f32 %v1017, %v719
    %v1019 = vadd.f32 %v1018, %v720
    %v1020 = vadd.f32 %v1019, %v721
    %v1021 = vadd.f32 %v1020, %v722
    %1022 = vadd.xlane.f32.xlu0 %v1021
    %v1023 = vpop.xlane.xlu0 %1022
    %v1024 = vadd.f32 %v723, %v724
    %v1025 = vadd.f32 %v1024, %v725
    %v1026 = vadd.f32 %v1025, %v726
    %v1027 = vadd.f32 %v1026, %v727
    %v1028 = vadd.f32 %v1027, %v728
    %1029 = vadd.xlane.f32.xlu0 %v1028
    %v1030 = vpop.xlane.xlu0 %1029
    %v1031 = vadd.f32 %v729, %v730
    %v1032 = vadd.f32 %v1031, %v731
    %v1033 = vadd.f32 %v1032, %v732
    %v1034 = vadd.f32 %v1033, %v733
    %v1035 = vadd.f32 %v1034, %v734
    %1036 = vadd.xlane.f32.xlu0 %v1035
    %v1037 = vpop.xlane.xlu0 %1036
    %v1038 = vadd.f32 %v735, %v736
    %v1039 = vadd.f32 %v1038, %v737
    %v1040 = vadd.f32 %v1039, %v738
    %v1041 = vadd.f32 %v1040, %v739
    %v1042 = vadd.f32 %v1041, %v740
    %1043 = vadd.xlane.f32.xlu0 %v1042
    %v1044 = vpop.xlane.xlu0 %1043
    %v1045 = vadd.f32 %v741, %v742
    %v1046 = vadd.f32 %v1045, %v743
    %v1047 = vadd.f32 %v1046, %v744
    %v1048 = vadd.f32 %v1047, %v745
    %v1049 = vadd.f32 %v1048, %v746
    %1050 = vadd.xlane.f32.xlu0 %v1049
    %v1051 = vpop.xlane.xlu0 %1050
    %v1052 = vadd.f32 %v747, %v748
    %v1053 = vadd.f32 %v1052, %v749
    %v1054 = vadd.f32 %v1053, %v750
    %v1055 = vadd.f32 %v1054, %v751
    %v1056 = vadd.f32 %v1055, %v752
    %1057 = vadd.xlane.f32.xlu0 %v1056
    %v1058 = vpop.xlane.xlu0 %1057
    %v1059 = vadd.f32 %v753, %v754
    %v1060 = vadd.f32 %v1059, %v755
    %v1061 = vadd.f32 %v1060, %v756
    %v1062 = vadd.f32 %v1061, %v757
    %v1063 = vadd.f32 %v1062, %v758
    %1064 = vadd.xlane.f32.xlu0 %v1063
    %v1065 = vpop.xlane.xlu0 %1064
    %v1066 = vadd.f32 %v759, %v760
    %v1067 = vadd.f32 %v1066, %v761
    %v1068 = vadd.f32 %v1067, %v762
    %v1069 = vadd.f32 %v1068, %v763
    %v1070 = vadd.f32 %v1069, %v764
    %1071 = vadd.xlane.f32.xlu0 %v1070
    %v1072 = vpop.xlane.xlu0 %1071
    %v1073 = vadd.f32 %v765, %v766
    %v1074 = vadd.f32 %v1073, %v767
    %v1075 = vadd.f32 %v1074, %v768
    %v1076 = vadd.f32 %v1075, %v769
    %v1077 = vadd.f32 %v1076, %v770
    %1078 = vadd.xlane.f32.xlu0 %v1077
    %v1079 = vpop.xlane.xlu0 %1078
    %v1080 = vadd.f32 %v771, %v772
    %v1081 = vadd.f32 %v1080, %v773
    %v1082 = vadd.f32 %v1081, %v774
    %v1083 = vadd.f32 %v1082, %v775
    %v1084 = vadd.f32 %v1083, %v776
    %1085 = vadd.xlane.f32.xlu0 %v1084
    %v1086 = vpop.xlane.xlu0 %1085
    %v1087 = vadd.f32 %v777, %v778
    %v1088 = vadd.f32 %v1087, %v779
    %v1089 = vadd.f32 %v1088, %v780
    %v1090 = vadd.f32 %v1089, %v781
    %v1091 = vadd.f32 %v1090, %v782
    %1092 = vadd.xlane.f32.xlu0 %v1091
    %v1093 = vpop.xlane.xlu0 %1092
    %v1094 = vadd.f32 %v783, %v784
    %v1095 = vadd.f32 %v1094, %v785
    %v1096 = vadd.f32 %v1095, %v786
    %v1097 = vadd.f32 %v1096, %v787
    %v1098 = vadd.f32 %v1097, %v788
    %1099 = vadd.xlane.f32.xlu0 %v1098
    %v1100 = vpop.xlane.xlu0 %1099
    %v1101 = vadd.f32 %v789, %v790
    %v1102 = vadd.f32 %v1101, %v791
    %v1103 = vadd.f32 %v1102, %v792
    %v1104 = vadd.f32 %v1103, %v793
    %v1105 = vadd.f32 %v1104, %v794
    %1106 = vadd.xlane.f32.xlu0 %v1105
    %v1107 = vpop.xlane.xlu0 %1106
    %v1108 = vadd.f32 %v795, %v796
    %v1109 = vadd.f32 %v1108, %v797
    %v1110 = vadd.f32 %v1109, %v798
    %v1111 = vadd.f32 %v1110, %v799
    %v1112 = vadd.f32 %v1111, %v800
    %1113 = vadd.xlane.f32.xlu0 %v1112
    %v1114 = vpop.xlane.xlu0 %1113
    %v1115 = vadd.f32 %v801, %v802
    %v1116 = vadd.f32 %v1115, %v803
    %v1117 = vadd.f32 %v1116, %v804
    %v1118 = vadd.f32 %v1117, %v805
    %v1119 = vadd.f32 %v1118, %v806
    %1120 = vadd.xlane.f32.xlu0 %v1119
    %v1121 = vpop.xlane.xlu0 %1120
    %v1122 = vadd.f32 %v807, %v808
    %v1123 = vadd.f32 %v1122, %v809
    %v1124 = vadd.f32 %v1123, %v810
    %v1125 = vadd.f32 %v1124, %v811
    %v1126 = vadd.f32 %v1125, %v812
    %1127 = vadd.xlane.f32.xlu0 %v1126
    %v1128 = vpop.xlane.xlu0 %1127
    %v1129 = vadd.f32 %v813, %v814
    %v1130 = vadd.f32 %v1129, %v815
    %v1131 = vadd.f32 %v1130, %v816
    %v1132 = vadd.f32 %v1131, %v817
    %v1133 = vadd.f32 %v1132, %v818
    %1134 = vadd.xlane.f32.xlu0 %v1133
    %v1135 = vpop.xlane.xlu0 %1134
    %v1136 = vadd.f32 %v819, %v820
    %v1137 = vadd.f32 %v1136, %v821
    %v1138 = vadd.f32 %v1137, %v822
    %v1139 = vadd.f32 %v1138, %v823
    %v1140 = vadd.f32 %v1139, %v824
    %1141 = vadd.xlane.f32.xlu0 %v1140
    %v1142 = vpop.xlane.xlu0 %1141
    %v1143 = vadd.f32 %v825, %v826
    %v1144 = vadd.f32 %v1143, %v827
    %v1145 = vadd.f32 %v1144, %v828
    %v1146 = vadd.f32 %v1145, %v829
    %v1147 = vadd.f32 %v1146, %v830
    %1148 = vadd.xlane.f32.xlu0 %v1147
    %v1149 = vpop.xlane.xlu0 %1148
    %v1150 = vadd.f32 %v831, %v832
    %v1151 = vadd.f32 %v1150, %v833
    %v1152 = vadd.f32 %v1151, %v834
    %v1153 = vadd.f32 %v1152, %v835
    %v1154 = vadd.f32 %v1153, %v836
    %1155 = vadd.xlane.f32.xlu0 %v1154
    %v1156 = vpop.xlane.xlu0 %1155
    %v1157 = vadd.f32 %v837, %v838
    %v1158 = vadd.f32 %v1157, %v839
    %v1159 = vadd.f32 %v1158, %v840
    %v1160 = vadd.f32 %v1159, %v841
    %v1161 = vadd.f32 %v1160, %v842
    %1162 = vadd.xlane.f32.xlu0 %v1161
    %v1163 = vpop.xlane.xlu0 %1162
    %v1164 = vadd.f32 %v843, %v844
    %v1165 = vadd.f32 %v1164, %v845
    %v1166 = vadd.f32 %v1165, %v846
    %v1167 = vadd.f32 %v1166, %v847
    %v1168 = vadd.f32 %v1167, %v848
    %1169 = vadd.xlane.f32.xlu0 %v1168
    %v1170 = vpop.xlane.xlu0 %1169
    %v1171 = vadd.f32 %v849, %v850
    %v1172 = vadd.f32 %v1171, %v851
    %v1173 = vadd.f32 %v1172, %v852
    %v1174 = vadd.f32 %v1173, %v853
    %v1175 = vadd.f32 %v1174, %v854
    %1176 = vadd.xlane.f32.xlu0 %v1175
    %v1177 = vpop.xlane.xlu0 %1176
    %v1178 = vadd.f32 %v855, %v856
    %v1179 = vadd.f32 %v1178, %v857
    %v1180 = vadd.f32 %v1179, %v858
    %v1181 = vadd.f32 %v1180, %v859
    %v1182 = vadd.f32 %v1181, %v860
    %1183 = vadd.xlane.f32.xlu0 %v1182
    %v1184 = vpop.xlane.xlu0 %1183
    %v1185 = vadd.f32 %v861, %v862
    %v1186 = vadd.f32 %v1185, %v863
    %v1187 = vadd.f32 %v1186, %v864
    %v1188 = vadd.f32 %v1187, %v865
    %v1189 = vadd.f32 %v1188, %v866
    %1190 = vadd.xlane.f32.xlu0 %v1189
    %v1191 = vpop.xlane.xlu0 %1190
    %v1192 = vadd.f32 %v867, %v868
    %v1193 = vadd.f32 %v1192, %v869
    %v1194 = vadd.f32 %v1193, %v870
    %v1195 = vadd.f32 %v1194, %v871
    %v1196 = vadd.f32 %v1195, %v872
    %1197 = vadd.xlane.f32.xlu0 %v1196
    %v1198 = vpop.xlane.xlu0 %1197
    %v1199 = vadd.f32 %v873, %v874
    %v1200 = vadd.f32 %v1199, %v875
    %v1201 = vadd.f32 %v1200, %v876
    %v1202 = vadd.f32 %v1201, %v877
    %v1203 = vadd.f32 %v1202, %v878
    %1204 = vadd.xlane.f32.xlu0 %v1203
    %v1205 = vpop.xlane.xlu0 %1204
    %v1206 = vadd.f32 %v879, %v880
    %v1207 = vadd.f32 %v1206, %v881
    %v1208 = vadd.f32 %v1207, %v882
    %v1209 = vadd.f32 %v1208, %v883
    %v1210 = vadd.f32 %v1209, %v884
    %1211 = vadd.xlane.f32.xlu0 %v1210
    %v1212 = vpop.xlane.xlu0 %1211
    %v1213 = vadd.f32 %v885, %v886
    %v1214 = vadd.f32 %v1213, %v887
    %v1215 = vadd.f32 %v1214, %v888
    %v1216 = vadd.f32 %v1215, %v889
    %v1217 = vadd.f32 %v1216, %v890
    %1218 = vadd.xlane.f32.xlu0 %v1217
    %v1219 = vpop.xlane.xlu0 %1218
    %v1220 = vadd.f32 %v891, %v892
    %v1221 = vadd.f32 %v1220, %v893
    %v1222 = vadd.f32 %v1221, %v894
    %v1223 = vadd.f32 %v1222, %v895
    %v1224 = vadd.f32 %v1223, %v896
    %1225 = vadd.xlane.f32.xlu0 %v1224
    %v1226 = vpop.xlane.xlu0 %1225
    %v1227 = vadd.f32 %v897, %v898
    %v1228 = vadd.f32 %v1227, %v899
    %v1229 = vadd.f32 %v1228, %v900
    %v1230 = vadd.f32 %v1229, %v901
    %v1231 = vadd.f32 %v1230, %v902
    %1232 = vadd.xlane.f32.xlu0 %v1231
    %v1233 = vpop.xlane.xlu0 %1232
    %v1234 = vadd.f32 %v903, %v904
    %v1235 = vadd.f32 %v1234, %v905
    %v1236 = vadd.f32 %v1235, %v906
    %v1237 = vadd.f32 %v1236, %v907
    %v1238 = vadd.f32 %v1237, %v908
    %1239 = vadd.xlane.f32.xlu0 %v1238
    %v1240 = vpop.xlane.xlu0 %1239
    %v1241 = vadd.f32 %v909, %v910
    %v1242 = vadd.f32 %v1241, %v911
    %v1243 = vadd.f32 %v1242, %v912
    %v1244 = vadd.f32 %v1243, %v913
    %v1245 = vadd.f32 %v1244, %v914
    %1246 = vadd.xlane.f32.xlu0 %v1245
    %v1247 = vpop.xlane.xlu0 %1246
    %v1248 = vadd.f32 %v915, %v916
    %v1249 = vadd.f32 %v1248, %v917
    %v1250 = vadd.f32 %v1249, %v918
    %v1251 = vadd.f32 %v1250, %v919
    %v1252 = vadd.f32 %v1251, %v920
    %1253 = vadd.xlane.f32.xlu0 %v1252
    %v1254 = vpop.xlane.xlu0 %1253
    %v1255 = vadd.f32 %v921, %v922
    %v1256 = vadd.f32 %v1255, %v923
    %v1257 = vadd.f32 %v1256, %v924
    %v1258 = vadd.f32 %v1257, %v925
    %v1259 = vadd.f32 %v1258, %v926
    %1260 = vadd.xlane.f32.xlu0 %v1259
    %v1261 = vpop.xlane.xlu0 %1260
    %v1262 = vadd.f32 %v927, %v928
    %v1263 = vadd.f32 %v1262, %v929
    %v1264 = vadd.f32 %v1263, %v930
    %v1265 = vadd.f32 %v1264, %v931
    %v1266 = vadd.f32 %v1265, %v932
    %1267 = vadd.xlane.f32.xlu0 %v1266
    %v1268 = vpop.xlane.xlu0 %1267
    %v1269 = vrcp.pop 768.0
    %v1270 = vmul.f32 %v939, %v1269
    %v1271 = vmul.f32 %v946, %v1269
    %v1272 = vmul.f32 %v953, %v1269
    %v1273 = vmul.f32 %v960, %v1269
    %v1274 = vmul.f32 %v967, %v1269
    %v1275 = vmul.f32 %v974, %v1269
    %v1276 = vmul.f32 %v981, %v1269
    %v1277 = vmul.f32 %v988, %v1269
    %v1278 = vmul.f32 %v995, %v1269
    %v1279 = vmul.f32 %v1002, %v1269
    %v1280 = vmul.f32 %v1009, %v1269
    %v1281 = vmul.f32 %v1016, %v1269
    %v1282 = vmul.f32 %v1023, %v1269
    %v1283 = vmul.f32 %v1030, %v1269
    %v1284 = vmul.f32 %v1037, %v1269
    %v1285 = vmul.f32 %v1044, %v1269
    %v1286 = vmul.f32 %v1051, %v1269
    %v1287 = vmul.f32 %v1058, %v1269
    %v1288 = vmul.f32 %v1065, %v1269
    %v1289 = vmul.f32 %v1072, %v1269
    %v1290 = vmul.f32 %v1079, %v1269
    %v1291 = vmul.f32 %v1086, %v1269
    %v1292 = vmul.f32 %v1093, %v1269
    %v1293 = vmul.f32 %v1100, %v1269
    %v1294 = vmul.f32 %v1107, %v1269
    %v1295 = vmul.f32 %v1114, %v1269
    %v1296 = vmul.f32 %v1121, %v1269
    %v1297 = vmul.f32 %v1128, %v1269
    %v1298 = vmul.f32 %v1135, %v1269
    %v1299 = vmul.f32 %v1142, %v1269
    %v1300 = vmul.f32 %v1149, %v1269
    %v1301 = vmul.f32 %v1156, %v1269
    %v1302 = vmul.f32 %v1163, %v1269
    %v1303 = vmul.f32 %v1170, %v1269
    %v1304 = vmul.f32 %v1177, %v1269
    %v1305 = vmul.f32 %v1184, %v1269
    %v1306 = vmul.f32 %v1191, %v1269
    %v1307 = vmul.f32 %v1198, %v1269
    %v1308 = vmul.f32 %v1205, %v1269
    %v1309 = vmul.f32 %v1212, %v1269
    %v1310 = vmul.f32 %v1219, %v1269
    %v1311 = vmul.f32 %v1226, %v1269
    %v1312 = vmul.f32 %v1233, %v1269
    %v1313 = vmul.f32 %v1240, %v1269
    %v1314 = vmul.f32 %v1247, %v1269
    %v1315 = vmul.f32 %v1254, %v1269
    %v1316 = vmul.f32 %v1261, %v1269
    %v1317 = vmul.f32 %v1268, %v1269
    %v1318 = vsub.f32 %v645, %v1270
    %v1319 = vsub.f32 %v646, %v1270
    %v1320 = vsub.f32 %v647, %v1270
    %v1321 = vsub.f32 %v648, %v1270
    %v1322 = vsub.f32 %v649, %v1270
    %v1323 = vsub.f32 %v650, %v1270
    %v1324 = vsub.f32 %v651, %v1271
    %v1325 = vsub.f32 %v652, %v1271
    %v1326 = vsub.f32 %v653, %v1271
    %v1327 = vsub.f32 %v654, %v1271
    %v1328 = vsub.f32 %v655, %v1271
    %v1329 = vsub.f32 %v656, %v1271
    %v1330 = vsub.f32 %v657, %v1272
    %v1331 = vsub.f32 %v658, %v1272
    %v1332 = vsub.f32 %v659, %v1272
    %v1333 = vsub.f32 %v660, %v1272
    %v1334 = vsub.f32 %v661, %v1272
    %v1335 = vsub.f32 %v662, %v1272
    %v1336 = vsub.f32 %v663, %v1273
    %v1337 = vsub.f32 %v664, %v1273
    %v1338 = vsub.f32 %v665, %v1273
    %v1339 = vsub.f32 %v666, %v1273
    %v1340 = vsub.f32 %v667, %v1273
    %v1341 = vsub.f32 %v668, %v1273
    %v1342 = vsub.f32 %v669, %v1274
    %v1343 = vsub.f32 %v670, %v1274
    %v1344 = vsub.f32 %v671, %v1274
    %v1345 = vsub.f32 %v672, %v1274
    %v1346 = vsub.f32 %v673, %v1274
    %v1347 = vsub.f32 %v674, %v1274
    %v1348 = vsub.f32 %v675, %v1275
    %v1349 = vsub.f32 %v676, %v1275
    %v1350 = vsub.f32 %v677, %v1275
    %v1351 = vsub.f32 %v678, %v1275
    %v1352 = vsub.f32 %v679, %v1275
    %v1353 = vsub.f32 %v680, %v1275
    %v1354 = vsub.f32 %v681, %v1276
    %v1355 = vsub.f32 %v682, %v1276
    %v1356 = vsub.f32 %v683, %v1276
    %v1357 = vsub.f32 %v684, %v1276
    %v1358 = vsub.f32 %v685, %v1276
    %v1359 = vsub.f32 %v686, %v1276
    %v1360 = vsub.f32 %v687, %v1277
    %v1361 = vsub.f32 %v688, %v1277
    %v1362 = vsub.f32 %v689, %v1277
    %v1363 = vsub.f32 %v690, %v1277
    %v1364 = vsub.f32 %v691, %v1277
    %v1365 = vsub.f32 %v692, %v1277
    %v1366 = vsub.f32 %v693, %v1278
    %v1367 = vsub.f32 %v694, %v1278
    %v1368 = vsub.f32 %v695, %v1278
    %v1369 = vsub.f32 %v696, %v1278
    %v1370 = vsub.f32 %v697, %v1278
    %v1371 = vsub.f32 %v698, %v1278
    %v1372 = vsub.f32 %v699, %v1279
    %v1373 = vsub.f32 %v700, %v1279
    %v1374 = vsub.f32 %v701, %v1279
    %v1375 = vsub.f32 %v702, %v1279
    %v1376 = vsub.f32 %v703, %v1279
    %v1377 = vsub.f32 %v704, %v1279
    %v1378 = vsub.f32 %v705, %v1280
    %v1379 = vsub.f32 %v706, %v1280
    %v1380 = vsub.f32 %v707, %v1280
    %v1381 = vsub.f32 %v708, %v1280
    %v1382 = vsub.f32 %v709, %v1280
    %v1383 = vsub.f32 %v710, %v1280
    %v1384 = vsub.f32 %v711, %v1281
    %v1385 = vsub.f32 %v712, %v1281
    %v1386 = vsub.f32 %v713, %v1281
    %v1387 = vsub.f32 %v714, %v1281
    %v1388 = vsub.f32 %v715, %v1281
    %v1389 = vsub.f32 %v716, %v1281
    %v1390 = vsub.f32 %v717, %v1282
    %v1391 = vsub.f32 %v718, %v1282
    %v1392 = vsub.f32 %v719, %v1282
    %v1393 = vsub.f32 %v720, %v1282
    %v1394 = vsub.f32 %v721, %v1282
    %v1395 = vsub.f32 %v722, %v1282
    %v1396 = vsub.f32 %v723, %v1283
    %v1397 = vsub.f32 %v724, %v1283
    %v1398 = vsub.f32 %v725, %v1283
    %v1399 = vsub.f32 %v726, %v1283
    %v1400 = vsub.f32 %v727, %v1283
    %v1401 = vsub.f32 %v728, %v1283
    %v1402 = vsub.f32 %v729, %v1284
    %v1403 = vsub.f32 %v730, %v1284
    %v1404 = vsub.f32 %v731, %v1284
    %v1405 = vsub.f32 %v732, %v1284
    %v1406 = vsub.f32 %v733, %v1284
    %v1407 = vsub.f32 %v734, %v1284
    %v1408 = vsub.f32 %v735, %v1285
    %v1409 = vsub.f32 %v736, %v1285
    %v1410 = vsub.f32 %v737, %v1285
    %v1411 = vsub.f32 %v738, %v1285
    %v1412 = vsub.f32 %v739, %v1285
    %v1413 = vsub.f32 %v740, %v1285
    %v1414 = vsub.f32 %v741, %v1286
    %v1415 = vsub.f32 %v742, %v1286
    %v1416 = vsub.f32 %v743, %v1286
    %v1417 = vsub.f32 %v744, %v1286
    %v1418 = vsub.f32 %v745, %v1286
    %v1419 = vsub.f32 %v746, %v1286
    %v1420 = vsub.f32 %v747, %v1287
    %v1421 = vsub.f32 %v748, %v1287
    %v1422 = vsub.f32 %v749, %v1287
    %v1423 = vsub.f32 %v750, %v1287
    %v1424 = vsub.f32 %v751, %v1287
    %v1425 = vsub.f32 %v752, %v1287
    %v1426 = vsub.f32 %v753, %v1288
    %v1427 = vsub.f32 %v754, %v1288
    %v1428 = vsub.f32 %v755, %v1288
    %v1429 = vsub.f32 %v756, %v1288
    %v1430 = vsub.f32 %v757, %v1288
    %v1431 = vsub.f32 %v758, %v1288
    %v1432 = vsub.f32 %v759, %v1289
    %v1433 = vsub.f32 %v760, %v1289
    %v1434 = vsub.f32 %v761, %v1289
    %v1435 = vsub.f32 %v762, %v1289
    %v1436 = vsub.f32 %v763, %v1289
    %v1437 = vsub.f32 %v764, %v1289
    %v1438 = vsub.f32 %v765, %v1290
    %v1439 = vsub.f32 %v766, %v1290
    %v1440 = vsub.f32 %v767, %v1290
    %v1441 = vsub.f32 %v768, %v1290
    %v1442 = vsub.f32 %v769, %v1290
    %v1443 = vsub.f32 %v770, %v1290
    %v1444 = vsub.f32 %v771, %v1291
    %v1445 = vsub.f32 %v772, %v1291
    %v1446 = vsub.f32 %v773, %v1291
    %v1447 = vsub.f32 %v774, %v1291
    %v1448 = vsub.f32 %v775, %v1291
    %v1449 = vsub.f32 %v776, %v1291
    %v1450 = vsub.f32 %v777, %v1292
    %v1451 = vsub.f32 %v778, %v1292
    %v1452 = vsub.f32 %v779, %v1292
    %v1453 = vsub.f32 %v780, %v1292
    %v1454 = vsub.f32 %v781, %v1292
    %v1455 = vsub.f32 %v782, %v1292
    %v1456 = vsub.f32 %v783, %v1293
    %v1457 = vsub.f32 %v784, %v1293
    %v1458 = vsub.f32 %v785, %v1293
    %v1459 = vsub.f32 %v786, %v1293
    %v1460 = vsub.f32 %v787, %v1293
    %v1461 = vsub.f32 %v788, %v1293
    %v1462 = vsub.f32 %v789, %v1294
    %v1463 = vsub.f32 %v790, %v1294
    %v1464 = vsub.f32 %v791, %v1294
    %v1465 = vsub.f32 %v792, %v1294
    %v1466 = vsub.f32 %v793, %v1294
    %v1467 = vsub.f32 %v794, %v1294
    %v1468 = vsub.f32 %v795, %v1295
    %v1469 = vsub.f32 %v796, %v1295
    %v1470 = vsub.f32 %v797, %v1295
    %v1471 = vsub.f32 %v798, %v1295
    %v1472 = vsub.f32 %v799, %v1295
    %v1473 = vsub.f32 %v800, %v1295
    %v1474 = vsub.f32 %v801, %v1296
    %v1475 = vsub.f32 %v802, %v1296
    %v1476 = vsub.f32 %v803, %v1296
    %v1477 = vsub.f32 %v804, %v1296
    %v1478 = vsub.f32 %v805, %v1296
    %v1479 = vsub.f32 %v806, %v1296
    %v1480 = vsub.f32 %v807, %v1297
    %v1481 = vsub.f32 %v808, %v1297
    %v1482 = vsub.f32 %v809, %v1297
    %v1483 = vsub.f32 %v810, %v1297
    %v1484 = vsub.f32 %v811, %v1297
    %v1485 = vsub.f32 %v812, %v1297
    %v1486 = vsub.f32 %v813, %v1298
    %v1487 = vsub.f32 %v814, %v1298
    %v1488 = vsub.f32 %v815, %v1298
    %v1489 = vsub.f32 %v816, %v1298
    %v1490 = vsub.f32 %v817, %v1298
    %v1491 = vsub.f32 %v818, %v1298
    %v1492 = vsub.f32 %v819, %v1299
    %v1493 = vsub.f32 %v820, %v1299
    %v1494 = vsub.f32 %v821, %v1299
    %v1495 = vsub.f32 %v822, %v1299
    %v1496 = vsub.f32 %v823, %v1299
    %v1497 = vsub.f32 %v824, %v1299
    %v1498 = vsub.f32 %v825, %v1300
    %v1499 = vsub.f32 %v826, %v1300
    %v1500 = vsub.f32 %v827, %v1300
    %v1501 = vsub.f32 %v828, %v1300
    %v1502 = vsub.f32 %v829, %v1300
    %v1503 = vsub.f32 %v830, %v1300
    %v1504 = vsub.f32 %v831, %v1301
    %v1505 = vsub.f32 %v832, %v1301
    %v1506 = vsub.f32 %v833, %v1301
    %v1507 = vsub.f32 %v834, %v1301
    %v1508 = vsub.f32 %v835, %v1301
    %v1509 = vsub.f32 %v836, %v1301
    %v1510 = vsub.f32 %v837, %v1302
    %v1511 = vsub.f32 %v838, %v1302
    %v1512 = vsub.f32 %v839, %v1302
    %v1513 = vsub.f32 %v840, %v1302
    %v1514 = vsub.f32 %v841, %v1302
    %v1515 = vsub.f32 %v842, %v1302
    %v1516 = vsub.f32 %v843, %v1303
    %v1517 = vsub.f32 %v844, %v1303
    %v1518 = vsub.f32 %v845, %v1303
    %v1519 = vsub.f32 %v846, %v1303
    %v1520 = vsub.f32 %v847, %v1303
    %v1521 = vsub.f32 %v848, %v1303
    %v1522 = vsub.f32 %v849, %v1304
    %v1523 = vsub.f32 %v850, %v1304
    %v1524 = vsub.f32 %v851, %v1304
    %v1525 = vsub.f32 %v852, %v1304
    %v1526 = vsub.f32 %v853, %v1304
    %v1527 = vsub.f32 %v854, %v1304
    %v1528 = vsub.f32 %v855, %v1305
    %v1529 = vsub.f32 %v856, %v1305
    %v1530 = vsub.f32 %v857, %v1305
    %v1531 = vsub.f32 %v858, %v1305
    %v1532 = vsub.f32 %v859, %v1305
    %v1533 = vsub.f32 %v860, %v1305
    %v1534 = vsub.f32 %v861, %v1306
    %v1535 = vsub.f32 %v862, %v1306
    %v1536 = vsub.f32 %v863, %v1306
    %v1537 = vsub.f32 %v864, %v1306
    %v1538 = vsub.f32 %v865, %v1306
    %v1539 = vsub.f32 %v866, %v1306
    %v1540 = vsub.f32 %v867, %v1307
    %v1541 = vsub.f32 %v868, %v1307
    %v1542 = vsub.f32 %v869, %v1307
    %v1543 = vsub.f32 %v870, %v1307
    %v1544 = vsub.f32 %v871, %v1307
    %v1545 = vsub.f32 %v872, %v1307
    %v1546 = vsub.f32 %v873, %v1308
    %v1547 = vsub.f32 %v874, %v1308
    %v1548 = vsub.f32 %v875, %v1308
    %v1549 = vsub.f32 %v876, %v1308
    %v1550 = vsub.f32 %v877, %v1308
    %v1551 = vsub.f32 %v878, %v1308
    %v1552 = vsub.f32 %v879, %v1309
    %v1553 = vsub.f32 %v880, %v1309
    %v1554 = vsub.f32 %v881, %v1309
    %v1555 = vsub.f32 %v882, %v1309
    %v1556 = vsub.f32 %v883, %v1309
    %v1557 = vsub.f32 %v884, %v1309
    %v1558 = vsub.f32 %v885, %v1310
    %v1559 = vsub.f32 %v886, %v1310
    %v1560 = vsub.f32 %v887, %v1310
    %v1561 = vsub.f32 %v888, %v1310
    %v1562 = vsub.f32 %v889, %v1310
    %v1563 = vsub.f32 %v890, %v1310
    %v1564 = vsub.f32 %v891, %v1311
    %v1565 = vsub.f32 %v892, %v1311
    %v1566 = vsub.f32 %v893, %v1311
    %v1567 = vsub.f32 %v894, %v1311
    %v1568 = vsub.f32 %v895, %v1311
    %v1569 = vsub.f32 %v896, %v1311
    %v1570 = vsub.f32 %v897, %v1312
    %v1571 = vsub.f32 %v898, %v1312
    %v1572 = vsub.f32 %v899, %v1312
    %v1573 = vsub.f32 %v900, %v1312
    %v1574 = vsub.f32 %v901, %v1312
    %v1575 = vsub.f32 %v902, %v1312
    %v1576 = vsub.f32 %v903, %v1313
    %v1577 = vsub.f32 %v904, %v1313
    %v1578 = vsub.f32 %v905, %v1313
    %v1579 = vsub.f32 %v906, %v1313
    %v1580 = vsub.f32 %v907, %v1313
    %v1581 = vsub.f32 %v908, %v1313
    %v1582 = vsub.f32 %v909, %v1314
    %v1583 = vsub.f32 %v910, %v1314
    %v1584 = vsub.f32 %v911, %v1314
    %v1585 = vsub.f32 %v912, %v1314
    %v1586 = vsub.f32 %v913, %v1314
    %v1587 = vsub.f32 %v914, %v1314
    %v1588 = vsub.f32 %v915, %v1315
    %v1589 = vsub.f32 %v916, %v1315
    %v1590 = vsub.f32 %v917, %v1315
    %v1591 = vsub.f32 %v918, %v1315
    %v1592 = vsub.f32 %v919, %v1315
    %v1593 = vsub.f32 %v920, %v1315
    %v1594 = vsub.f32 %v921, %v1316
    %v1595 = vsub.f32 %v922, %v1316
    %v1596 = vsub.f32 %v923, %v1316
    %v1597 = vsub.f32 %v924, %v1316
    %v1598 = vsub.f32 %v925, %v1316
    %v1599 = vsub.f32 %v926, %v1316
    %v1600 = vsub.f32 %v927, %v1317
    %v1601 = vsub.f32 %v928, %v1317
    %v1602 = vsub.f32 %v929, %v1317
    %v1603 = vsub.f32 %v930, %v1317
    %v1604 = vsub.f32 %v931, %v1317
    %v1605 = vsub.f32 %v932, %v1317
    %v1606 = vmul.f32 %v1318, %v1318
    %v1607 = vmul.f32 %v1319, %v1319
    %v1608 = vmul.f32 %v1320, %v1320
    %v1609 = vmul.f32 %v1321, %v1321
    %v1610 = vmul.f32 %v1322, %v1322
    %v1611 = vmul.f32 %v1323, %v1323
    %v1612 = vmul.f32 %v1324, %v1324
    %v1613 = vmul.f32 %v1325, %v1325
    %v1614 = vmul.f32 %v1326, %v1326
    %v1615 = vmul.f32 %v1327, %v1327
    %v1616 = vmul.f32 %v1328, %v1328
    %v1617 = vmul.f32 %v1329, %v1329
    %v1618 = vmul.f32 %v1330, %v1330
    %v1619 = vmul.f32 %v1331, %v1331
    %v1620 = vmul.f32 %v1332, %v1332
    %v1621 = vmul.f32 %v1333, %v1333
    %v1622 = vmul.f32 %v1334, %v1334
    %v1623 = vmul.f32 %v1335, %v1335
    %v1624 = vmul.f32 %v1336, %v1336
    %v1625 = vmul.f32 %v1337, %v1337
    %v1626 = vmul.f32 %v1338, %v1338
    %v1627 = vmul.f32 %v1339, %v1339
    %v1628 = vmul.f32 %v1340, %v1340
    %v1629 = vmul.f32 %v1341, %v1341
    %v1630 = vmul.f32 %v1342, %v1342
    %v1631 = vmul.f32 %v1343, %v1343
    %v1632 = vmul.f32 %v1344, %v1344
    %v1633 = vmul.f32 %v1345, %v1345
    %v1634 = vmul.f32 %v1346, %v1346
    %v1635 = vmul.f32 %v1347, %v1347
    %v1636 = vmul.f32 %v1348, %v1348
    %v1637 = vmul.f32 %v1349, %v1349
    %v1638 = vmul.f32 %v1350, %v1350
    %v1639 = vmul.f32 %v1351, %v1351
    %v1640 = vmul.f32 %v1352, %v1352
    %v1641 = vmul.f32 %v1353, %v1353
    %v1642 = vmul.f32 %v1354, %v1354
    %v1643 = vmul.f32 %v1355, %v1355
    %v1644 = vmul.f32 %v1356, %v1356
    %v1645 = vmul.f32 %v1357, %v1357
    %v1646 = vmul.f32 %v1358, %v1358
    %v1647 = vmul.f32 %v1359, %v1359
    %v1648 = vmul.f32 %v1360, %v1360
    %v1649 = vmul.f32 %v1361, %v1361
    %v1650 = vmul.f32 %v1362, %v1362
    %v1651 = vmul.f32 %v1363, %v1363
    %v1652 = vmul.f32 %v1364, %v1364
    %v1653 = vmul.f32 %v1365, %v1365
    %v1654 = vmul.f32 %v1366, %v1366
    %v1655 = vmul.f32 %v1367, %v1367
    %v1656 = vmul.f32 %v1368, %v1368
    %v1657 = vmul.f32 %v1369, %v1369
    %v1658 = vmul.f32 %v1370, %v1370
    %v1659 = vmul.f32 %v1371, %v1371
    %v1660 = vmul.f32 %v1372, %v1372
    %v1661 = vmul.f32 %v1373, %v1373
    %v1662 = vmul.f32 %v1374, %v1374
    %v1663 = vmul.f32 %v1375, %v1375
    %v1664 = vmul.f32 %v1376, %v1376
    %v1665 = vmul.f32 %v1377, %v1377
    %v1666 = vmul.f32 %v1378, %v1378
    %v1667 = vmul.f32 %v1379, %v1379
    %v1668 = vmul.f32 %v1380, %v1380
    %v1669 = vmul.f32 %v1381, %v1381
    %v1670 = vmul.f32 %v1382, %v1382
    %v1671 = vmul.f32 %v1383, %v1383
    %v1672 = vmul.f32 %v1384, %v1384
    %v1673 = vmul.f32 %v1385, %v1385
    %v1674 = vmul.f32 %v1386, %v1386
    %v1675 = vmul.f32 %v1387, %v1387
    %v1676 = vmul.f32 %v1388, %v1388
    %v1677 = vmul.f32 %v1389, %v1389
    %v1678 = vmul.f32 %v1390, %v1390
    %v1679 = vmul.f32 %v1391, %v1391
    %v1680 = vmul.f32 %v1392, %v1392
    %v1681 = vmul.f32 %v1393, %v1393
    %v1682 = vmul.f32 %v1394, %v1394
    %v1683 = vmul.f32 %v1395, %v1395
    %v1684 = vmul.f32 %v1396, %v1396
    %v1685 = vmul.f32 %v1397, %v1397
    %v1686 = vmul.f32 %v1398, %v1398
    %v1687 = vmul.f32 %v1399, %v1399
    %v1688 = vmul.f32 %v1400, %v1400
    %v1689 = vmul.f32 %v1401, %v1401
    %v1690 = vmul.f32 %v1402, %v1402
    %v1691 = vmul.f32 %v1403, %v1403
    %v1692 = vmul.f32 %v1404, %v1404
    %v1693 = vmul.f32 %v1405, %v1405
    %v1694 = vmul.f32 %v1406, %v1406
    %v1695 = vmul.f32 %v1407, %v1407
    %v1696 = vmul.f32 %v1408, %v1408
    %v1697 = vmul.f32 %v1409, %v1409
    %v1698 = vmul.f32 %v1410, %v1410
    %v1699 = vmul.f32 %v1411, %v1411
    %v1700 = vmul.f32 %v1412, %v1412
    %v1701 = vmul.f32 %v1413, %v1413
    %v1702 = vmul.f32 %v1414, %v1414
    %v1703 = vmul.f32 %v1415, %v1415
    %v1704 = vmul.f32 %v1416, %v1416
    %v1705 = vmul.f32 %v1417, %v1417
    %v1706 = vmul.f32 %v1418, %v1418
    %v1707 = vmul.f32 %v1419, %v1419
    %v1708 = vmul.f32 %v1420, %v1420
    %v1709 = vmul.f32 %v1421, %v1421
    %v1710 = vmul.f32 %v1422, %v1422
    %v1711 = vmul.f32 %v1423, %v1423
    %v1712 = vmul.f32 %v1424, %v1424
    %v1713 = vmul.f32 %v1425, %v1425
    %v1714 = vmul.f32 %v1426, %v1426
    %v1715 = vmul.f32 %v1427, %v1427
    %v1716 = vmul.f32 %v1428, %v1428
    %v1717 = vmul.f32 %v1429, %v1429
    %v1718 = vmul.f32 %v1430, %v1430
    %v1719 = vmul.f32 %v1431, %v1431
    %v1720 = vmul.f32 %v1432, %v1432
    %v1721 = vmul.f32 %v1433, %v1433
    %v1722 = vmul.f32 %v1434, %v1434
    %v1723 = vmul.f32 %v1435, %v1435
    %v1724 = vmul.f32 %v1436, %v1436
    %v1725 = vmul.f32 %v1437, %v1437
    %v1726 = vmul.f32 %v1438, %v1438
    %v1727 = vmul.f32 %v1439, %v1439
    %v1728 = vmul.f32 %v1440, %v1440
    %v1729 = vmul.f32 %v1441, %v1441
    %v1730 = vmul.f32 %v1442, %v1442
    %v1731 = vmul.f32 %v1443, %v1443
    %v1732 = vmul.f32 %v1444, %v1444
    %v1733 = vmul.f32 %v1445, %v1445
    %v1734 = vmul.f32 %v1446, %v1446
    %v1735 = vmul.f32 %v1447, %v1447
    %v1736 = vmul.f32 %v1448, %v1448
    %v1737 = vmul.f32 %v1449, %v1449
    %v1738 = vmul.f32 %v1450, %v1450
    %v1739 = vmul.f32 %v1451, %v1451
    %v1740 = vmul.f32 %v1452, %v1452
    %v1741 = vmul.f32 %v1453, %v1453
    %v1742 = vmul.f32 %v1454, %v1454
    %v1743 = vmul.f32 %v1455, %v1455
    %v1744 = vmul.f32 %v1456, %v1456
    %v1745 = vmul.f32 %v1457, %v1457
    %v1746 = vmul.f32 %v1458, %v1458
    %v1747 = vmul.f32 %v1459, %v1459
    %v1748 = vmul.f32 %v1460, %v1460
    %v1749 = vmul.f32 %v1461, %v1461
    %v1750 = vmul.f32 %v1462, %v1462
    %v1751 = vmul.f32 %v1463, %v1463
    %v1752 = vmul.f32 %v1464, %v1464
    %v1753 = vmul.f32 %v1465, %v1465
    %v1754 = vmul.f32 %v1466, %v1466
    %v1755 = vmul.f32 %v1467, %v1467
    %v1756 = vmul.f32 %v1468, %v1468
    %v1757 = vmul.f32 %v1469, %v1469
    %v1758 = vmul.f32 %v1470, %v1470
    %v1759 = vmul.f32 %v1471, %v1471
    %v1760 = vmul.f32 %v1472, %v1472
    %v1761 = vmul.f32 %v1473, %v1473
    %v1762 = vmul.f32 %v1474, %v1474
    %v1763 = vmul.f32 %v1475, %v1475
    %v1764 = vmul.f32 %v1476, %v1476
    %v1765 = vmul.f32 %v1477, %v1477
    %v1766 = vmul.f32 %v1478, %v1478
    %v1767 = vmul.f32 %v1479, %v1479
    %v1768 = vmul.f32 %v1480, %v1480
    %v1769 = vmul.f32 %v1481, %v1481
    %v1770 = vmul.f32 %v1482, %v1482
    %v1771 = vmul.f32 %v1483, %v1483
    %v1772 = vmul.f32 %v1484, %v1484
    %v1773 = vmul.f32 %v1485, %v1485
    %v1774 = vmul.f32 %v1486, %v1486
    %v1775 = vmul.f32 %v1487, %v1487
    %v1776 = vmul.f32 %v1488, %v1488
    %v1777 = vmul.f32 %v1489, %v1489
    %v1778 = vmul.f32 %v1490, %v1490
    %v1779 = vmul.f32 %v1491, %v1491
    %v1780 = vmul.f32 %v1492, %v1492
    %v1781 = vmul.f32 %v1493, %v1493
    %v1782 = vmul.f32 %v1494, %v1494
    %v1783 = vmul.f32 %v1495, %v1495
    %v1784 = vmul.f32 %v1496, %v1496
    %v1785 = vmul.f32 %v1497, %v1497
    %v1786 = vmul.f32 %v1498, %v1498
    %v1787 = vmul.f32 %v1499, %v1499
    %v1788 = vmul.f32 %v1500, %v1500
    %v1789 = vmul.f32 %v1501, %v1501
    %v1790 = vmul.f32 %v1502, %v1502
    %v1791 = vmul.f32 %v1503, %v1503
    %v1792 = vmul.f32 %v1504, %v1504
    %v1793 = vmul.f32 %v1505, %v1505
    %v1794 = vmul.f32 %v1506, %v1506
    %v1795 = vmul.f32 %v1507, %v1507
    %v1796 = vmul.f32 %v1508, %v1508
    %v1797 = vmul.f32 %v1509, %v1509
    %v1798 = vmul.f32 %v1510, %v1510
    %v1799 = vmul.f32 %v1511, %v1511
    %v1800 = vmul.f32 %v1512, %v1512
    %v1801 = vmul.f32 %v1513, %v1513
    %v1802 = vmul.f32 %v1514, %v1514
    %v1803 = vmul.f32 %v1515, %v1515
    %v1804 = vmul.f32 %v1516, %v1516
    %v1805 = vmul.f32 %v1517, %v1517
    %v1806 = vmul.f32 %v1518, %v1518
    %v1807 = vmul.f32 %v1519, %v1519
    %v1808 = vmul.f32 %v1520, %v1520
    %v1809 = vmul.f32 %v1521, %v1521
    %v1810 = vmul.f32 %v1522, %v1522
    %v1811 = vmul.f32 %v1523, %v1523
    %v1812 = vmul.f32 %v1524, %v1524
    %v1813 = vmul.f32 %v1525, %v1525
    %v1814 = vmul.f32 %v1526, %v1526
    %v1815 = vmul.f32 %v1527, %v1527
    %v1816 = vmul.f32 %v1528, %v1528
    %v1817 = vmul.f32 %v1529, %v1529
    %v1818 = vmul.f32 %v1530, %v1530
    %v1819 = vmul.f32 %v1531, %v1531
    %v1820 = vmul.f32 %v1532, %v1532
    %v1821 = vmul.f32 %v1533, %v1533
    %v1822 = vmul.f32 %v1534, %v1534
    %v1823 = vmul.f32 %v1535, %v1535
    %v1824 = vmul.f32 %v1536, %v1536
    %v1825 = vmul.f32 %v1537, %v1537
    %v1826 = vmul.f32 %v1538, %v1538
    %v1827 = vmul.f32 %v1539, %v1539
    %v1828 = vmul.f32 %v1540, %v1540
    %v1829 = vmul.f32 %v1541, %v1541
    %v1830 = vmul.f32 %v1542, %v1542
    %v1831 = vmul.f32 %v1543, %v1543
    %v1832 = vmul.f32 %v1544, %v1544
    %v1833 = vmul.f32 %v1545, %v1545
    %v1834 = vmul.f32 %v1546, %v1546
    %v1835 = vmul.f32 %v1547, %v1547
    %v1836 = vmul.f32 %v1548, %v1548
    %v1837 = vmul.f32 %v1549, %v1549
    %v1838 = vmul.f32 %v1550, %v1550
    %v1839 = vmul.f32 %v1551, %v1551
    %v1840 = vmul.f32 %v1552, %v1552
    %v1841 = vmul.f32 %v1553, %v1553
    %v1842 = vmul.f32 %v1554, %v1554
    %v1843 = vmul.f32 %v1555, %v1555
    %v1844 = vmul.f32 %v1556, %v1556
    %v1845 = vmul.f32 %v1557, %v1557
    %v1846 = vmul.f32 %v1558, %v1558
    %v1847 = vmul.f32 %v1559, %v1559
    %v1848 = vmul.f32 %v1560, %v1560
    %v1849 = vmul.f32 %v1561, %v1561
    %v1850 = vmul.f32 %v1562, %v1562
    %v1851 = vmul.f32 %v1563, %v1563
    %v1852 = vmul.f32 %v1564, %v1564
    %v1853 = vmul.f32 %v1565, %v1565
    %v1854 = vmul.f32 %v1566, %v1566
    %v1855 = vmul.f32 %v1567, %v1567
    %v1856 = vmul.f32 %v1568, %v1568
    %v1857 = vmul.f32 %v1569, %v1569
    %v1858 = vmul.f32 %v1570, %v1570
    %v1859 = vmul.f32 %v1571, %v1571
    %v1860 = vmul.f32 %v1572, %v1572
    %v1861 = vmul.f32 %v1573, %v1573
    %v1862 = vmul.f32 %v1574, %v1574
    %v1863 = vmul.f32 %v1575, %v1575
    %v1864 = vmul.f32 %v1576, %v1576
    %v1865 = vmul.f32 %v1577, %v1577
    %v1866 = vmul.f32 %v1578, %v1578
    %v1867 = vmul.f32 %v1579, %v1579
    %v1868 = vmul.f32 %v1580, %v1580
    %v1869 = vmul.f32 %v1581, %v1581
    %v1870 = vmul.f32 %v1582, %v1582
    %v1871 = vmul.f32 %v1583, %v1583
    %v1872 = vmul.f32 %v1584, %v1584
    %v1873 = vmul.f32 %v1585, %v1585
    %v1874 = vmul.f32 %v1586, %v1586
    %v1875 = vmul.f32 %v1587, %v1587
    %v1876 = vmul.f32 %v1588, %v1588
    %v1877 = vmul.f32 %v1589, %v1589
    %v1878 = vmul.f32 %v1590, %v1590
    %v1879 = vmul.f32 %v1591, %v1591
    %v1880 = vmul.f32 %v1592, %v1592
    %v1881 = vmul.f32 %v1593, %v1593
    %v1882 = vmul.f32 %v1594, %v1594
    %v1883 = vmul.f32 %v1595, %v1595
    %v1884 = vmul.f32 %v1596, %v1596
    %v1885 = vmul.f32 %v1597, %v1597
    %v1886 = vmul.f32 %v1598, %v1598
    %v1887 = vmul.f32 %v1599, %v1599
    %v1888 = vmul.f32 %v1600, %v1600
    %v1889 = vmul.f32 %v1601, %v1601
    %v1890 = vmul.f32 %v1602, %v1602
    %v1891 = vmul.f32 %v1603, %v1603
    %v1892 = vmul.f32 %v1604, %v1604
    %v1893 = vmul.f32 %v1605, %v1605
    %v1894 = vadd.f32 %v1606, %v1607
    %v1895 = vadd.f32 %v1894, %v1608
    %v1896 = vadd.f32 %v1895, %v1609
    %v1897 = vadd.f32 %v1896, %v1610
    %v1898 = vadd.f32 %v1897, %v1611
    %1899 = vadd.xlane.f32.xlu0 %v1898
    %v1900 = vpop.xlane.xlu0 %1899
    %v1901 = vadd.f32 %v1612, %v1613
    %v1902 = vadd.f32 %v1901, %v1614
    %v1903 = vadd.f32 %v1902, %v1615
    %v1904 = vadd.f32 %v1903, %v1616
    %v1905 = vadd.f32 %v1904, %v1617
    %1906 = vadd.xlane.f32.xlu0 %v1905
    %v1907 = vpop.xlane.xlu0 %1906
    %v1908 = vadd.f32 %v1618, %v1619
    %v1909 = vadd.f32 %v1908, %v1620
    %v1910 = vadd.f32 %v1909, %v1621
    %v1911 = vadd.f32 %v1910, %v1622
    %v1912 = vadd.f32 %v1911, %v1623
    %1913 = vadd.xlane.f32.xlu0 %v1912
    %v1914 = vpop.xlane.xlu0 %1913
    %v1915 = vadd.f32 %v1624, %v1625
    %v1916 = vadd.f32 %v1915, %v1626
    %v1917 = vadd.f32 %v1916, %v1627
    %v1918 = vadd.f32 %v1917, %v1628
    %v1919 = vadd.f32 %v1918, %v1629
    %1920 = vadd.xlane.f32.xlu0 %v1919
    %v1921 = vpop.xlane.xlu0 %1920
    %v1922 = vadd.f32 %v1630, %v1631
    %v1923 = vadd.f32 %v1922, %v1632
    %v1924 = vadd.f32 %v1923, %v1633
    %v1925 = vadd.f32 %v1924, %v1634
    %v1926 = vadd.f32 %v1925, %v1635
    %1927 = vadd.xlane.f32.xlu0 %v1926
    %v1928 = vpop.xlane.xlu0 %1927
    %v1929 = vadd.f32 %v1636, %v1637
    %v1930 = vadd.f32 %v1929, %v1638
    %v1931 = vadd.f32 %v1930, %v1639
    %v1932 = vadd.f32 %v1931, %v1640
    %v1933 = vadd.f32 %v1932, %v1641
    %1934 = vadd.xlane.f32.xlu0 %v1933
    %v1935 = vpop.xlane.xlu0 %1934
    %v1936 = vadd.f32 %v1642, %v1643
    %v1937 = vadd.f32 %v1936, %v1644
    %v1938 = vadd.f32 %v1937, %v1645
    %v1939 = vadd.f32 %v1938, %v1646
    %v1940 = vadd.f32 %v1939, %v1647
    %1941 = vadd.xlane.f32.xlu0 %v1940
    %v1942 = vpop.xlane.xlu0 %1941
    %v1943 = vadd.f32 %v1648, %v1649
    %v1944 = vadd.f32 %v1943, %v1650
    %v1945 = vadd.f32 %v1944, %v1651
    %v1946 = vadd.f32 %v1945, %v1652
    %v1947 = vadd.f32 %v1946, %v1653
    %1948 = vadd.xlane.f32.xlu0 %v1947
    %v1949 = vpop.xlane.xlu0 %1948
    %v1950 = vadd.f32 %v1654, %v1655
    %v1951 = vadd.f32 %v1950, %v1656
    %v1952 = vadd.f32 %v1951, %v1657
    %v1953 = vadd.f32 %v1952, %v1658
    %v1954 = vadd.f32 %v1953, %v1659
    %1955 = vadd.xlane.f32.xlu0 %v1954
    %v1956 = vpop.xlane.xlu0 %1955
    %v1957 = vadd.f32 %v1660, %v1661
    %v1958 = vadd.f32 %v1957, %v1662
    %v1959 = vadd.f32 %v1958, %v1663
    %v1960 = vadd.f32 %v1959, %v1664
    %v1961 = vadd.f32 %v1960, %v1665
    %1962 = vadd.xlane.f32.xlu0 %v1961
    %v1963 = vpop.xlane.xlu0 %1962
    %v1964 = vadd.f32 %v1666, %v1667
    %v1965 = vadd.f32 %v1964, %v1668
    %v1966 = vadd.f32 %v1965, %v1669
    %v1967 = vadd.f32 %v1966, %v1670
    %v1968 = vadd.f32 %v1967, %v1671
    %1969 = vadd.xlane.f32.xlu0 %v1968
    %v1970 = vpop.xlane.xlu0 %1969
    %v1971 = vadd.f32 %v1672, %v1673
    %v1972 = vadd.f32 %v1971, %v1674
    %v1973 = vadd.f32 %v1972, %v1675
    %v1974 = vadd.f32 %v1973, %v1676
    %v1975 = vadd.f32 %v1974, %v1677
    %1976 = vadd.xlane.f32.xlu0 %v1975
    %v1977 = vpop.xlane.xlu0 %1976
    %v1978 = vadd.f32 %v1678, %v1679
    %v1979 = vadd.f32 %v1978, %v1680
    %v1980 = vadd.f32 %v1979, %v1681
    %v1981 = vadd.f32 %v1980, %v1682
    %v1982 = vadd.f32 %v1981, %v1683
    %1983 = vadd.xlane.f32.xlu0 %v1982
    %v1984 = vpop.xlane.xlu0 %1983
    %v1985 = vadd.f32 %v1684, %v1685
    %v1986 = vadd.f32 %v1985, %v1686
    %v1987 = vadd.f32 %v1986, %v1687
    %v1988 = vadd.f32 %v1987, %v1688
    %v1989 = vadd.f32 %v1988, %v1689
    %1990 = vadd.xlane.f32.xlu0 %v1989
    %v1991 = vpop.xlane.xlu0 %1990
    %v1992 = vadd.f32 %v1690, %v1691
    %v1993 = vadd.f32 %v1992, %v1692
    %v1994 = vadd.f32 %v1993, %v1693
    %v1995 = vadd.f32 %v1994, %v1694
    %v1996 = vadd.f32 %v1995, %v1695
    %1997 = vadd.xlane.f32.xlu0 %v1996
    %v1998 = vpop.xlane.xlu0 %1997
    %v1999 = vadd.f32 %v1696, %v1697
    %v2000 = vadd.f32 %v1999, %v1698
    %v2001 = vadd.f32 %v2000, %v1699
    %v2002 = vadd.f32 %v2001, %v1700
    %v2003 = vadd.f32 %v2002, %v1701
    %2004 = vadd.xlane.f32.xlu0 %v2003
    %v2005 = vpop.xlane.xlu0 %2004
    %v2006 = vadd.f32 %v1702, %v1703
    %v2007 = vadd.f32 %v2006, %v1704
    %v2008 = vadd.f32 %v2007, %v1705
    %v2009 = vadd.f32 %v2008, %v1706
    %v2010 = vadd.f32 %v2009, %v1707
    %2011 = vadd.xlane.f32.xlu0 %v2010
    %v2012 = vpop.xlane.xlu0 %2011
    %v2013 = vadd.f32 %v1708, %v1709
    %v2014 = vadd.f32 %v2013, %v1710
    %v2015 = vadd.f32 %v2014, %v1711
    %v2016 = vadd.f32 %v2015, %v1712
    %v2017 = vadd.f32 %v2016, %v1713
    %2018 = vadd.xlane.f32.xlu0 %v2017
    %v2019 = vpop.xlane.xlu0 %2018
    %v2020 = vadd.f32 %v1714, %v1715
    %v2021 = vadd.f32 %v2020, %v1716
    %v2022 = vadd.f32 %v2021, %v1717
    %v2023 = vadd.f32 %v2022, %v1718
    %v2024 = vadd.f32 %v2023, %v1719
    %2025 = vadd.xlane.f32.xlu0 %v2024
    %v2026 = vpop.xlane.xlu0 %2025
    %v2027 = vadd.f32 %v1720, %v1721
    %v2028 = vadd.f32 %v2027, %v1722
    %v2029 = vadd.f32 %v2028, %v1723
    %v2030 = vadd.f32 %v2029, %v1724
    %v2031 = vadd.f32 %v2030, %v1725
    %2032 = vadd.xlane.f32.xlu0 %v2031
    %v2033 = vpop.xlane.xlu0 %2032
    %v2034 = vadd.f32 %v1726, %v1727
    %v2035 = vadd.f32 %v2034, %v1728
    %v2036 = vadd.f32 %v2035, %v1729
    %v2037 = vadd.f32 %v2036, %v1730
    %v2038 = vadd.f32 %v2037, %v1731
    %2039 = vadd.xlane.f32.xlu0 %v2038
    %v2040 = vpop.xlane.xlu0 %2039
    %v2041 = vadd.f32 %v1732, %v1733
    %v2042 = vadd.f32 %v2041, %v1734
    %v2043 = vadd.f32 %v2042, %v1735
    %v2044 = vadd.f32 %v2043, %v1736
    %v2045 = vadd.f32 %v2044, %v1737
    %2046 = vadd.xlane.f32.xlu0 %v2045
    %v2047 = vpop.xlane.xlu0 %2046
    %v2048 = vadd.f32 %v1738, %v1739
    %v2049 = vadd.f32 %v2048, %v1740
    %v2050 = vadd.f32 %v2049, %v1741
    %v2051 = vadd.f32 %v2050, %v1742
    %v2052 = vadd.f32 %v2051, %v1743
    %2053 = vadd.xlane.f32.xlu0 %v2052
    %v2054 = vpop.xlane.xlu0 %2053
    %v2055 = vadd.f32 %v1744, %v1745
    %v2056 = vadd.f32 %v2055, %v1746
    %v2057 = vadd.f32 %v2056, %v1747
    %v2058 = vadd.f32 %v2057, %v1748
    %v2059 = vadd.f32 %v2058, %v1749
    %2060 = vadd.xlane.f32.xlu0 %v2059
    %v2061 = vpop.xlane.xlu0 %2060
    %v2062 = vadd.f32 %v1750, %v1751
    %v2063 = vadd.f32 %v2062, %v1752
    %v2064 = vadd.f32 %v2063, %v1753
    %v2065 = vadd.f32 %v2064, %v1754
    %v2066 = vadd.f32 %v2065, %v1755
    %2067 = vadd.xlane.f32.xlu0 %v2066
    %v2068 = vpop.xlane.xlu0 %2067
    %v2069 = vadd.f32 %v1756, %v1757
    %v2070 = vadd.f32 %v2069, %v1758
    %v2071 = vadd.f32 %v2070, %v1759
    %v2072 = vadd.f32 %v2071, %v1760
    %v2073 = vadd.f32 %v2072, %v1761
    %2074 = vadd.xlane.f32.xlu0 %v2073
    %v2075 = vpop.xlane.xlu0 %2074
    %v2076 = vadd.f32 %v1762, %v1763
    %v2077 = vadd.f32 %v2076, %v1764
    %v2078 = vadd.f32 %v2077, %v1765
    %v2079 = vadd.f32 %v2078, %v1766
    %v2080 = vadd.f32 %v2079, %v1767
    %2081 = vadd.xlane.f32.xlu0 %v2080
    %v2082 = vpop.xlane.xlu0 %2081
    %v2083 = vadd.f32 %v1768, %v1769
    %v2084 = vadd.f32 %v2083, %v1770
    %v2085 = vadd.f32 %v2084, %v1771
    %v2086 = vadd.f32 %v2085, %v1772
    %v2087 = vadd.f32 %v2086, %v1773
    %2088 = vadd.xlane.f32.xlu0 %v2087
    %v2089 = vpop.xlane.xlu0 %2088
    %v2090 = vadd.f32 %v1774, %v1775
    %v2091 = vadd.f32 %v2090, %v1776
    %v2092 = vadd.f32 %v2091, %v1777
    %v2093 = vadd.f32 %v2092, %v1778
    %v2094 = vadd.f32 %v2093, %v1779
    %2095 = vadd.xlane.f32.xlu0 %v2094
    %v2096 = vpop.xlane.xlu0 %2095
    %v2097 = vadd.f32 %v1780, %v1781
    %v2098 = vadd.f32 %v2097, %v1782
    %v2099 = vadd.f32 %v2098, %v1783
    %v2100 = vadd.f32 %v2099, %v1784
    %v2101 = vadd.f32 %v2100, %v1785
    %2102 = vadd.xlane.f32.xlu0 %v2101
    %v2103 = vpop.xlane.xlu0 %2102
    %v2104 = vadd.f32 %v1786, %v1787
    %v2105 = vadd.f32 %v2104, %v1788
    %v2106 = vadd.f32 %v2105, %v1789
    %v2107 = vadd.f32 %v2106, %v1790
    %v2108 = vadd.f32 %v2107, %v1791
    %2109 = vadd.xlane.f32.xlu0 %v2108
    %v2110 = vpop.xlane.xlu0 %2109
    %v2111 = vadd.f32 %v1792, %v1793
    %v2112 = vadd.f32 %v2111, %v1794
    %v2113 = vadd.f32 %v2112, %v1795
    %v2114 = vadd.f32 %v2113, %v1796
    %v2115 = vadd.f32 %v2114, %v1797
    %2116 = vadd.xlane.f32.xlu0 %v2115
    %v2117 = vpop.xlane.xlu0 %2116
    %v2118 = vadd.f32 %v1798, %v1799
    %v2119 = vadd.f32 %v2118, %v1800
    %v2120 = vadd.f32 %v2119, %v1801
    %v2121 = vadd.f32 %v2120, %v1802
    %v2122 = vadd.f32 %v2121, %v1803
    %2123 = vadd.xlane.f32.xlu0 %v2122
    %v2124 = vpop.xlane.xlu0 %2123
    %v2125 = vadd.f32 %v1804, %v1805
    %v2126 = vadd.f32 %v2125, %v1806
    %v2127 = vadd.f32 %v2126, %v1807
    %v2128 = vadd.f32 %v2127, %v1808
    %v2129 = vadd.f32 %v2128, %v1809
    %2130 = vadd.xlane.f32.xlu0 %v2129
    %v2131 = vpop.xlane.xlu0 %2130
    %v2132 = vadd.f32 %v1810, %v1811
    %v2133 = vadd.f32 %v2132, %v1812
    %v2134 = vadd.f32 %v2133, %v1813
    %v2135 = vadd.f32 %v2134, %v1814
    %v2136 = vadd.f32 %v2135, %v1815
    %2137 = vadd.xlane.f32.xlu0 %v2136
    %v2138 = vpop.xlane.xlu0 %2137
    %v2139 = vadd.f32 %v1816, %v1817
    %v2140 = vadd.f32 %v2139, %v1818
    %v2141 = vadd.f32 %v2140, %v1819
    %v2142 = vadd.f32 %v2141, %v1820
    %v2143 = vadd.f32 %v2142, %v1821
    %2144 = vadd.xlane.f32.xlu0 %v2143
    %v2145 = vpop.xlane.xlu0 %2144
    %v2146 = vadd.f32 %v1822, %v1823
    %v2147 = vadd.f32 %v2146, %v1824
    %v2148 = vadd.f32 %v2147, %v1825
    %v2149 = vadd.f32 %v2148, %v1826
    %v2150 = vadd.f32 %v2149, %v1827
    %2151 = vadd.xlane.f32.xlu0 %v2150
    %v2152 = vpop.xlane.xlu0 %2151
    %v2153 = vadd.f32 %v1828, %v1829
    %v2154 = vadd.f32 %v2153, %v1830
    %v2155 = vadd.f32 %v2154, %v1831
    %v2156 = vadd.f32 %v2155, %v1832
    %v2157 = vadd.f32 %v2156, %v1833
    %2158 = vadd.xlane.f32.xlu0 %v2157
    %v2159 = vpop.xlane.xlu0 %2158
    %v2160 = vadd.f32 %v1834, %v1835
    %v2161 = vadd.f32 %v2160, %v1836
    %v2162 = vadd.f32 %v2161, %v1837
    %v2163 = vadd.f32 %v2162, %v1838
    %v2164 = vadd.f32 %v2163, %v1839
    %2165 = vadd.xlane.f32.xlu0 %v2164
    %v2166 = vpop.xlane.xlu0 %2165
    %v2167 = vadd.f32 %v1840, %v1841
    %v2168 = vadd.f32 %v2167, %v1842
    %v2169 = vadd.f32 %v2168, %v1843
    %v2170 = vadd.f32 %v2169, %v1844
    %v2171 = vadd.f32 %v2170, %v1845
    %2172 = vadd.xlane.f32.xlu0 %v2171
    %v2173 = vpop.xlane.xlu0 %2172
    %v2174 = vadd.f32 %v1846, %v1847
    %v2175 = vadd.f32 %v2174, %v1848
    %v2176 = vadd.f32 %v2175, %v1849
    %v2177 = vadd.f32 %v2176, %v1850
    %v2178 = vadd.f32 %v2177, %v1851
    %2179 = vadd.xlane.f32.xlu0 %v2178
    %v2180 = vpop.xlane.xlu0 %2179
    %v2181 = vadd.f32 %v1852, %v1853
    %v2182 = vadd.f32 %v2181, %v1854
    %v2183 = vadd.f32 %v2182, %v1855
    %v2184 = vadd.f32 %v2183, %v1856
    %v2185 = vadd.f32 %v2184, %v1857
    %2186 = vadd.xlane.f32.xlu0 %v2185
    %v2187 = vpop.xlane.xlu0 %2186
    %v2188 = vadd.f32 %v1858, %v1859
    %v2189 = vadd.f32 %v2188, %v1860
    %v2190 = vadd.f32 %v2189, %v1861
    %v2191 = vadd.f32 %v2190, %v1862
    %v2192 = vadd.f32 %v2191, %v1863
    %2193 = vadd.xlane.f32.xlu0 %v2192
    %v2194 = vpop.xlane.xlu0 %2193
    %v2195 = vadd.f32 %v1864, %v1865
    %v2196 = vadd.f32 %v2195, %v1866
    %v2197 = vadd.f32 %v2196, %v1867
    %v2198 = vadd.f32 %v2197, %v1868
    %v2199 = vadd.f32 %v2198, %v1869
    %2200 = vadd.xlane.f32.xlu0 %v2199
    %v2201 = vpop.xlane.xlu0 %2200
    %v2202 = vadd.f32 %v1870, %v1871
    %v2203 = vadd.f32 %v2202, %v1872
    %v2204 = vadd.f32 %v2203, %v1873
    %v2205 = vadd.f32 %v2204, %v1874
    %v2206 = vadd.f32 %v2205, %v1875
    %2207 = vadd.xlane.f32.xlu0 %v2206
    %v2208 = vpop.xlane.xlu0 %2207
    %v2209 = vadd.f32 %v1876, %v1877
    %v2210 = vadd.f32 %v2209, %v1878
    %v2211 = vadd.f32 %v2210, %v1879
    %v2212 = vadd.f32 %v2211, %v1880
    %v2213 = vadd.f32 %v2212, %v1881
    %2214 = vadd.xlane.f32.xlu0 %v2213
    %v2215 = vpop.xlane.xlu0 %2214
    %v2216 = vadd.f32 %v1882, %v1883
    %v2217 = vadd.f32 %v2216, %v1884
    %v2218 = vadd.f32 %v2217, %v1885
    %v2219 = vadd.f32 %v2218, %v1886
    %v2220 = vadd.f32 %v2219, %v1887
    %2221 = vadd.xlane.f32.xlu0 %v2220
    %v2222 = vpop.xlane.xlu0 %2221
    %v2223 = vadd.f32 %v1888, %v1889
    %v2224 = vadd.f32 %v2223, %v1890
    %v2225 = vadd.f32 %v2224, %v1891
    %v2226 = vadd.f32 %v2225, %v1892
    %v2227 = vadd.f32 %v2226, %v1893
    %2228 = vadd.xlane.f32.xlu0 %v2227
    %v2229 = vpop.xlane.xlu0 %2228
    %v2230 = vmul.f32 %v1900, %v1269
    %v2231 = vmul.f32 %v1907, %v1269
    %v2232 = vmul.f32 %v1914, %v1269
    %v2233 = vmul.f32 %v1921, %v1269
    %v2234 = vmul.f32 %v1928, %v1269
    %v2235 = vmul.f32 %v1935, %v1269
    %v2236 = vmul.f32 %v1942, %v1269
    %v2237 = vmul.f32 %v1949, %v1269
    %v2238 = vmul.f32 %v1956, %v1269
    %v2239 = vmul.f32 %v1963, %v1269
    %v2240 = vmul.f32 %v1970, %v1269
    %v2241 = vmul.f32 %v1977, %v1269
    %v2242 = vmul.f32 %v1984, %v1269
    %v2243 = vmul.f32 %v1991, %v1269
    %v2244 = vmul.f32 %v1998, %v1269
    %v2245 = vmul.f32 %v2005, %v1269
    %v2246 = vmul.f32 %v2012, %v1269
    %v2247 = vmul.f32 %v2019, %v1269
    %v2248 = vmul.f32 %v2026, %v1269
    %v2249 = vmul.f32 %v2033, %v1269
    %v2250 = vmul.f32 %v2040, %v1269
    %v2251 = vmul.f32 %v2047, %v1269
    %v2252 = vmul.f32 %v2054, %v1269
    %v2253 = vmul.f32 %v2061, %v1269
    %v2254 = vmul.f32 %v2068, %v1269
    %v2255 = vmul.f32 %v2075, %v1269
    %v2256 = vmul.f32 %v2082, %v1269
    %v2257 = vmul.f32 %v2089, %v1269
    %v2258 = vmul.f32 %v2096, %v1269
    %v2259 = vmul.f32 %v2103, %v1269
    %v2260 = vmul.f32 %v2110, %v1269
    %v2261 = vmul.f32 %v2117, %v1269
    %v2262 = vmul.f32 %v2124, %v1269
    %v2263 = vmul.f32 %v2131, %v1269
    %v2264 = vmul.f32 %v2138, %v1269
    %v2265 = vmul.f32 %v2145, %v1269
    %v2266 = vmul.f32 %v2152, %v1269
    %v2267 = vmul.f32 %v2159, %v1269
    %v2268 = vmul.f32 %v2166, %v1269
    %v2269 = vmul.f32 %v2173, %v1269
    %v2270 = vmul.f32 %v2180, %v1269
    %v2271 = vmul.f32 %v2187, %v1269
    %v2272 = vmul.f32 %v2194, %v1269
    %v2273 = vmul.f32 %v2201, %v1269
    %v2274 = vmul.f32 %v2208, %v1269
    %v2275 = vmul.f32 %v2215, %v1269
    %v2276 = vmul.f32 %v2222, %v1269
    %v2277 = vmul.f32 %v2229, %v1269
    %v2278 = vadd.f32 %v2230, 1e-12
    %v2279 = vadd.f32 %v2231, 1e-12
    %v2280 = vadd.f32 %v2232, 1e-12
    %v2281 = vadd.f32 %v2233, 1e-12
    %v2282 = vadd.f32 %v2234, 1e-12
    %v2283 = vadd.f32 %v2235, 1e-12
    %v2284 = vadd.f32 %v2236, 1e-12
    %v2285 = vadd.f32 %v2237, 1e-12
    %v2286 = vadd.f32 %v2238, 1e-12
    %v2287 = vadd.f32 %v2239, 1e-12
    %v2288 = vadd.f32 %v2240, 1e-12
    %v2289 = vadd.f32 %v2241, 1e-12
    %v2290 = vadd.f32 %v2242, 1e-12
    %v2291 = vadd.f32 %v2243, 1e-12
    %v2292 = vadd.f32 %v2244, 1e-12
    %v2293 = vadd.f32 %v2245, 1e-12
    %v2294 = vadd.f32 %v2246, 1e-12
    %v2295 = vadd.f32 %v2247, 1e-12
    %v2296 = vadd.f32 %v2248, 1e-12
    %v2297 = vadd.f32 %v2249, 1e-12
    %v2298 = vadd.f32 %v2250, 1e-12
    %v2299 = vadd.f32 %v2251, 1e-12
    %v2300 = vadd.f32 %v2252, 1e-12
    %v2301 = vadd.f32 %v2253, 1e-12
    %v2302 = vadd.f32 %v2254, 1e-12
    %v2303 = vadd.f32 %v2255, 1e-12
    %v2304 = vadd.f32 %v2256, 1e-12
    %v2305 = vadd.f32 %v2257, 1e-12
    %v2306 = vadd.f32 %v2258, 1e-12
    %v2307 = vadd.f32 %v2259, 1e-12
    %v2308 = vadd.f32 %v2260, 1e-12
    %v2309 = vadd.f32 %v2261, 1e-12
    %v2310 = vadd.f32 %v2262, 1e-12
    %v2311 = vadd.f32 %v2263, 1e-12
    %v2312 = vadd.f32 %v2264, 1e-12
    %v2313 = vadd.f32 %v2265, 1e-12
    %v2314 = vadd.f32 %v2266, 1e-12
    %v2315 = vadd.f32 %v2267, 1e-12
    %v2316 = vadd.f32 %v2268, 1e-12
    %v2317 = vadd.f32 %v2269, 1e-12
    %v2318 = vadd.f32 %v2270, 1e-12
    %v2319 = vadd.f32 %v2271, 1e-12
    %v2320 = vadd.f32 %v2272, 1e-12
    %v2321 = vadd.f32 %v2273, 1e-12
    %v2322 = vadd.f32 %v2274, 1e-12
    %v2323 = vadd.f32 %v2275, 1e-12
    %v2324 = vadd.f32 %v2276, 1e-12
    %v2325 = vadd.f32 %v2277, 1e-12
    %v2326 = vrsqrt.pop %v2278
    %v2327 = vrsqrt.pop %v2279
    %v2328 = vrsqrt.pop %v2280
    %v2329 = vrsqrt.pop %v2281
    %v2330 = vrsqrt.pop %v2282
    %v2331 = vrsqrt.pop %v2283
    %v2332 = vrsqrt.pop %v2284
    %v2333 = vrsqrt.pop %v2285
    %v2334 = vrsqrt.pop %v2286
    %v2335 = vrsqrt.pop %v2287
    %v2336 = vrsqrt.pop %v2288
    %v2337 = vrsqrt.pop %v2289
    %v2338 = vrsqrt.pop %v2290
    %v2339 = vrsqrt.pop %v2291
    %v2340 = vrsqrt.pop %v2292
    %v2341 = vrsqrt.pop %v2293
    %v2342 = vrsqrt.pop %v2294
    %v2343 = vrsqrt.pop %v2295
    %v2344 = vrsqrt.pop %v2296
    %v2345 = vrsqrt.pop %v2297
    %v2346 = vrsqrt.pop %v2298
    %v2347 = vrsqrt.pop %v2299
    %v2348 = vrsqrt.pop %v2300
    %v2349 = vrsqrt.pop %v2301
    %v2350 = vrsqrt.pop %v2302
    %v2351 = vrsqrt.pop %v2303
    %v2352 = vrsqrt.pop %v2304
    %v2353 = vrsqrt.pop %v2305
    %v2354 = vrsqrt.pop %v2306
    %v2355 = vrsqrt.pop %v2307
    %v2356 = vrsqrt.pop %v2308
    %v2357 = vrsqrt.pop %v2309
    %v2358 = vrsqrt.pop %v2310
    %v2359 = vrsqrt.pop %v2311
    %v2360 = vrsqrt.pop %v2312
    %v2361 = vrsqrt.pop %v2313
    %v2362 = vrsqrt.pop %v2314
    %v2363 = vrsqrt.pop %v2315
    %v2364 = vrsqrt.pop %v2316
    %v2365 = vrsqrt.pop %v2317
    %v2366 = vrsqrt.pop %v2318
    %v2367 = vrsqrt.pop %v2319
    %v2368 = vrsqrt.pop %v2320
    %v2369 = vrsqrt.pop %v2321
    %v2370 = vrsqrt.pop %v2322
    %v2371 = vrsqrt.pop %v2323
    %v2372 = vrsqrt.pop %v2324
    %v2373 = vrsqrt.pop %v2325
    %v2374 = vld [vmem:[#allocation7] sm:$0x3f]
    %v2375 = vld [vmem:[#allocation8] sm:$0x3f]
    %v2376 = vmul.f32 %v1318, %v2326
    %v2377 = vmul.f32 %v1319, %v2326
    %v2378 = vmul.f32 %v1320, %v2326
    %v2379 = vmul.f32 %v1321, %v2326
    %v2380 = vmul.f32 %v1322, %v2326
    %v2381 = vmul.f32 %v1323, %v2326
    %v2382 = vmul.f32 %v1324, %v2327
    %v2383 = vmul.f32 %v1325, %v2327
    %v2384 = vmul.f32 %v1326, %v2327
    %v2385 = vmul.f32 %v1327, %v2327
    %v2386 = vmul.f32 %v1328, %v2327
    %v2387 = vmul.f32 %v1329, %v2327
    %v2388 = vmul.f32 %v1330, %v2328
    %v2389 = vmul.f32 %v1331, %v2328
    %v2390 = vmul.f32 %v1332, %v2328
    %v2391 = vmul.f32 %v1333, %v2328
    %v2392 = vmul.f32 %v1334, %v2328
    %v2393 = vmul.f32 %v1335, %v2328
    %v2394 = vmul.f32 %v1336, %v2329
    %v2395 = vmul.f32 %v1337, %v2329
    %v2396 = vmul.f32 %v1338, %v2329
    %v2397 = vmul.f32 %v1339, %v2329
    %v2398 = vmul.f32 %v1340, %v2329
    %v2399 = vmul.f32 %v1341, %v2329
    %v2400 = vmul.f32 %v1342, %v2330
    %v2401 = vmul.f32 %v1343, %v2330
    %v2402 = vmul.f32 %v1344, %v2330
    %v2403 = vmul.f32 %v1345, %v2330
    %v2404 = vmul.f32 %v1346, %v2330
    %v2405 = vmul.f32 %v1347, %v2330
    %v2406 = vmul.f32 %v1348, %v2331
    %v2407 = vmul.f32 %v1349, %v2331
    %v2408 = vmul.f32 %v1350, %v2331
    %v2409 = vmul.f32 %v1351, %v2331
    %v2410 = vmul.f32 %v1352, %v2331
    %v2411 = vmul.f32 %v1353, %v2331
    %v2412 = vmul.f32 %v1354, %v2332
    %v2413 = vmul.f32 %v1355, %v2332
    %v2414 = vmul.f32 %v1356, %v2332
    %v2415 = vmul.f32 %v1357, %v2332
    %v2416 = vmul.f32 %v1358, %v2332
    %v2417 = vmul.f32 %v1359, %v2332
    %v2418 = vmul.f32 %v1360, %v2333
    %v2419 = vmul.f32 %v1361, %v2333
    %v2420 = vmul.f32 %v1362, %v2333
    %v2421 = vmul.f32 %v1363, %v2333
    %v2422 = vmul.f32 %v1364, %v2333
    %v2423 = vmul.f32 %v1365, %v2333
    %v2424 = vmul.f32 %v1366, %v2334
    %v2425 = vmul.f32 %v1367, %v2334
    %v2426 = vmul.f32 %v1368, %v2334
    %v2427 = vmul.f32 %v1369, %v2334
    %v2428 = vmul.f32 %v1370, %v2334
    %v2429 = vmul.f32 %v1371, %v2334
    %v2430 = vmul.f32 %v1372, %v2335
    %v2431 = vmul.f32 %v1373, %v2335
    %v2432 = vmul.f32 %v1374, %v2335
    %v2433 = vmul.f32 %v1375, %v2335
    %v2434 = vmul.f32 %v1376, %v2335
    %v2435 = vmul.f32 %v1377, %v2335
    %v2436 = vmul.f32 %v1378, %v2336
    %v2437 = vmul.f32 %v1379, %v2336
    %v2438 = vmul.f32 %v1380, %v2336
    %v2439 = vmul.f32 %v1381, %v2336
    %v2440 = vmul.f32 %v1382, %v2336
    %v2441 = vmul.f32 %v1383, %v2336
    %v2442 = vmul.f32 %v1384, %v2337
    %v2443 = vmul.f32 %v1385, %v2337
    %v2444 = vmul.f32 %v1386, %v2337
    %v2445 = vmul.f32 %v1387, %v2337
    %v2446 = vmul.f32 %v1388, %v2337
    %v2447 = vmul.f32 %v1389, %v2337
    %v2448 = vmul.f32 %v1390, %v2338
    %v2449 = vmul.f32 %v1391, %v2338
    %v2450 = vmul.f32 %v1392, %v2338
    %v2451 = vmul.f32 %v1393, %v2338
    %v2452 = vmul.f32 %v1394, %v2338
    %v2453 = vmul.f32 %v1395, %v2338
    %v2454 = vmul.f32 %v1396, %v2339
    %v2455 = vmul.f32 %v1397, %v2339
    %v2456 = vmul.f32 %v1398, %v2339
    %v2457 = vmul.f32 %v1399, %v2339
    %v2458 = vmul.f32 %v1400, %v2339
    %v2459 = vmul.f32 %v1401, %v2339
    %v2460 = vmul.f32 %v1402, %v2340
    %v2461 = vmul.f32 %v1403, %v2340
    %v2462 = vmul.f32 %v1404, %v2340
    %v2463 = vmul.f32 %v1405, %v2340
    %v2464 = vmul.f32 %v1406, %v2340
    %v2465 = vmul.f32 %v1407, %v2340
    %v2466 = vmul.f32 %v1408, %v2341
    %v2467 = vmul.f32 %v1409, %v2341
    %v2468 = vmul.f32 %v1410, %v2341
    %v2469 = vmul.f32 %v1411, %v2341
    %v2470 = vmul.f32 %v1412, %v2341
    %v2471 = vmul.f32 %v1413, %v2341
    %v2472 = vmul.f32 %v1414, %v2342
    %v2473 = vmul.f32 %v1415, %v2342
    %v2474 = vmul.f32 %v1416, %v2342
    %v2475 = vmul.f32 %v1417, %v2342
    %v2476 = vmul.f32 %v1418, %v2342
    %v2477 = vmul.f32 %v1419, %v2342
    %v2478 = vmul.f32 %v1420, %v2343
    %v2479 = vmul.f32 %v1421, %v2343
    %v2480 = vmul.f32 %v1422, %v2343
    %v2481 = vmul.f32 %v1423, %v2343
    %v2482 = vmul.f32 %v1424, %v2343
    %v2483 = vmul.f32 %v1425, %v2343
    %v2484 = vmul.f32 %v1426, %v2344
    %v2485 = vmul.f32 %v1427, %v2344
    %v2486 = vmul.f32 %v1428, %v2344
    %v2487 = vmul.f32 %v1429, %v2344
    %v2488 = vmul.f32 %v1430, %v2344
    %v2489 = vmul.f32 %v1431, %v2344
    %v2490 = vmul.f32 %v1432, %v2345
    %v2491 = vmul.f32 %v1433, %v2345
    %v2492 = vmul.f32 %v1434, %v2345
    %v2493 = vmul.f32 %v1435, %v2345
    %v2494 = vmul.f32 %v1436, %v2345
    %v2495 = vmul.f32 %v1437, %v2345
    %v2496 = vmul.f32 %v1438, %v2346
    %v2497 = vmul.f32 %v1439, %v2346
    %v2498 = vmul.f32 %v1440, %v2346
    %v2499 = vmul.f32 %v1441, %v2346
    %v2500 = vmul.f32 %v1442, %v2346
    %v2501 = vmul.f32 %v1443, %v2346
    %v2502 = vmul.f32 %v1444, %v2347
    %v2503 = vmul.f32 %v1445, %v2347
    %v2504 = vmul.f32 %v1446, %v2347
    %v2505 = vmul.f32 %v1447, %v2347
    %v2506 = vmul.f32 %v1448, %v2347
    %v2507 = vmul.f32 %v1449, %v2347
    %v2508 = vmul.f32 %v1450, %v2348
    %v2509 = vmul.f32 %v1451, %v2348
    %v2510 = vmul.f32 %v1452, %v2348
    %v2511 = vmul.f32 %v1453, %v2348
    %v2512 = vmul.f32 %v1454, %v2348
    %v2513 = vmul.f32 %v1455, %v2348
    %v2514 = vmul.f32 %v1456, %v2349
    %v2515 = vmul.f32 %v1457, %v2349
    %v2516 = vmul.f32 %v1458, %v2349
    %v2517 = vmul.f32 %v1459, %v2349
    %v2518 = vmul.f32 %v1460, %v2349
    %v2519 = vmul.f32 %v1461, %v2349
    %v2520 = vmul.f32 %v1462, %v2350
    %v2521 = vmul.f32 %v1463, %v2350
    %v2522 = vmul.f32 %v1464, %v2350
    %v2523 = vmul.f32 %v1465, %v2350
    %v2524 = vmul.f32 %v1466, %v2350
    %v2525 = vmul.f32 %v1467, %v2350
    %v2526 = vmul.f32 %v1468, %v2351
    %v2527 = vmul.f32 %v1469, %v2351
    %v2528 = vmul.f32 %v1470, %v2351
    %v2529 = vmul.f32 %v1471, %v2351
    %v2530 = vmul.f32 %v1472, %v2351
    %v2531 = vmul.f32 %v1473, %v2351
    %v2532 = vmul.f32 %v1474, %v2352
    %v2533 = vmul.f32 %v1475, %v2352
    %v2534 = vmul.f32 %v1476, %v2352
    %v2535 = vmul.f32 %v1477, %v2352
    %v2536 = vmul.f32 %v1478, %v2352
    %v2537 = vmul.f32 %v1479, %v2352
    %v2538 = vmul.f32 %v1480, %v2353
    %v2539 = vmul.f32 %v1481, %v2353
    %v2540 = vmul.f32 %v1482, %v2353
    %v2541 = vmul.f32 %v1483, %v2353
    %v2542 = vmul.f32 %v1484, %v2353
    %v2543 = vmul.f32 %v1485, %v2353
    %v2544 = vmul.f32 %v1486, %v2354
    %v2545 = vmul.f32 %v1487, %v2354
    %v2546 = vmul.f32 %v1488, %v2354
    %v2547 = vmul.f32 %v1489, %v2354
    %v2548 = vmul.f32 %v1490, %v2354
    %v2549 = vmul.f32 %v1491, %v2354
    %v2550 = vmul.f32 %v1492, %v2355
    %v2551 = vmul.f32 %v1493, %v2355
    %v2552 = vmul.f32 %v1494, %v2355
    %v2553 = vmul.f32 %v1495, %v2355
    %v2554 = vmul.f32 %v1496, %v2355
    %v2555 = vmul.f32 %v1497, %v2355
    %v2556 = vmul.f32 %v1498, %v2356
    %v2557 = vmul.f32 %v1499, %v2356
    %v2558 = vmul.f32 %v1500, %v2356
    %v2559 = vmul.f32 %v1501, %v2356
    %v2560 = vmul.f32 %v1502, %v2356
    %v2561 = vmul.f32 %v1503, %v2356
    %v2562 = vmul.f32 %v1504, %v2357
    %v2563 = vmul.f32 %v1505, %v2357
    %v2564 = vmul.f32 %v1506, %v2357
    %v2565 = vmul.f32 %v1507, %v2357
    %v2566 = vmul.f32 %v1508, %v2357
    %v2567 = vmul.f32 %v1509, %v2357
    %v2568 = vmul.f32 %v1510, %v2358
    %v2569 = vmul.f32 %v1511, %v2358
    %v2570 = vmul.f32 %v1512, %v2358
    %v2571 = vmul.f32 %v1513, %v2358
    %v2572 = vmul.f32 %v1514, %v2358
    %v2573 = vmul.f32 %v1515, %v2358
    %v2574 = vmul.f32 %v1516, %v2359
    %v2575 = vmul.f32 %v1517, %v2359
    %v2576 = vmul.f32 %v1518, %v2359
    %v2577 = vmul.f32 %v1519, %v2359
    %v2578 = vmul.f32 %v1520, %v2359
    %v2579 = vmul.f32 %v1521, %v2359
    %v2580 = vmul.f32 %v1522, %v2360
    %v2581 = vmul.f32 %v1523, %v2360
    %v2582 = vmul.f32 %v1524, %v2360
    %v2583 = vmul.f32 %v1525, %v2360
    %v2584 = vmul.f32 %v1526, %v2360
    %v2585 = vmul.f32 %v1527, %v2360
    %v2586 = vmul.f32 %v1528, %v2361
    %v2587 = vmul.f32 %v1529, %v2361
    %v2588 = vmul.f32 %v1530, %v2361
    %v2589 = vmul.f32 %v1531, %v2361
    %v2590 = vmul.f32 %v1532, %v2361
    %v2591 = vmul.f32 %v1533, %v2361
    %v2592 = vmul.f32 %v1534, %v2362
    %v2593 = vmul.f32 %v1535, %v2362
    %v2594 = vmul.f32 %v1536, %v2362
    %v2595 = vmul.f32 %v1537, %v2362
    %v2596 = vmul.f32 %v1538, %v2362
    %v2597 = vmul.f32 %v1539, %v2362
    %v2598 = vmul.f32 %v1540, %v2363
    %v2599 = vmul.f32 %v1541, %v2363
    %v2600 = vmul.f32 %v1542, %v2363
    %v2601 = vmul.f32 %v1543, %v2363
    %v2602 = vmul.f32 %v1544, %v2363
    %v2603 = vmul.f32 %v1545, %v2363
    %v2604 = vmul.f32 %v1546, %v2364
    %v2605 = vmul.f32 %v1547, %v2364
    %v2606 = vmul.f32 %v1548, %v2364
    %v2607 = vmul.f32 %v1549, %v2364
    %v2608 = vmul.f32 %v1550, %v2364
    %v2609 = vmul.f32 %v1551, %v2364
    %v2610 = vmul.f32 %v1552, %v2365
    %v2611 = vmul.f32 %v1553, %v2365
    %v2612 = vmul.f32 %v1554, %v2365
    %v2613 = vmul.f32 %v1555, %v2365
    %v2614 = vmul.f32 %v1556, %v2365
    %v2615 = vmul.f32 %v1557, %v2365
    %v2616 = vmul.f32 %v1558, %v2366
    %v2617 = vmul.f32 %v1559, %v2366
    %v2618 = vmul.f32 %v1560, %v2366
    %v2619 = vmul.f32 %v1561, %v2366
    %v2620 = vmul.f32 %v1562, %v2366
    %v2621 = vmul.f32 %v1563, %v2366
    %v2622 = vmul.f32 %v1564, %v2367
    %v2623 = vmul.f32 %v1565, %v2367
    %v2624 = vmul.f32 %v1566, %v2367
    %v2625 = vmul.f32 %v1567, %v2367
    %v2626 = vmul.f32 %v1568, %v2367
    %v2627 = vmul.f32 %v1569, %v2367
    %v2628 = vmul.f32 %v1570, %v2368
    %v2629 = vmul.f32 %v1571, %v2368
    %v2630 = vmul.f32 %v1572, %v2368
    %v2631 = vmul.f32 %v1573, %v2368
    %v2632 = vmul.f32 %v1574, %v2368
    %v2633 = vmul.f32 %v1575, %v2368
    %v2634 = vmul.f32 %v1576, %v2369
    %v2635 = vmul.f32 %v1577, %v2369
    %v2636 = vmul.f32 %v1578, %v2369
    %v2637 = vmul.f32 %v1579, %v2369
    %v2638 = vmul.f32 %v1580, %v2369
    %v2639 = vmul.f32 %v1581, %v2369
    %v2640 = vmul.f32 %v1582, %v2370
    %v2641 = vmul.f32 %v1583, %v2370
    %v2642 = vmul.f32 %v1584, %v2370
    %v2643 = vmul.f32 %v1585, %v2370
    %v2644 = vmul.f32 %v1586, %v2370
    %v2645 = vmul.f32 %v1587, %v2370
    %v2646 = vmul.f32 %v1588, %v2371
    %v2647 = vmul.f32 %v1589, %v2371
    %v2648 = vmul.f32 %v1590, %v2371
    %v2649 = vmul.f32 %v1591, %v2371
    %v2650 = vmul.f32 %v1592, %v2371
    %v2651 = vmul.f32 %v1593, %v2371
    %v2652 = vmul.f32 %v1594, %v2372
    %v2653 = vmul.f32 %v1595, %v2372
    %v2654 = vmul.f32 %v1596, %v2372
    %v2655 = vmul.f32 %v1597, %v2372
    %v2656 = vmul.f32 %v1598, %v2372
    %v2657 = vmul.f32 %v1599, %v2372
    %v2658 = vmul.f32 %v1600, %v2373
    %v2659 = vmul.f32 %v1601, %v2373
    %v2660 = vmul.f32 %v1602, %v2373
    %v2661 = vmul.f32 %v1603, %v2373
    %v2662 = vmul.f32 %v1604, %v2373
    %v2663 = vmul.f32 %v1605, %v2373
    %v2665 = vlaneseq
    %v2666 = vshrl.u32 %v2665, 7
    %v2667 = vsub.s32 0, %v2666
    %v2668 = vrot.slane %v2374, %v2667
    %v2669 = vlaneseq
    %v2670 = vshrl.u32 %v2669, 7
    %v2671 = vsub.s32 1, %v2670
    %v2672 = vrot.slane %v2374, %v2671
    %v2673 = vlaneseq
    %v2674 = vshrl.u32 %v2673, 7
    %v2675 = vsub.s32 2, %v2674
    %v2676 = vrot.slane %v2374, %v2675
    %v2677 = vlaneseq
    %v2678 = vshrl.u32 %v2677, 7
    %v2679 = vsub.s32 3, %v2678
    %v2680 = vrot.slane %v2374, %v2679
    %v2681 = vlaneseq
    %v2682 = vshrl.u32 %v2681, 7
    %v2683 = vsub.s32 4, %v2682
    %v2684 = vrot.slane %v2374, %v2683
    %v2685 = vlaneseq
    %v2686 = vshrl.u32 %v2685, 7
    %v2687 = vsub.s32 5, %v2686
    %v2688 = vrot.slane %v2374, %v2687
    %v2695 = vmul.f32 %v2376, %v2668
    %v2696 = vmul.f32 %v2377, %v2672
    %v2697 = vmul.f32 %v2378, %v2676
    %v2698 = vmul.f32 %v2379, %v2680
    %v2699 = vmul.f32 %v2380, %v2684
    %v2700 = vmul.f32 %v2381, %v2688
    %v2701 = vmul.f32 %v2382, %v2668
    %v2702 = vmul.f32 %v2383, %v2672
    %v2703 = vmul.f32 %v2384, %v2676
    %v2704 = vmul.f32 %v2385, %v2680
    %v2705 = vmul.f32 %v2386, %v2684
    %v2706 = vmul.f32 %v2387, %v2688
    %v2707 = vmul.f32 %v2388, %v2668
    %v2708 = vmul.f32 %v2389, %v2672
    %v2709 = vmul.f32 %v2390, %v2676
    %v2710 = vmul.f32 %v2391, %v2680
    %v2711 = vmul.f32 %v2392, %v2684
    %v2712 = vmul.f32 %v2393, %v2688
    %v2713 = vmul.f32 %v2394, %v2668
    %v2714 = vmul.f32 %v2395, %v2672
    %v2715 = vmul.f32 %v2396, %v2676
    %v2716 = vmul.f32 %v2397, %v2680
    %v2717 = vmul.f32 %v2398, %v2684
    %v2718 = vmul.f32 %v2399, %v2688
    %v2719 = vmul.f32 %v2400, %v2668
    %v2720 = vmul.f32 %v2401, %v2672
    %v2721 = vmul.f32 %v2402, %v2676
    %v2722 = vmul.f32 %v2403, %v2680
    %v2723 = vmul.f32 %v2404, %v2684
    %v2724 = vmul.f32 %v2405, %v2688
    %v2725 = vmul.f32 %v2406, %v2668
    %v2726 = vmul.f32 %v2407, %v2672
    %v2727 = vmul.f32 %v2408, %v2676
    %v2728 = vmul.f32 %v2409, %v2680
    %v2729 = vmul.f32 %v2410, %v2684
    %v2730 = vmul.f32 %v2411, %v2688
    %v2731 = vmul.f32 %v2412, %v2668
    %v2732 = vmul.f32 %v2413, %v2672
    %v2733 = vmul.f32 %v2414, %v2676
    %v2734 = vmul.f32 %v2415, %v2680
    %v2735 = vmul.f32 %v2416, %v2684
    %v2736 = vmul.f32 %v2417, %v2688
    %v2737 = vmul.f32 %v2418, %v2668
    %v2738 = vmul.f32 %v2419, %v2672
    %v2739 = vmul.f32 %v2420, %v2676
    %v2740 = vmul.f32 %v2421, %v2680
    %v2741 = vmul.f32 %v2422, %v2684
    %v2742 = vmul.f32 %v2423, %v2688
    %v2743 = vmul.f32 %v2424, %v2668
    %v2744 = vmul.f32 %v2425, %v2672
    %v2745 = vmul.f32 %v2426, %v2676
    %v2746 = vmul.f32 %v2427, %v2680
    %v2747 = vmul.f32 %v2428, %v2684
    %v2748 = vmul.f32 %v2429, %v2688
    %v2749 = vmul.f32 %v2430, %v2668
    %v2750 = vmul.f32 %v2431, %v2672
    %v2751 = vmul.f32 %v2432, %v2676
    %v2752 = vmul.f32 %v2433, %v2680
    %v2753 = vmul.f32 %v2434, %v2684
    %v2754 = vmul.f32 %v2435, %v2688
    %v2755 = vmul.f32 %v2436, %v2668
    %v2756 = vmul.f32 %v2437, %v2672
    %v2757 = vmul.f32 %v2438, %v2676
    %v2758 = vmul.f32 %v2439, %v2680
    %v2759 = vmul.f32 %v2440, %v2684
    %v2760 = vmul.f32 %v2441, %v2688
    %v2761 = vmul.f32 %v2442, %v2668
    %v2762 = vmul.f32 %v2443, %v2672
    %v2763 = vmul.f32 %v2444, %v2676
    %v2764 = vmul.f32 %v2445, %v2680
    %v2765 = vmul.f32 %v2446, %v2684
    %v2766 = vmul.f32 %v2447, %v2688
    %v2767 = vmul.f32 %v2448, %v2668
    %v2768 = vmul.f32 %v2449, %v2672
    %v2769 = vmul.f32 %v2450, %v2676
    %v2770 = vmul.f32 %v2451, %v2680
    %v2771 = vmul.f32 %v2452, %v2684
    %v2772 = vmul.f32 %v2453, %v2688
    %v2773 = vmul.f32 %v2454, %v2668
    %v2774 = vmul.f32 %v2455, %v2672
    %v2775 = vmul.f32 %v2456, %v2676
    %v2776 = vmul.f32 %v2457, %v2680
    %v2777 = vmul.f32 %v2458, %v2684
    %v2778 = vmul.f32 %v2459, %v2688
    %v2779 = vmul.f32 %v2460, %v2668
    %v2780 = vmul.f32 %v2461, %v2672
    %v2781 = vmul.f32 %v2462, %v2676
    %v2782 = vmul.f32 %v2463, %v2680
    %v2783 = vmul.f32 %v2464, %v2684
    %v2784 = vmul.f32 %v2465, %v2688
    %v2785 = vmul.f32 %v2466, %v2668
    %v2786 = vmul.f32 %v2467, %v2672
    %v2787 = vmul.f32 %v2468, %v2676
    %v2788 = vmul.f32 %v2469, %v2680
    %v2789 = vmul.f32 %v2470, %v2684
    %v2790 = vmul.f32 %v2471, %v2688
    %v2791 = vmul.f32 %v2472, %v2668
    %v2792 = vmul.f32 %v2473, %v2672
    %v2793 = vmul.f32 %v2474, %v2676
    %v2794 = vmul.f32 %v2475, %v2680
    %v2795 = vmul.f32 %v2476, %v2684
    %v2796 = vmul.f32 %v2477, %v2688
    %v2797 = vmul.f32 %v2478, %v2668
    %v2798 = vmul.f32 %v2479, %v2672
    %v2799 = vmul.f32 %v2480, %v2676
    %v2800 = vmul.f32 %v2481, %v2680
    %v2801 = vmul.f32 %v2482, %v2684
    %v2802 = vmul.f32 %v2483, %v2688
    %v2803 = vmul.f32 %v2484, %v2668
    %v2804 = vmul.f32 %v2485, %v2672
    %v2805 = vmul.f32 %v2486, %v2676
    %v2806 = vmul.f32 %v2487, %v2680
    %v2807 = vmul.f32 %v2488, %v2684
    %v2808 = vmul.f32 %v2489, %v2688
    %v2809 = vmul.f32 %v2490, %v2668
    %v2810 = vmul.f32 %v2491, %v2672
    %v2811 = vmul.f32 %v2492, %v2676
    %v2812 = vmul.f32 %v2493, %v2680
    %v2813 = vmul.f32 %v2494, %v2684
    %v2814 = vmul.f32 %v2495, %v2688
    %v2815 = vmul.f32 %v2496, %v2668
    %v2816 = vmul.f32 %v2497, %v2672
    %v2817 = vmul.f32 %v2498, %v2676
    %v2818 = vmul.f32 %v2499, %v2680
    %v2819 = vmul.f32 %v2500, %v2684
    %v2820 = vmul.f32 %v2501, %v2688
    %v2821 = vmul.f32 %v2502, %v2668
    %v2822 = vmul.f32 %v2503, %v2672
    %v2823 = vmul.f32 %v2504, %v2676
    %v2824 = vmul.f32 %v2505, %v2680
    %v2825 = vmul.f32 %v2506, %v2684
    %v2826 = vmul.f32 %v2507, %v2688
    %v2827 = vmul.f32 %v2508, %v2668
    %v2828 = vmul.f32 %v2509, %v2672
    %v2829 = vmul.f32 %v2510, %v2676
    %v2830 = vmul.f32 %v2511, %v2680
    %v2831 = vmul.f32 %v2512, %v2684
    %v2832 = vmul.f32 %v2513, %v2688
    %v2833 = vmul.f32 %v2514, %v2668
    %v2834 = vmul.f32 %v2515, %v2672
    %v2835 = vmul.f32 %v2516, %v2676
    %v2836 = vmul.f32 %v2517, %v2680
    %v2837 = vmul.f32 %v2518, %v2684
    %v2838 = vmul.f32 %v2519, %v2688
    %v2839 = vmul.f32 %v2520, %v2668
    %v2840 = vmul.f32 %v2521, %v2672
    %v2841 = vmul.f32 %v2522, %v2676
    %v2842 = vmul.f32 %v2523, %v2680
    %v2843 = vmul.f32 %v2524, %v2684
    %v2844 = vmul.f32 %v2525, %v2688
    %v2845 = vmul.f32 %v2526, %v2668
    %v2846 = vmul.f32 %v2527, %v2672
    %v2847 = vmul.f32 %v2528, %v2676
    %v2848 = vmul.f32 %v2529, %v2680
    %v2849 = vmul.f32 %v2530, %v2684
    %v2850 = vmul.f32 %v2531, %v2688
    %v2851 = vmul.f32 %v2532, %v2668
    %v2852 = vmul.f32 %v2533, %v2672
    %v2853 = vmul.f32 %v2534, %v2676
    %v2854 = vmul.f32 %v2535, %v2680
    %v2855 = vmul.f32 %v2536, %v2684
    %v2856 = vmul.f32 %v2537, %v2688
    %v2857 = vmul.f32 %v2538, %v2668
    %v2858 = vmul.f32 %v2539, %v2672
    %v2859 = vmul.f32 %v2540, %v2676
    %v2860 = vmul.f32 %v2541, %v2680
    %v2861 = vmul.f32 %v2542, %v2684
    %v2862 = vmul.f32 %v2543, %v2688
    %v2863 = vmul.f32 %v2544, %v2668
    %v2864 = vmul.f32 %v2545, %v2672
    %v2865 = vmul.f32 %v2546, %v2676
    %v2866 = vmul.f32 %v2547, %v2680
    %v2867 = vmul.f32 %v2548, %v2684
    %v2868 = vmul.f32 %v2549, %v2688
    %v2869 = vmul.f32 %v2550, %v2668
    %v2870 = vmul.f32 %v2551, %v2672
    %v2871 = vmul.f32 %v2552, %v2676
    %v2872 = vmul.f32 %v2553, %v2680
    %v2873 = vmul.f32 %v2554, %v2684
    %v2874 = vmul.f32 %v2555, %v2688
    %v2875 = vmul.f32 %v2556, %v2668
    %v2876 = vmul.f32 %v2557, %v2672
    %v2877 = vmul.f32 %v2558, %v2676
    %v2878 = vmul.f32 %v2559, %v2680
    %v2879 = vmul.f32 %v2560, %v2684
    %v2880 = vmul.f32 %v2561, %v2688
    %v2881 = vmul.f32 %v2562, %v2668
    %v2882 = vmul.f32 %v2563, %v2672
    %v2883 = vmul.f32 %v2564, %v2676
    %v2884 = vmul.f32 %v2565, %v2680
    %v2885 = vmul.f32 %v2566, %v2684
    %v2886 = vmul.f32 %v2567, %v2688
    %v2887 = vmul.f32 %v2568, %v2668
    %v2888 = vmul.f32 %v2569, %v2672
    %v2889 = vmul.f32 %v2570, %v2676
    %v2890 = vmul.f32 %v2571, %v2680
    %v2891 = vmul.f32 %v2572, %v2684
    %v2892 = vmul.f32 %v2573, %v2688
    %v2893 = vmul.f32 %v2574, %v2668
    %v2894 = vmul.f32 %v2575, %v2672
    %v2895 = vmul.f32 %v2576, %v2676
    %v2896 = vmul.f32 %v2577, %v2680
    %v2897 = vmul.f32 %v2578, %v2684
    %v2898 = vmul.f32 %v2579, %v2688
    %v2899 = vmul.f32 %v2580, %v2668
    %v2900 = vmul.f32 %v2581, %v2672
    %v2901 = vmul.f32 %v2582, %v2676
    %v2902 = vmul.f32 %v2583, %v2680
    %v2903 = vmul.f32 %v2584, %v2684
    %v2904 = vmul.f32 %v2585, %v2688
    %v2905 = vmul.f32 %v2586, %v2668
    %v2906 = vmul.f32 %v2587, %v2672
    %v2907 = vmul.f32 %v2588, %v2676
    %v2908 = vmul.f32 %v2589, %v2680
    %v2909 = vmul.f32 %v2590, %v2684
    %v2910 = vmul.f32 %v2591, %v2688
    %v2911 = vmul.f32 %v2592, %v2668
    %v2912 = vmul.f32 %v2593, %v2672
    %v2913 = vmul.f32 %v2594, %v2676
    %v2914 = vmul.f32 %v2595, %v2680
    %v2915 = vmul.f32 %v2596, %v2684
    %v2916 = vmul.f32 %v2597, %v2688
    %v2917 = vmul.f32 %v2598, %v2668
    %v2918 = vmul.f32 %v2599, %v2672
    %v2919 = vmul.f32 %v2600, %v2676
    %v2920 = vmul.f32 %v2601, %v2680
    %v2921 = vmul.f32 %v2602, %v2684
    %v2922 = vmul.f32 %v2603, %v2688
    %v2923 = vmul.f32 %v2604, %v2668
    %v2924 = vmul.f32 %v2605, %v2672
    %v2925 = vmul.f32 %v2606, %v2676
    %v2926 = vmul.f32 %v2607, %v2680
    %v2927 = vmul.f32 %v2608, %v2684
    %v2928 = vmul.f32 %v2609, %v2688
    %v2929 = vmul.f32 %v2610, %v2668
    %v2930 = vmul.f32 %v2611, %v2672
    %v2931 = vmul.f32 %v2612, %v2676
    %v2932 = vmul.f32 %v2613, %v2680
    %v2933 = vmul.f32 %v2614, %v2684
    %v2934 = vmul.f32 %v2615, %v2688
    %v2935 = vmul.f32 %v2616, %v2668
    %v2936 = vmul.f32 %v2617, %v2672
    %v2937 = vmul.f32 %v2618, %v2676
    %v2938 = vmul.f32 %v2619, %v2680
    %v2939 = vmul.f32 %v2620, %v2684
    %v2940 = vmul.f32 %v2621, %v2688
    %v2941 = vmul.f32 %v2622, %v2668
    %v2942 = vmul.f32 %v2623, %v2672
    %v2943 = vmul.f32 %v2624, %v2676
    %v2944 = vmul.f32 %v2625, %v2680
    %v2945 = vmul.f32 %v2626, %v2684
    %v2946 = vmul.f32 %v2627, %v2688
    %v2947 = vmul.f32 %v2628, %v2668
    %v2948 = vmul.f32 %v2629, %v2672
    %v2949 = vmul.f32 %v2630, %v2676
    %v2950 = vmul.f32 %v2631, %v2680
    %v2951 = vmul.f32 %v2632, %v2684
    %v2952 = vmul.f32 %v2633, %v2688
    %v2953 = vmul.f32 %v2634, %v2668
    %v2954 = vmul.f32 %v2635, %v2672
    %v2955 = vmul.f32 %v2636, %v2676
    %v2956 = vmul.f32 %v2637, %v2680
    %v2957 = vmul.f32 %v2638, %v2684
    %v2958 = vmul.f32 %v2639, %v2688
    %v2959 = vmul.f32 %v2640, %v2668
    %v2960 = vmul.f32 %v2641, %v2672
    %v2961 = vmul.f32 %v2642, %v2676
    %v2962 = vmul.f32 %v2643, %v2680
    %v2963 = vmul.f32 %v2644, %v2684
    %v2964 = vmul.f32 %v2645, %v2688
    %v2965 = vmul.f32 %v2646, %v2668
    %v2966 = vmul.f32 %v2647, %v2672
    %v2967 = vmul.f32 %v2648, %v2676
    %v2968 = vmul.f32 %v2649, %v2680
    %v2969 = vmul.f32 %v2650, %v2684
    %v2970 = vmul.f32 %v2651, %v2688
    %v2971 = vmul.f32 %v2652, %v2668
    %v2972 = vmul.f32 %v2653, %v2672
    %v2973 = vmul.f32 %v2654, %v2676
    %v2974 = vmul.f32 %v2655, %v2680
    %v2975 = vmul.f32 %v2656, %v2684
    %v2976 = vmul.f32 %v2657, %v2688
    %v2977 = vmul.f32 %v2658, %v2668
    %v2978 = vmul.f32 %v2659, %v2672
    %v2979 = vmul.f32 %v2660, %v2676
    %v2980 = vmul.f32 %v2661, %v2680
    %v2981 = vmul.f32 %v2662, %v2684
    %v2982 = vmul.f32 %v2663, %v2688
    %v2984 = vlaneseq
    %v2985 = vshrl.u32 %v2984, 7
    %v2986 = vsub.s32 0, %v2985
    %v2987 = vrot.slane %v2375, %v2986
    %v2988 = vlaneseq
    %v2989 = vshrl.u32 %v2988, 7
    %v2990 = vsub.s32 1, %v2989
    %v2991 = vrot.slane %v2375, %v2990
    %v2992 = vlaneseq
    %v2993 = vshrl.u32 %v2992, 7
    %v2994 = vsub.s32 2, %v2993
    %v2995 = vrot.slane %v2375, %v2994
    %v2996 = vlaneseq
    %v2997 = vshrl.u32 %v2996, 7
    %v2998 = vsub.s32 3, %v2997
    %v2999 = vrot.slane %v2375, %v2998
    %v3000 = vlaneseq
    %v3001 = vshrl.u32 %v3000, 7
    %v3002 = vsub.s32 4, %v3001
    %v3003 = vrot.slane %v2375, %v3002
    %v3004 = vlaneseq
    %v3005 = vshrl.u32 %v3004, 7
    %v3006 = vsub.s32 5, %v3005
    %v3007 = vrot.slane %v2375, %v3006
    %v3014 = vadd.f32 %v2695, %v2987
    %v3015 = vadd.f32 %v2696, %v2991
    %v3016 = vadd.f32 %v2697, %v2995
    %v3017 = vadd.f32 %v2698, %v2999
    %v3018 = vadd.f32 %v2699, %v3003
    %v3019 = vadd.f32 %v2700, %v3007
    %v3020 = vadd.f32 %v2701, %v2987
    %v3021 = vadd.f32 %v2702, %v2991
    %v3022 = vadd.f32 %v2703, %v2995
    %v3023 = vadd.f32 %v2704, %v2999
    %v3024 = vadd.f32 %v2705, %v3003
    %v3025 = vadd.f32 %v2706, %v3007
    %v3026 = vadd.f32 %v2707, %v2987
    %v3027 = vadd.f32 %v2708, %v2991
    %v3028 = vadd.f32 %v2709, %v2995
    %v3029 = vadd.f32 %v2710, %v2999
    %v3030 = vadd.f32 %v2711, %v3003
    %v3031 = vadd.f32 %v2712, %v3007
    %v3032 = vadd.f32 %v2713, %v2987
    %v3033 = vadd.f32 %v2714, %v2991
    %v3034 = vadd.f32 %v2715, %v2995
    %v3035 = vadd.f32 %v2716, %v2999
    %v3036 = vadd.f32 %v2717, %v3003
    %v3037 = vadd.f32 %v2718, %v3007
    %v3038 = vadd.f32 %v2719, %v2987
    %v3039 = vadd.f32 %v2720, %v2991
    %v3040 = vadd.f32 %v2721, %v2995
    %v3041 = vadd.f32 %v2722, %v2999
    %v3042 = vadd.f32 %v2723, %v3003
    %v3043 = vadd.f32 %v2724, %v3007
    %v3044 = vadd.f32 %v2725, %v2987
    %v3045 = vadd.f32 %v2726, %v2991
    %v3046 = vadd.f32 %v2727, %v2995
    %v3047 = vadd.f32 %v2728, %v2999
    %v3048 = vadd.f32 %v2729, %v3003
    %v3049 = vadd.f32 %v2730, %v3007
    %v3050 = vadd.f32 %v2731, %v2987
    %v3051 = vadd.f32 %v2732, %v2991
    %v3052 = vadd.f32 %v2733, %v2995
    %v3053 = vadd.f32 %v2734, %v2999
    %v3054 = vadd.f32 %v2735, %v3003
    %v3055 = vadd.f32 %v2736, %v3007
    %v3056 = vadd.f32 %v2737, %v2987
    %v3057 = vadd.f32 %v2738, %v2991
    %v3058 = vadd.f32 %v2739, %v2995
    %v3059 = vadd.f32 %v2740, %v2999
    %v3060 = vadd.f32 %v2741, %v3003
    %v3061 = vadd.f32 %v2742, %v3007
    %v3062 = vadd.f32 %v2743, %v2987
    %v3063 = vadd.f32 %v2744, %v2991
    %v3064 = vadd.f32 %v2745, %v2995
    %v3065 = vadd.f32 %v2746, %v2999
    %v3066 = vadd.f32 %v2747, %v3003
    %v3067 = vadd.f32 %v2748, %v3007
    %v3068 = vadd.f32 %v2749, %v2987
    %v3069 = vadd.f32 %v2750, %v2991
    %v3070 = vadd.f32 %v2751, %v2995
    %v3071 = vadd.f32 %v2752, %v2999
    %v3072 = vadd.f32 %v2753, %v3003
    %v3073 = vadd.f32 %v2754, %v3007
    %v3074 = vadd.f32 %v2755, %v2987
    %v3075 = vadd.f32 %v2756, %v2991
    %v3076 = vadd.f32 %v2757, %v2995
    %v3077 = vadd.f32 %v2758, %v2999
    %v3078 = vadd.f32 %v2759, %v3003
    %v3079 = vadd.f32 %v2760, %v3007
    %v3080 = vadd.f32 %v2761, %v2987
    %v3081 = vadd.f32 %v2762, %v2991
    %v3082 = vadd.f32 %v2763, %v2995
    %v3083 = vadd.f32 %v2764, %v2999
    %v3084 = vadd.f32 %v2765, %v3003
    %v3085 = vadd.f32 %v2766, %v3007
    %v3086 = vadd.f32 %v2767, %v2987
    %v3087 = vadd.f32 %v2768, %v2991
    %v3088 = vadd.f32 %v2769, %v2995
    %v3089 = vadd.f32 %v2770, %v2999
    %v3090 = vadd.f32 %v2771, %v3003
    %v3091 = vadd.f32 %v2772, %v3007
    %v3092 = vadd.f32 %v2773, %v2987
    %v3093 = vadd.f32 %v2774, %v2991
    %v3094 = vadd.f32 %v2775, %v2995
    %v3095 = vadd.f32 %v2776, %v2999
    %v3096 = vadd.f32 %v2777, %v3003
    %v3097 = vadd.f32 %v2778, %v3007
    %v3098 = vadd.f32 %v2779, %v2987
    %v3099 = vadd.f32 %v2780, %v2991
    %v3100 = vadd.f32 %v2781, %v2995
    %v3101 = vadd.f32 %v2782, %v2999
    %v3102 = vadd.f32 %v2783, %v3003
    %v3103 = vadd.f32 %v2784, %v3007
    %v3104 = vadd.f32 %v2785, %v2987
    %v3105 = vadd.f32 %v2786, %v2991
    %v3106 = vadd.f32 %v2787, %v2995
    %v3107 = vadd.f32 %v2788, %v2999
    %v3108 = vadd.f32 %v2789, %v3003
    %v3109 = vadd.f32 %v2790, %v3007
    %v3110 = vadd.f32 %v2791, %v2987
    %v3111 = vadd.f32 %v2792, %v2991
    %v3112 = vadd.f32 %v2793, %v2995
    %v3113 = vadd.f32 %v2794, %v2999
    %v3114 = vadd.f32 %v2795, %v3003
    %v3115 = vadd.f32 %v2796, %v3007
    %v3116 = vadd.f32 %v2797, %v2987
    %v3117 = vadd.f32 %v2798, %v2991
    %v3118 = vadd.f32 %v2799, %v2995
    %v3119 = vadd.f32 %v2800, %v2999
    %v3120 = vadd.f32 %v2801, %v3003
    %v3121 = vadd.f32 %v2802, %v3007
    %v3122 = vadd.f32 %v2803, %v2987
    %v3123 = vadd.f32 %v2804, %v2991
    %v3124 = vadd.f32 %v2805, %v2995
    %v3125 = vadd.f32 %v2806, %v2999
    %v3126 = vadd.f32 %v2807, %v3003
    %v3127 = vadd.f32 %v2808, %v3007
    %v3128 = vadd.f32 %v2809, %v2987
    %v3129 = vadd.f32 %v2810, %v2991
    %v3130 = vadd.f32 %v2811, %v2995
    %v3131 = vadd.f32 %v2812, %v2999
    %v3132 = vadd.f32 %v2813, %v3003
    %v3133 = vadd.f32 %v2814, %v3007
    %v3134 = vadd.f32 %v2815, %v2987
    %v3135 = vadd.f32 %v2816, %v2991
    %v3136 = vadd.f32 %v2817, %v2995
    %v3137 = vadd.f32 %v2818, %v2999
    %v3138 = vadd.f32 %v2819, %v3003
    %v3139 = vadd.f32 %v2820, %v3007
    %v3140 = vadd.f32 %v2821, %v2987
    %v3141 = vadd.f32 %v2822, %v2991
    %v3142 = vadd.f32 %v2823, %v2995
    %v3143 = vadd.f32 %v2824, %v2999
    %v3144 = vadd.f32 %v2825, %v3003
    %v3145 = vadd.f32 %v2826, %v3007
    %v3146 = vadd.f32 %v2827, %v2987
    %v3147 = vadd.f32 %v2828, %v2991
    %v3148 = vadd.f32 %v2829, %v2995
    %v3149 = vadd.f32 %v2830, %v2999
    %v3150 = vadd.f32 %v2831, %v3003
    %v3151 = vadd.f32 %v2832, %v3007
    %v3152 = vadd.f32 %v2833, %v2987
    %v3153 = vadd.f32 %v2834, %v2991
    %v3154 = vadd.f32 %v2835, %v2995
    %v3155 = vadd.f32 %v2836, %v2999
    %v3156 = vadd.f32 %v2837, %v3003
    %v3157 = vadd.f32 %v2838, %v3007
    %v3158 = vadd.f32 %v2839, %v2987
    %v3159 = vadd.f32 %v2840, %v2991
    %v3160 = vadd.f32 %v2841, %v2995
    %v3161 = vadd.f32 %v2842, %v2999
    %v3162 = vadd.f32 %v2843, %v3003
    %v3163 = vadd.f32 %v2844, %v3007
    %v3164 = vadd.f32 %v2845, %v2987
    %v3165 = vadd.f32 %v2846, %v2991
    %v3166 = vadd.f32 %v2847, %v2995
    %v3167 = vadd.f32 %v2848, %v2999
    %v3168 = vadd.f32 %v2849, %v3003
    %v3169 = vadd.f32 %v2850, %v3007
    %v3170 = vadd.f32 %v2851, %v2987
    %v3171 = vadd.f32 %v2852, %v2991
    %v3172 = vadd.f32 %v2853, %v2995
    %v3173 = vadd.f32 %v2854, %v2999
    %v3174 = vadd.f32 %v2855, %v3003
    %v3175 = vadd.f32 %v2856, %v3007
    %v3176 = vadd.f32 %v2857, %v2987
    %v3177 = vadd.f32 %v2858, %v2991
    %v3178 = vadd.f32 %v2859, %v2995
    %v3179 = vadd.f32 %v2860, %v2999
    %v3180 = vadd.f32 %v2861, %v3003
    %v3181 = vadd.f32 %v2862, %v3007
    %v3182 = vadd.f32 %v2863, %v2987
    %v3183 = vadd.f32 %v2864, %v2991
    %v3184 = vadd.f32 %v2865, %v2995
    %v3185 = vadd.f32 %v2866, %v2999
    %v3186 = vadd.f32 %v2867, %v3003
    %v3187 = vadd.f32 %v2868, %v3007
    %v3188 = vadd.f32 %v2869, %v2987
    %v3189 = vadd.f32 %v2870, %v2991
    %v3190 = vadd.f32 %v2871, %v2995
    %v3191 = vadd.f32 %v2872, %v2999
    %v3192 = vadd.f32 %v2873, %v3003
    %v3193 = vadd.f32 %v2874, %v3007
    %v3194 = vadd.f32 %v2875, %v2987
    %v3195 = vadd.f32 %v2876, %v2991
    %v3196 = vadd.f32 %v2877, %v2995
    %v3197 = vadd.f32 %v2878, %v2999
    %v3198 = vadd.f32 %v2879, %v3003
    %v3199 = vadd.f32 %v2880, %v3007
    %v3200 = vadd.f32 %v2881, %v2987
    %v3201 = vadd.f32 %v2882, %v2991
    %v3202 = vadd.f32 %v2883, %v2995
    %v3203 = vadd.f32 %v2884, %v2999
    %v3204 = vadd.f32 %v2885, %v3003
    %v3205 = vadd.f32 %v2886, %v3007
    %v3206 = vadd.f32 %v2887, %v2987
    %v3207 = vadd.f32 %v2888, %v2991
    %v3208 = vadd.f32 %v2889, %v2995
    %v3209 = vadd.f32 %v2890, %v2999
    %v3210 = vadd.f32 %v2891, %v3003
    %v3211 = vadd.f32 %v2892, %v3007
    %v3212 = vadd.f32 %v2893, %v2987
    %v3213 = vadd.f32 %v2894, %v2991
    %v3214 = vadd.f32 %v2895, %v2995
    %v3215 = vadd.f32 %v2896, %v2999
    %v3216 = vadd.f32 %v2897, %v3003
    %v3217 = vadd.f32 %v2898, %v3007
    %v3218 = vadd.f32 %v2899, %v2987
    %v3219 = vadd.f32 %v2900, %v2991
    %v3220 = vadd.f32 %v2901, %v2995
    %v3221 = vadd.f32 %v2902, %v2999
    %v3222 = vadd.f32 %v2903, %v3003
    %v3223 = vadd.f32 %v2904, %v3007
    %v3224 = vadd.f32 %v2905, %v2987
    %v3225 = vadd.f32 %v2906, %v2991
    %v3226 = vadd.f32 %v2907, %v2995
    %v3227 = vadd.f32 %v2908, %v2999
    %v3228 = vadd.f32 %v2909, %v3003
    %v3229 = vadd.f32 %v2910, %v3007
    %v3230 = vadd.f32 %v2911, %v2987
    %v3231 = vadd.f32 %v2912, %v2991
    %v3232 = vadd.f32 %v2913, %v2995
    %v3233 = vadd.f32 %v2914, %v2999
    %v3234 = vadd.f32 %v2915, %v3003
    %v3235 = vadd.f32 %v2916, %v3007
    %v3236 = vadd.f32 %v2917, %v2987
    %v3237 = vadd.f32 %v2918, %v2991
    %v3238 = vadd.f32 %v2919, %v2995
    %v3239 = vadd.f32 %v2920, %v2999
    %v3240 = vadd.f32 %v2921, %v3003
    %v3241 = vadd.f32 %v2922, %v3007
    %v3242 = vadd.f32 %v2923, %v2987
    %v3243 = vadd.f32 %v2924, %v2991
    %v3244 = vadd.f32 %v2925, %v2995
    %v3245 = vadd.f32 %v2926, %v2999
    %v3246 = vadd.f32 %v2927, %v3003
    %v3247 = vadd.f32 %v2928, %v3007
    %v3248 = vadd.f32 %v2929, %v2987
    %v3249 = vadd.f32 %v2930, %v2991
    %v3250 = vadd.f32 %v2931, %v2995
    %v3251 = vadd.f32 %v2932, %v2999
    %v3252 = vadd.f32 %v2933, %v3003
    %v3253 = vadd.f32 %v2934, %v3007
    %v3254 = vadd.f32 %v2935, %v2987
    %v3255 = vadd.f32 %v2936, %v2991
    %v3256 = vadd.f32 %v2937, %v2995
    %v3257 = vadd.f32 %v2938, %v2999
    %v3258 = vadd.f32 %v2939, %v3003
    %v3259 = vadd.f32 %v2940, %v3007
    %v3260 = vadd.f32 %v2941, %v2987
    %v3261 = vadd.f32 %v2942, %v2991
    %v3262 = vadd.f32 %v2943, %v2995
    %v3263 = vadd.f32 %v2944, %v2999
    %v3264 = vadd.f32 %v2945, %v3003
    %v3265 = vadd.f32 %v2946, %v3007
    %v3266 = vadd.f32 %v2947, %v2987
    %v3267 = vadd.f32 %v2948, %v2991
    %v3268 = vadd.f32 %v2949, %v2995
    %v3269 = vadd.f32 %v2950, %v2999
    %v3270 = vadd.f32 %v2951, %v3003
    %v3271 = vadd.f32 %v2952, %v3007
    %v3272 = vadd.f32 %v2953, %v2987
    %v3273 = vadd.f32 %v2954, %v2991
    %v3274 = vadd.f32 %v2955, %v2995
    %v3275 = vadd.f32 %v2956, %v2999
    %v3276 = vadd.f32 %v2957, %v3003
    %v3277 = vadd.f32 %v2958, %v3007
    %v3278 = vadd.f32 %v2959, %v2987
    %v3279 = vadd.f32 %v2960, %v2991
    %v3280 = vadd.f32 %v2961, %v2995
    %v3281 = vadd.f32 %v2962, %v2999
    %v3282 = vadd.f32 %v2963, %v3003
    %v3283 = vadd.f32 %v2964, %v3007
    %v3284 = vadd.f32 %v2965, %v2987
    %v3285 = vadd.f32 %v2966, %v2991
    %v3286 = vadd.f32 %v2967, %v2995
    %v3287 = vadd.f32 %v2968, %v2999
    %v3288 = vadd.f32 %v2969, %v3003
    %v3289 = vadd.f32 %v2970, %v3007
    %v3290 = vadd.f32 %v2971, %v2987
    %v3291 = vadd.f32 %v2972, %v2991
    %v3292 = vadd.f32 %v2973, %v2995
    %v3293 = vadd.f32 %v2974, %v2999
    %v3294 = vadd.f32 %v2975, %v3003
    %v3295 = vadd.f32 %v2976, %v3007
    %v3296 = vadd.f32 %v2977, %v2987
    %v3297 = vadd.f32 %v2978, %v2991
    %v3298 = vadd.f32 %v2979, %v2995
    %v3299 = vadd.f32 %v2980, %v2999
    %v3300 = vadd.f32 %v2981, %v3003
    %v3301 = vadd.f32 %v2982, %v3007
    %3302 = vst [vmem:[#allocation10] sm:$0xff] %v3014
    %3303 = vst [vmem:[#allocation10 + $0x8] sm:$0xff] %v3015
    %3304 = vst [vmem:[#allocation10 + $0x10] sm:$0xff] %v3016
    %3305 = vst [vmem:[#allocation10 + $0x18] sm:$0xff] %v3017
    %3306 = vst [vmem:[#allocation10 + $0x20] sm:$0xff] %v3018
    %3307 = vst [vmem:[#allocation10 + $0x28] sm:$0xff] %v3019
    %3308 = vst [vmem:[#allocation10 + $0x30] sm:$0xff] %v3020
    %3309 = vst [vmem:[#allocation10 + $0x38] sm:$0xff] %v3021
    %3310 = vst [vmem:[#allocation10 + $0x40] sm:$0xff] %v3022
    %3311 = vst [vmem:[#allocation10 + $0x48] sm:$0xff] %v3023
    %3312 = vst [vmem:[#allocation10 + $0x50] sm:$0xff] %v3024
    %3313 = vst [vmem:[#allocation10 + $0x58] sm:$0xff] %v3025
    %3314 = vst [vmem:[#allocation10 + $0x60] sm:$0xff] %v3026
    %3315 = vst [vmem:[#allocation10 + $0x68] sm:$0xff] %v3027
    %3316 = vst [vmem:[#allocation10 + $0x70] sm:$0xff] %v3028
    %3317 = vst [vmem:[#allocation10 + $0x78] sm:$0xff] %v3029
    %3318 = vst [vmem:[#allocation10 + $0x80] sm:$0xff] %v3030
    %3319 = vst [vmem:[#allocation10 + $0x88] sm:$0xff] %v3031
    %3320 = vst [vmem:[#allocation10 + $0x90] sm:$0xff] %v3032
    %3321 = vst [vmem:[#allocation10 + $0x98] sm:$0xff] %v3033
    %3322 = vst [vmem:[#allocation10 + $0xa0] sm:$0xff] %v3034
    %3323 = vst [vmem:[#allocation10 + $0xa8] sm:$0xff] %v3035
    %3324 = vst [vmem:[#allocation10 + $0xb0] sm:$0xff] %v3036
    %3325 = vst [vmem:[#allocation10 + $0xb8] sm:$0xff] %v3037
    %3326 = vst [vmem:[#allocation10 + $0xc0] sm:$0xff] %v3038
    %3327 = vst [vmem:[#allocation10 + $0xc8] sm:$0xff] %v3039
    %3328 = vst [vmem:[#allocation10 + $0xd0] sm:$0xff] %v3040
    %3329 = vst [vmem:[#allocation10 + $0xd8] sm:$0xff] %v3041
    %3330 = vst [vmem:[#allocation10 + $0xe0] sm:$0xff] %v3042
    %3331 = vst [vmem:[#allocation10 + $0xe8] sm:$0xff] %v3043
    %3332 = vst [vmem:[#allocation10 + $0xf0] sm:$0xff] %v3044
    %3333 = vst [vmem:[#allocation10 + $0xf8] sm:$0xff] %v3045
    %3334 = vst [vmem:[#allocation10 + $0x100] sm:$0xff] %v3046
    %3335 = vst [vmem:[#allocation10 + $0x108] sm:$0xff] %v3047
    %3336 = vst [vmem:[#allocation10 + $0x110] sm:$0xff] %v3048
    %3337 = vst [vmem:[#allocation10 + $0x118] sm:$0xff] %v3049
    %3338 = vst [vmem:[#allocation10 + $0x120] sm:$0xff] %v3050
    %3339 = vst [vmem:[#allocation10 + $0x128] sm:$0xff] %v3051
    %3340 = vst [vmem:[#allocation10 + $0x130] sm:$0xff] %v3052
    %3341 = vst [vmem:[#allocation10 + $0x138] sm:$0xff] %v3053
    %3342 = vst [vmem:[#allocation10 + $0x140] sm:$0xff] %v3054
    %3343 = vst [vmem:[#allocation10 + $0x148] sm:$0xff] %v3055
    %3344 = vst [vmem:[#allocation10 + $0x150] sm:$0xff] %v3056
    %3345 = vst [vmem:[#allocation10 + $0x158] sm:$0xff] %v3057
    %3346 = vst [vmem:[#allocation10 + $0x160] sm:$0xff] %v3058
    %3347 = vst [vmem:[#allocation10 + $0x168] sm:$0xff] %v3059
    %3348 = vst [vmem:[#allocation10 + $0x170] sm:$0xff] %v3060
    %3349 = vst [vmem:[#allocation10 + $0x178] sm:$0xff] %v3061
    %3350 = vst [vmem:[#allocation10 + $0x180] sm:$0xff] %v3062
    %3351 = vst [vmem:[#allocation10 + $0x188] sm:$0xff] %v3063
    %3352 = vst [vmem:[#allocation10 + $0x190] sm:$0xff] %v3064
    %3353 = vst [vmem:[#allocation10 + $0x198] sm:$0xff] %v3065
    %3354 = vst [vmem:[#allocation10 + $0x1a0] sm:$0xff] %v3066
    %3355 = vst [vmem:[#allocation10 + $0x1a8] sm:$0xff] %v3067
    %3356 = vst [vmem:[#allocation10 + $0x1b0] sm:$0xff] %v3068
    %3357 = vst [vmem:[#allocation10 + $0x1b8] sm:$0xff] %v3069
    %3358 = vst [vmem:[#allocation10 + $0x1c0] sm:$0xff] %v3070
    %3359 = vst [vmem:[#allocation10 + $0x1c8] sm:$0xff] %v3071
    %3360 = vst [vmem:[#allocation10 + $0x1d0] sm:$0xff] %v3072
    %3361 = vst [vmem:[#allocation10 + $0x1d8] sm:$0xff] %v3073
    %3362 = vst [vmem:[#allocation10 + $0x1e0] sm:$0xff] %v3074
    %3363 = vst [vmem:[#allocation10 + $0x1e8] sm:$0xff] %v3075
    %3364 = vst [vmem:[#allocation10 + $0x1f0] sm:$0xff] %v3076
    %3365 = vst [vmem:[#allocation10 + $0x1f8] sm:$0xff] %v3077
    %3366 = vst [vmem:[#allocation10 + $0x200] sm:$0xff] %v3078
    %3367 = vst [vmem:[#allocation10 + $0x208] sm:$0xff] %v3079
    %3368 = vst [vmem:[#allocation10 + $0x210] sm:$0xff] %v3080
    %3369 = vst [vmem:[#allocation10 + $0x218] sm:$0xff] %v3081
    %3370 = vst [vmem:[#allocation10 + $0x220] sm:$0xff] %v3082
    %3371 = vst [vmem:[#allocation10 + $0x228] sm:$0xff] %v3083
    %3372 = vst [vmem:[#allocation10 + $0x230] sm:$0xff] %v3084
    %3373 = vst [vmem:[#allocation10 + $0x238] sm:$0xff] %v3085
    %3374 = vst [vmem:[#allocation10 + $0x240] sm:$0xff] %v3086
    %3375 = vst [vmem:[#allocation10 + $0x248] sm:$0xff] %v3087
    %3376 = vst [vmem:[#allocation10 + $0x250] sm:$0xff] %v3088
    %3377 = vst [vmem:[#allocation10 + $0x258] sm:$0xff] %v3089
    %3378 = vst [vmem:[#allocation10 + $0x260] sm:$0xff] %v3090
    %3379 = vst [vmem:[#allocation10 + $0x268] sm:$0xff] %v3091
    %3380 = vst [vmem:[#allocation10 + $0x270] sm:$0xff] %v3092
    %3381 = vst [vmem:[#allocation10 + $0x278] sm:$0xff] %v3093
    %3382 = vst [vmem:[#allocation10 + $0x280] sm:$0xff] %v3094
    %3383 = vst [vmem:[#allocation10 + $0x288] sm:$0xff] %v3095
    %3384 = vst [vmem:[#allocation10 + $0x290] sm:$0xff] %v3096
    %3385 = vst [vmem:[#allocation10 + $0x298] sm:$0xff] %v3097
    %3386 = vst [vmem:[#allocation10 + $0x2a0] sm:$0xff] %v3098
    %3387 = vst [vmem:[#allocation10 + $0x2a8] sm:$0xff] %v3099
    %3388 = vst [vmem:[#allocation10 + $0x2b0] sm:$0xff] %v3100
    %3389 = vst [vmem:[#allocation10 + $0x2b8] sm:$0xff] %v3101
    %3390 = vst [vmem:[#allocation10 + $0x2c0] sm:$0xff] %v3102
    %3391 = vst [vmem:[#allocation10 + $0x2c8] sm:$0xff] %v3103
    %3392 = vst [vmem:[#allocation10 + $0x2d0] sm:$0xff] %v3104
    %3393 = vst [vmem:[#allocation10 + $0x2d8] sm:$0xff] %v3105
    %3394 = vst [vmem:[#allocation10 + $0x2e0] sm:$0xff] %v3106
    %3395 = vst [vmem:[#allocation10 + $0x2e8] sm:$0xff] %v3107
    %3396 = vst [vmem:[#allocation10 + $0x2f0] sm:$0xff] %v3108
    %3397 = vst [vmem:[#allocation10 + $0x2f8] sm:$0xff] %v3109
    %3398 = vst [vmem:[#allocation10 + $0x300] sm:$0xff] %v3110
    %3399 = vst [vmem:[#allocation10 + $0x308] sm:$0xff] %v3111
    %3400 = vst [vmem:[#allocation10 + $0x310] sm:$0xff] %v3112
    %3401 = vst [vmem:[#allocation10 + $0x318] sm:$0xff] %v3113
    %3402 = vst [vmem:[#allocation10 + $0x320] sm:$0xff] %v3114
    %3403 = vst [vmem:[#allocation10 + $0x328] sm:$0xff] %v3115
    %3404 = vst [vmem:[#allocation10 + $0x330] sm:$0xff] %v3116
    %3405 = vst [vmem:[#allocation10 + $0x338] sm:$0xff] %v3117
    %3406 = vst [vmem:[#allocation10 + $0x340] sm:$0xff] %v3118
    %3407 = vst [vmem:[#allocation10 + $0x348] sm:$0xff] %v3119
    %3408 = vst [vmem:[#allocation10 + $0x350] sm:$0xff] %v3120
    %3409 = vst [vmem:[#allocation10 + $0x358] sm:$0xff] %v3121
    %3410 = vst [vmem:[#allocation10 + $0x360] sm:$0xff] %v3122
    %3411 = vst [vmem:[#allocation10 + $0x368] sm:$0xff] %v3123
    %3412 = vst [vmem:[#allocation10 + $0x370] sm:$0xff] %v3124
    %3413 = vst [vmem:[#allocation10 + $0x378] sm:$0xff] %v3125
    %3414 = vst [vmem:[#allocation10 + $0x380] sm:$0xff] %v3126
    %3415 = vst [vmem:[#allocation10 + $0x388] sm:$0xff] %v3127
    %3416 = vst [vmem:[#allocation10 + $0x390] sm:$0xff] %v3128
    %3417 = vst [vmem:[#allocation10 + $0x398] sm:$0xff] %v3129
    %3418 = vst [vmem:[#allocation10 + $0x3a0] sm:$0xff] %v3130
    %3419 = vst [vmem:[#allocation10 + $0x3a8] sm:$0xff] %v3131
    %3420 = vst [vmem:[#allocation10 + $0x3b0] sm:$0xff] %v3132
    %3421 = vst [vmem:[#allocation10 + $0x3b8] sm:$0xff] %v3133
    %3422 = vst [vmem:[#allocation10 + $0x3c0] sm:$0xff] %v3134
    %3423 = vst [vmem:[#allocation10 + $0x3c8] sm:$0xff] %v3135
    %3424 = vst [vmem:[#allocation10 + $0x3d0] sm:$0xff] %v3136
    %3425 = vst [vmem:[#allocation10 + $0x3d8] sm:$0xff] %v3137
    %3426 = vst [vmem:[#allocation10 + $0x3e0] sm:$0xff] %v3138
    %3427 = vst [vmem:[#allocation10 + $0x3e8] sm:$0xff] %v3139
    %3428 = vst [vmem:[#allocation10 + $0x3f0] sm:$0xff] %v3140
    %3429 = vst [vmem:[#allocation10 + $0x3f8] sm:$0xff] %v3141
    %3430 = vst [vmem:[#allocation10 + $0x400] sm:$0xff] %v3142
    %3431 = vst [vmem:[#allocation10 + $0x408] sm:$0xff] %v3143
    %3432 = vst [vmem:[#allocation10 + $0x410] sm:$0xff] %v3144
    %3433 = vst [vmem:[#allocation10 + $0x418] sm:$0xff] %v3145
    %3434 = vst [vmem:[#allocation10 + $0x420] sm:$0xff] %v3146
    %3435 = vst [vmem:[#allocation10 + $0x428] sm:$0xff] %v3147
    %3436 = vst [vmem:[#allocation10 + $0x430] sm:$0xff] %v3148
    %3437 = vst [vmem:[#allocation10 + $0x438] sm:$0xff] %v3149
    %3438 = vst [vmem:[#allocation10 + $0x440] sm:$0xff] %v3150
    %3439 = vst [vmem:[#allocation10 + $0x448] sm:$0xff] %v3151
    %3440 = vst [vmem:[#allocation10 + $0x450] sm:$0xff] %v3152
    %3441 = vst [vmem:[#allocation10 + $0x458] sm:$0xff] %v3153
    %3442 = vst [vmem:[#allocation10 + $0x460] sm:$0xff] %v3154
    %3443 = vst [vmem:[#allocation10 + $0x468] sm:$0xff] %v3155
    %3444 = vst [vmem:[#allocation10 + $0x470] sm:$0xff] %v3156
    %3445 = vst [vmem:[#allocation10 + $0x478] sm:$0xff] %v3157
    %3446 = vst [vmem:[#allocation10 + $0x480] sm:$0xff] %v3158
    %3447 = vst [vmem:[#allocation10 + $0x488] sm:$0xff] %v3159
    %3448 = vst [vmem:[#allocation10 + $0x490] sm:$0xff] %v3160
    %3449 = vst [vmem:[#allocation10 + $0x498] sm:$0xff] %v3161
    %3450 = vst [vmem:[#allocation10 + $0x4a0] sm:$0xff] %v3162
    %3451 = vst [vmem:[#allocation10 + $0x4a8] sm:$0xff] %v3163
    %3452 = vst [vmem:[#allocation10 + $0x4b0] sm:$0xff] %v3164
    %3453 = vst [vmem:[#allocation10 + $0x4b8] sm:$0xff] %v3165
    %3454 = vst [vmem:[#allocation10 + $0x4c0] sm:$0xff] %v3166
    %3455 = vst [vmem:[#allocation10 + $0x4c8] sm:$0xff] %v3167
    %3456 = vst [vmem:[#allocation10 + $0x4d0] sm:$0xff] %v3168
    %3457 = vst [vmem:[#allocation10 + $0x4d8] sm:$0xff] %v3169
    %3458 = vst [vmem:[#allocation10 + $0x4e0] sm:$0xff] %v3170
    %3459 = vst [vmem:[#allocation10 + $0x4e8] sm:$0xff] %v3171
    %3460 = vst [vmem:[#allocation10 + $0x4f0] sm:$0xff] %v3172
    %3461 = vst [vmem:[#allocation10 + $0x4f8] sm:$0xff] %v3173
    %3462 = vst [vmem:[#allocation10 + $0x500] sm:$0xff] %v3174
    %3463 = vst [vmem:[#allocation10 + $0x508] sm:$0xff] %v3175
    %3464 = vst [vmem:[#allocation10 + $0x510] sm:$0xff] %v3176
    %3465 = vst [vmem:[#allocation10 + $0x518] sm:$0xff] %v3177
    %3466 = vst [vmem:[#allocation10 + $0x520] sm:$0xff] %v3178
    %3467 = vst [vmem:[#allocation10 + $0x528] sm:$0xff] %v3179
    %3468 = vst [vmem:[#allocation10 + $0x530] sm:$0xff] %v3180
    %3469 = vst [vmem:[#allocation10 + $0x538] sm:$0xff] %v3181
    %3470 = vst [vmem:[#allocation10 + $0x540] sm:$0xff] %v3182
    %3471 = vst [vmem:[#allocation10 + $0x548] sm:$0xff] %v3183
    %3472 = vst [vmem:[#allocation10 + $0x550] sm:$0xff] %v3184
    %3473 = vst [vmem:[#allocation10 + $0x558] sm:$0xff] %v3185
    %3474 = vst [vmem:[#allocation10 + $0x560] sm:$0xff] %v3186
    %3475 = vst [vmem:[#allocation10 + $0x568] sm:$0xff] %v3187
    %3476 = vst [vmem:[#allocation10 + $0x570] sm:$0xff] %v3188
    %3477 = vst [vmem:[#allocation10 + $0x578] sm:$0xff] %v3189
    %3478 = vst [vmem:[#allocation10 + $0x580] sm:$0xff] %v3190
    %3479 = vst [vmem:[#allocation10 + $0x588] sm:$0xff] %v3191
    %3480 = vst [vmem:[#allocation10 + $0x590] sm:$0xff] %v3192
    %3481 = vst [vmem:[#allocation10 + $0x598] sm:$0xff] %v3193
    %3482 = vst [vmem:[#allocation10 + $0x5a0] sm:$0xff] %v3194
    %3483 = vst [vmem:[#allocation10 + $0x5a8] sm:$0xff] %v3195
    %3484 = vst [vmem:[#allocation10 + $0x5b0] sm:$0xff] %v3196
    %3485 = vst [vmem:[#allocation10 + $0x5b8] sm:$0xff] %v3197
    %3486 = vst [vmem:[#allocation10 + $0x5c0] sm:$0xff] %v3198
    %3487 = vst [vmem:[#allocation10 + $0x5c8] sm:$0xff] %v3199
    %3488 = vst [vmem:[#allocation10 + $0x5d0] sm:$0xff] %v3200
    %3489 = vst [vmem:[#allocation10 + $0x5d8] sm:$0xff] %v3201
    %3490 = vst [vmem:[#allocation10 + $0x5e0] sm:$0xff] %v3202
    %3491 = vst [vmem:[#allocation10 + $0x5e8] sm:$0xff] %v3203
    %3492 = vst [vmem:[#allocation10 + $0x5f0] sm:$0xff] %v3204
    %3493 = vst [vmem:[#allocation10 + $0x5f8] sm:$0xff] %v3205
    %3494 = vst [vmem:[#allocation10 + $0x600] sm:$0xff] %v3206
    %3495 = vst [vmem:[#allocation10 + $0x608] sm:$0xff] %v3207
    %3496 = vst [vmem:[#allocation10 + $0x610] sm:$0xff] %v3208
    %3497 = vst [vmem:[#allocation10 + $0x618] sm:$0xff] %v3209
    %3498 = vst [vmem:[#allocation10 + $0x620] sm:$0xff] %v3210
    %3499 = vst [vmem:[#allocation10 + $0x628] sm:$0xff] %v3211
    %3500 = vst [vmem:[#allocation10 + $0x630] sm:$0xff] %v3212
    %3501 = vst [vmem:[#allocation10 + $0x638] sm:$0xff] %v3213
    %3502 = vst [vmem:[#allocation10 + $0x640] sm:$0xff] %v3214
    %3503 = vst [vmem:[#allocation10 + $0x648] sm:$0xff] %v3215
    %3504 = vst [vmem:[#allocation10 + $0x650] sm:$0xff] %v3216
    %3505 = vst [vmem:[#allocation10 + $0x658] sm:$0xff] %v3217
    %3506 = vst [vmem:[#allocation10 + $0x660] sm:$0xff] %v3218
    %3507 = vst [vmem:[#allocation10 + $0x668] sm:$0xff] %v3219
    %3508 = vst [vmem:[#allocation10 + $0x670] sm:$0xff] %v3220
    %3509 = vst [vmem:[#allocation10 + $0x678] sm:$0xff] %v3221
    %3510 = vst [vmem:[#allocation10 + $0x680] sm:$0xff] %v3222
    %3511 = vst [vmem:[#allocation10 + $0x688] sm:$0xff] %v3223
    %3512 = vst [vmem:[#allocation10 + $0x690] sm:$0xff] %v3224
    %3513 = vst [vmem:[#allocation10 + $0x698] sm:$0xff] %v3225
    %3514 = vst [vmem:[#allocation10 + $0x6a0] sm:$0xff] %v3226
    %3515 = vst [vmem:[#allocation10 + $0x6a8] sm:$0xff] %v3227
    %3516 = vst [vmem:[#allocation10 + $0x6b0] sm:$0xff] %v3228
    %3517 = vst [vmem:[#allocation10 + $0x6b8] sm:$0xff] %v3229
    %3518 = vst [vmem:[#allocation10 + $0x6c0] sm:$0xff] %v3230
    %3519 = vst [vmem:[#allocation10 + $0x6c8] sm:$0xff] %v3231
    %3520 = vst [vmem:[#allocation10 + $0x6d0] sm:$0xff] %v3232
    %3521 = vst [vmem:[#allocation10 + $0x6d8] sm:$0xff] %v3233
    %3522 = vst [vmem:[#allocation10 + $0x6e0] sm:$0xff] %v3234
    %3523 = vst [vmem:[#allocation10 + $0x6e8] sm:$0xff] %v3235
    %3524 = vst [vmem:[#allocation10 + $0x6f0] sm:$0xff] %v3236
    %3525 = vst [vmem:[#allocation10 + $0x6f8] sm:$0xff] %v3237
    %3526 = vst [vmem:[#allocation10 + $0x700] sm:$0xff] %v3238
    %3527 = vst [vmem:[#allocation10 + $0x708] sm:$0xff] %v3239
    %3528 = vst [vmem:[#allocation10 + $0x710] sm:$0xff] %v3240
    %3529 = vst [vmem:[#allocation10 + $0x718] sm:$0xff] %v3241
    %3530 = vst [vmem:[#allocation10 + $0x720] sm:$0xff] %v3242
    %3531 = vst [vmem:[#allocation10 + $0x728] sm:$0xff] %v3243
    %3532 = vst [vmem:[#allocation10 + $0x730] sm:$0xff] %v3244
    %3533 = vst [vmem:[#allocation10 + $0x738] sm:$0xff] %v3245
    %3534 = vst [vmem:[#allocation10 + $0x740] sm:$0xff] %v3246
    %3535 = vst [vmem:[#allocation10 + $0x748] sm:$0xff] %v3247
    %3536 = vst [vmem:[#allocation10 + $0x750] sm:$0xff] %v3248
    %3537 = vst [vmem:[#allocation10 + $0x758] sm:$0xff] %v3249
    %3538 = vst [vmem:[#allocation10 + $0x760] sm:$0xff] %v3250
    %3539 = vst [vmem:[#allocation10 + $0x768] sm:$0xff] %v3251
    %3540 = vst [vmem:[#allocation10 + $0x770] sm:$0xff] %v3252
    %3541 = vst [vmem:[#allocation10 + $0x778] sm:$0xff] %v3253
    %3542 = vst [vmem:[#allocation10 + $0x780] sm:$0xff] %v3254
    %3543 = vst [vmem:[#allocation10 + $0x788] sm:$0xff] %v3255
    %3544 = vst [vmem:[#allocation10 + $0x790] sm:$0xff] %v3256
    %3545 = vst [vmem:[#allocation10 + $0x798] sm:$0xff] %v3257
    %3546 = vst [vmem:[#allocation10 + $0x7a0] sm:$0xff] %v3258
    %3547 = vst [vmem:[#allocation10 + $0x7a8] sm:$0xff] %v3259
    %3548 = vst [vmem:[#allocation10 + $0x7b0] sm:$0xff] %v3260
    %3549 = vst [vmem:[#allocation10 + $0x7b8] sm:$0xff] %v3261
    %3550 = vst [vmem:[#allocation10 + $0x7c0] sm:$0xff] %v3262
    %3551 = vst [vmem:[#allocation10 + $0x7c8] sm:$0xff] %v3263
    %3552 = vst [vmem:[#allocation10 + $0x7d0] sm:$0xff] %v3264
    %3553 = vst [vmem:[#allocation10 + $0x7d8] sm:$0xff] %v3265
    %3554 = vst [vmem:[#allocation10 + $0x7e0] sm:$0xff] %v3266
    %3555 = vst [vmem:[#allocation10 + $0x7e8] sm:$0xff] %v3267
    %3556 = vst [vmem:[#allocation10 + $0x7f0] sm:$0xff] %v3268
    %3557 = vst [vmem:[#allocation10 + $0x7f8] sm:$0xff] %v3269
    %3558 = vst [vmem:[#allocation10 + $0x800] sm:$0xff] %v3270
    %3559 = vst [vmem:[#allocation10 + $0x808] sm:$0xff] %v3271
    %3560 = vst [vmem:[#allocation10 + $0x810] sm:$0xff] %v3272
    %3561 = vst [vmem:[#allocation10 + $0x818] sm:$0xff] %v3273
    %3562 = vst [vmem:[#allocation10 + $0x820] sm:$0xff] %v3274
    %3563 = vst [vmem:[#allocation10 + $0x828] sm:$0xff] %v3275
    %3564 = vst [vmem:[#allocation10 + $0x830] sm:$0xff] %v3276
    %3565 = vst [vmem:[#allocation10 + $0x838] sm:$0xff] %v3277
    %3566 = vst [vmem:[#allocation10 + $0x840] sm:$0xff] %v3278
    %3567 = vst [vmem:[#allocation10 + $0x848] sm:$0xff] %v3279
    %3568 = vst [vmem:[#allocation10 + $0x850] sm:$0xff] %v3280
    %3569 = vst [vmem:[#allocation10 + $0x858] sm:$0xff] %v3281
    %3570 = vst [vmem:[#allocation10 + $0x860] sm:$0xff] %v3282
    %3571 = vst [vmem:[#allocation10 + $0x868] sm:$0xff] %v3283
    %3572 = vst [vmem:[#allocation10 + $0x870] sm:$0xff] %v3284
    %3573 = vst [vmem:[#allocation10 + $0x878] sm:$0xff] %v3285
    %3574 = vst [vmem:[#allocation10 + $0x880] sm:$0xff] %v3286
    %3575 = vst [vmem:[#allocation10 + $0x888] sm:$0xff] %v3287
    %3576 = vst [vmem:[#allocation10 + $0x890] sm:$0xff] %v3288
    %3577 = vst [vmem:[#allocation10 + $0x898] sm:$0xff] %v3289
    %3578 = vst [vmem:[#allocation10 + $0x8a0] sm:$0xff] %v3290
    %3579 = vst [vmem:[#allocation10 + $0x8a8] sm:$0xff] %v3291
    %3580 = vst [vmem:[#allocation10 + $0x8b0] sm:$0xff] %v3292
    %3581 = vst [vmem:[#allocation10 + $0x8b8] sm:$0xff] %v3293
    %3582 = vst [vmem:[#allocation10 + $0x8c0] sm:$0xff] %v3294
    %3583 = vst [vmem:[#allocation10 + $0x8c8] sm:$0xff] %v3295
    %3584 = vst [vmem:[#allocation10 + $0x8d0] sm:$0xff] %v3296
    %3585 = vst [vmem:[#allocation10 + $0x8d8] sm:$0xff] %v3297
    %3586 = vst [vmem:[#allocation10 + $0x8e0] sm:$0xff] %v3298
    %3587 = vst [vmem:[#allocation10 + $0x8e8] sm:$0xff] %v3299
    %3588 = vst [vmem:[#allocation10 + $0x8f0] sm:$0xff] %v3300
    %3589 = vst [vmem:[#allocation10 + $0x8f8] sm:$0xff] %v3301
    // Predicated region
    $region34: #{tpu_custom_call.1} parent=1 // pred_check
      _
    $region35: #{tpu_custom_call.1} parent=1 // pred_check_branch
      %3591 = sbr.rel (0) target = $region37
    $region36: #{tpu_custom_call.1} parent=1 // pred_region
      %s3593 = ssub.s32 36864, 36864
      %3594 = vsyncadd [#allocation4], %s3593
      %s3595 = sshll.u32 [#allocation10], 4
      %s3596 = int_to_ptr.vmem [resolvable:$true] %s3595
      %3601 = dma.vmem_to_hbm [thread:$0]  %s3596, 36864, %s4, [#allocation4], 768, 768, 48
    $region37: #{tpu_custom_call.1} parent=1 // pred_fallthru
      _
    // Predicated region
    $region38: #{tpu_custom_call.1} parent=1 // pred_check
      _
    $region39: #{tpu_custom_call.1} parent=1 // pred_check_branch
      %3603 = sbr.rel (0) target = $region41
    $region40: #{tpu_custom_call.1} parent=1 // pred_region
      %3604 = dma.done [#allocation4], 36864
    $region41: #{tpu_custom_call.1} parent=1 // pred_fallthru
      _
    %3605 = vsyncpa [#allocation3], 1
    %3606 = vsyncpa [#allocation6], 1
    %3607 = vsyncpa [#allocation9], 1
    %3608 = vsyncpa [#allocation4], 1

</llo_original>
